<compile_context>
chip_gen: v5e
topology: v5e:2x2
jax: 0.10.0
libtpu: 0.0.40
codegen_flags: <defaults>
</compile_context>

<pallas_src>
import numpy as np
import jax
import jax.numpy as jnp
from jax import lax
from jax.experimental import pallas as pl
from jax.experimental.pallas import tpu as pltpu


def _fwcde_kernel(
    dts_ref,            # (G-1,)           f32  SMEM  per-step dt
    fidx_ref,           # (Bt, 1)          i32  VMEM  per-batch final grid index
    x0_ref,             # (Bt, C)          f32  VMEM  X(times[0]) == a[0]
    bcd_ref,            # (T-1, Bt, 3C)    f32  VMEM  [b | two_c | three_d]
    wi_ref, bi_ref,     # (C, H), (1, H)         initial_network
    w1_ref, b1_ref,     # (H, Hh), (1, Hh)       func.linear_in
    w2_ref, b2_ref,     # (Hh, Hh), (1, Hh)      func hidden linear
    wcat_ref, bcat_ref, # (Hh, C*H), (1, C*H)    func.linear_out (fused over C)
    wl_ref, bl_ref,     # (H, O), (1, O)         final linear
    out_ref,            # (Bt, O)          f32
):
    nsteps = dts_ref.shape[0]            # G - 1 (static)
    Bt, C = x0_ref.shape
    H = wi_ref.shape[1]

    # Hoist loop-invariant weight loads (register-resident across all steps).
    wi = wi_ref[...]
    bi = bi_ref[...]
    w1 = w1_ref[...]
    b1 = b1_ref[...]
    w2 = w2_ref[...]
    b2 = b2_ref[...]
    wcat = wcat_ref[...]
    bcat = bcat_ref[...]
    wl = wl_ref[...]
    bl = bl_ref[...]
    fidx = fidx_ref[...]                 # (Bt, 1) int32

    def vf(dx, z):
        # FinalTanh vector field contracted with dX/dt:
        #   relu(lin_in(z)) -> relu(lin_hid) -> tanh(lin_out).view(B,H,C) @ dx
        h1 = jnp.maximum(
            jnp.dot(z, w1, preferred_element_type=jnp.float32) + b1, 0.0)
        h2 = jnp.maximum(
            jnp.dot(h1, w2, preferred_element_type=jnp.float32) + b2, 0.0)
        y = jnp.tanh(
            jnp.dot(h2, wcat, preferred_element_type=jnp.float32) + bcat)
        # dx-weighted reduction over the C channel slabs (static lane slices).
        f = y[:, 0:H] * dx[:, 0:1]
        for c in range(1, C):
            f = f + y[:, c * H:(c + 1) * H] * dx[:, c:c + 1]
        return f                         # (Bt, H)

    # z0 = initial_network(X(times[0]));  X(times[0]) = a[..., 0, :]
    z0 = jnp.dot(x0_ref[...], wi, preferred_element_type=jnp.float32) + bi

    # dX/dt at times[0]: frac == 0 -> b[0]  (torch's clamped index search).
    dx_left0 = bcd_ref[0][:, 0:C]

    def rk4_step(i, carry):
        # torchdiffeq fixed-grid 'rk4' step (3/8 rule) over [grid[i], grid[i+1]]
        z, zf, dx_left = carry
        dt = dts_ref[i]
        bcd = bcd_ref[i]                 # (Bt, 3C): one dynamic load per step
        b_i = bcd[:, 0:C]
        c_i = bcd[:, C:2 * C]
        d_i = bcd[:, 2 * C:3 * C]

        f1 = dt * (1.0 / 3.0)
        f2 = dt * (2.0 / 3.0)
        dx1 = b_i + (c_i + d_i * f1) * f1        # dX at t0 + dt/3
        dx2 = b_i + (c_i + d_i * f2) * f2        # dX at t0 + 2dt/3
        dx3 = b_i + (c_i + d_i * dt) * dt        # dX at t1 (reused next step)

        k1 = vf(dx_left, z)
        k2 = vf(dx1, z + dt * k1 * (1.0 / 3.0))
        k3 = vf(dx2, z + dt * (k2 - k1 * (1.0 / 3.0)))
        k4 = vf(dx3, z + dt * (k1 - k2 + k3))
        z_new = z + (k1 + 3.0 * (k2 + k3) + k4) * dt * 0.125

        # carry the terminal state instead of storing a (G,B,H) history
        zf_new = jnp.where(fidx == (i + 1), z_new, zf)
        return (z_new, zf_new, dx3)

    _, zf, _ = lax.fori_loop(0, nsteps, rk4_step, (z0, z0, dx_left0),
                             unroll=True)

    out_ref[...] = jnp.dot(zf, wl, preferred_element_type=jnp.float32) + bl


def fast_weight_cde_forward(times, coeffs, final_index, params):
    """FastWeightCDE.forward(times, coeffs, final_index, z0=None, stream=False)."""
    a, b, two_c, three_d = coeffs                # each (B, T-1, C), torch layout
    B, Tm1, C = a.shape
    T = Tm1 + 1
    H = params["wi"].shape[1]
    O = params["wl"].shape[1]

    times_np = np.asarray(times, dtype=np.float32)
    # kwargs['options']['step_size'] = min(times[1:] - times[:-1])
    step_size = float(np.min(times_np[1:] - times_np[:-1]))
    # torchdiffeq fixed-grid constructor for method='rk4'
    niters = int(np.ceil((times_np[-1] - times_np[0]) / step_size + 1.0))
    grid_np = np.arange(niters, dtype=np.float32) * step_size + times_np[0]
    grid_np[-1] = times_np[-1]
    G = grid_np.shape[0]
    # TODO(synk): for non-uniform `times`, torchdiffeq linearly interpolates the
    # grid solution onto the requested output times; here the grid coincides
    # with `times`, so gathering z at grid index == final_index is exact.
    assert G == T and np.allclose(grid_np, times_np)
    dts_np = (grid_np[1:] - grid_np[:-1]).astype(np.float32)   # (G-1,)

    # Pad the batch to a sublane multiple and pick a batch tile for the grid.
    B_TILE = min(128, -(-B // 8) * 8)
    B_pad = -(-B // B_TILE) * B_TILE
    nb = B_pad // B_TILE

    def pad_batch(x):
        x = np.asarray(x, np.float32)
        pad = [(0, B_pad - x.shape[0])] + [(0, 0)] * (x.ndim - 1)
        return np.pad(x, pad)

    # Channel-concatenated, time-major derivative coefficients: (T-1, B_pad, 3C)
    bcd = np.concatenate(
        [np.asarray(b), np.asarray(two_c), np.asarray(three_d)],
        axis=-1).astype(np.float32)                         # (B, T-1, 3C)
    bcd = np.transpose(pad_batch(bcd), (1, 0, 2))           # (T-1, B_pad, 3C)
    x0 = pad_batch(np.asarray(a)[:, 0, :])                  # (B_pad, C)
    fidx = np.zeros((B_pad, 1), np.int32)
    fidx[:B, 0] = np.asarray(final_index, np.int32)

    # Fuse the per-channel linear_out into one (Hh, C*H) matmul.
    wcat = jnp.concatenate([params["wout"][c] for c in range(C)], axis=1)
    bcat = jnp.reshape(params["bout"], (1, C * H))

    vmem = pl.BlockSpec(memory_space=pltpu.MemorySpace.VMEM)
    smem = pl.BlockSpec(memory_space=pltpu.MemorySpace.SMEM)

    grid_spec = pltpu.PrefetchScalarGridSpec(
        num_scalar_prefetch=0,
        grid=(nb,),
        in_specs=[
            smem,                                                   # dts
            pl.BlockSpec((B_TILE, 1), lambda i: (i, 0)),            # fidx
            pl.BlockSpec((B_TILE, C), lambda i: (i, 0)),            # x0
            pl.BlockSpec((T - 1, B_TILE, 3 * C), lambda i: (0, i, 0)),  # bcd
        ] + [vmem] * 10,                                            # weights
        out_specs=pl.BlockSpec((B_TILE, O), lambda i: (i, 0)),
    )

    out = pl.pallas_call(
        _fwcde_kernel,
        out_shape=jax.ShapeDtypeStruct((B_pad, O), jnp.float32),
        grid_spec=grid_spec,
        compiler_params=pltpu.CompilerParams(
            dimension_semantics=("parallel",)),
    )(
        jnp.asarray(dts_np), jnp.asarray(fidx), jnp.asarray(x0),
        jnp.asarray(bcd),
        params["wi"], params["bi"], params["w1"], params["b1"],
        params["w2"], params["b2"], wcat, bcat,
        params["wl"], params["bl"],
    )
    return out[:B]


def reference_forward(times, grid, final_index, coeffs, params):
    """Pure-JAX/numpy mirror of the semantics (torch index-search dX/dt)."""
    a, b, two_c, three_d = coeffs
    a_tm, b_tm, c_tm, d_tm = (
        jnp.transpose(jnp.asarray(x, jnp.float32), (1, 0, 2))
        for x in (a, b, two_c, three_d))
    times_np = np.asarray(times, np.float64)
    grid_np = np.asarray(grid, np.float64)
    T = times_np.shape[0]
    B, C = a_tm.shape[1], a_tm.shape[2]
    H = params["wi"].shape[1]

    def dX_dt(ts):
        idx = int(np.clip(np.sum(ts > times_np) - 1, 0, T - 2))
        frac = jnp.float32(ts - times_np[idx])
        return b_tm[idx] + (c_tm[idx] + d_tm[idx] * frac) * frac

    def vf(ts, z):
        dx = dX_dt(ts)
        h1 = jnp.maximum(z @ params["w1"] + params["b1"], 0.0)
        h2 = jnp.maximum(h1 @ params["w2"] + params["b2"], 0.0)
        f = jnp.zeros((B, H), jnp.float32)
        for c in range(C):
            f = f + jnp.tanh(h2 @ params["wout"][c] + params["bout"][c]) \
                * dx[:, c:c + 1]
        return f

    z = a_tm[0] @ params["wi"] + params["bi"]
    hist = [z]
    for i in range(len(grid_np) - 1):
        t0, t1 = float(grid_np[i]), float(grid_np[i + 1])
        dt = t1 - t0
        k1 = vf(t0, z)
        k2 = vf(t0 + dt / 3.0, z + dt * k1 / 3.0)
        k3 = vf(t0 + 2.0 * dt / 3.0, z + dt * (k2 - k1 / 3.0))
        k4 = vf(t1, z + dt * (k1 - k2 + k3))
        z = z + (k1 + 3.0 * (k2 + k3) + k4) * dt * 0.125
        hist.append(z)
    hist = jnp.stack(hist)                                   # (G, B, H)
    zT = hist[np.asarray(final_index), jnp.arange(B)]        # (B, H)
    return zT @ params["wl"] + params["bl"]


def init_params(key, C, H, Hh, O):
    ks = jax.random.split(key, 5)

    def lin(k, fi, fo):
        return (jax.random.normal(k, (fi, fo), jnp.float32)
                / np.sqrt(fi)).astype(jnp.float32)

    return dict(
        wi=lin(ks[0], C, H),   bi=0.01 * jnp.ones((1, H), jnp.float32),
        w1=lin(ks[1], H, Hh),  b1=0.01 * jnp.ones((1, Hh), jnp.float32),
        w2=lin(ks[2], Hh, Hh), b2=0.01 * jnp.ones((1, Hh), jnp.float32),
        # linear_out of the vector field, stored per input channel:
        # wout[c] maps (Hh -> H), i.e. torch weight row h*C + c transposed.
        wout=(jax.random.normal(ks[3], (C, Hh, H), jnp.float32)
              / np.sqrt(Hh)).astype(jnp.float32),
        bout=0.01 * jnp.ones((C, H), jnp.float32),
        wl=lin(ks[4], H, O),   bl=jnp.zeros((1, O), jnp.float32),
    )


if __name__ == "__main__":
    B, C, H, Hh, O, T = 2, 4, 32, 32, 3, 8

    key = jax.random.PRNGKey(0)
    k_coef, k_par = jax.random.split(key)
    kc = jax.random.split(k_coef, 4)

    times = jnp.arange(T, dtype=jnp.float32)
    scale = 0.3
    a = scale * jax.random.normal(kc[0], (B, T - 1, C), jnp.float32)
    b = scale * jax.random.normal(kc[1], (B, T - 1, C), jnp.float32)
    two_c = scale * jax.random.normal(kc[2], (B, T - 1, C), jnp.float32)
    three_d = scale * jax.random.normal(kc[3], (B, T - 1, C), jnp.float32)
    coeffs = (a, b, two_c, three_d)
    final_index = jnp.array([5, T - 1], dtype=jnp.int32)

    params = init_params(k_par, C, H, Hh, O)

    out = fast_weight_cde_forward(times, coeffs, final_index, params)
    out = jax.block_until_ready(out)
    assert out.shape == (B, O)

    ref = reference_forward(times, np.arange(T, dtype=np.float32),
                            np.asarray(final_index), coeffs, params)
    np.testing.assert_allclose(np.asarray(out), np.asarray(ref),
                               rtol=1e-2, atol=1e-2)
    print("KERNEL_OK")
</pallas_src>

<mosaic_0001>
module attributes {stable_mosaic.version = 11 : i64} {
  func.func @_fwcde_kernel(%arg0: i32, %arg1: memref<7xf32, #tpu.memory_space<smem>>, %arg2: memref<8x1xi32, #tpu.memory_space<vmem>>, %arg3: memref<8x4xf32, #tpu.memory_space<vmem>>, %arg4: memref<7x8x12xf32, #tpu.memory_space<vmem>>, %arg5: memref<4x32xf32, #tpu.memory_space<vmem>>, %arg6: memref<1x32xf32, #tpu.memory_space<vmem>>, %arg7: memref<32x32xf32, #tpu.memory_space<vmem>>, %arg8: memref<1x32xf32, #tpu.memory_space<vmem>>, %arg9: memref<32x32xf32, #tpu.memory_space<vmem>>, %arg10: memref<1x32xf32, #tpu.memory_space<vmem>>, %arg11: memref<32x128xf32, #tpu.memory_space<vmem>>, %arg12: memref<1x128xf32, #tpu.memory_space<vmem>>, %arg13: memref<32x3xf32, #tpu.memory_space<vmem>>, %arg14: memref<1x3xf32, #tpu.memory_space<vmem>>, %arg15: memref<8x3xf32, #tpu.memory_space<vmem>>) attributes {dimension_semantics = [#tpu.dimension_semantics<parallel>], iteration_bounds = array<i64: 1>, scalar_prefetch = 0 : i64, scratch_operands = 0 : i64, tpu.core_type = #tpu.core_type<tc>, window_params = [{transform_indices = @transform_0, window_bounds = array<i64: 7>}, {transform_indices = @transform_1, window_bounds = array<i64: 8, 1>}, {transform_indices = @transform_2, window_bounds = array<i64: 8, 4>}, {transform_indices = @transform_3, window_bounds = array<i64: 7, 8, 12>}, {pipeline_mode = #tpu.pipeline_mode<synchronous>, transform_indices = @transform_4, window_bounds = array<i64: 4, 32>}, {pipeline_mode = #tpu.pipeline_mode<synchronous>, transform_indices = @transform_5, window_bounds = array<i64: 1, 32>}, {pipeline_mode = #tpu.pipeline_mode<synchronous>, transform_indices = @transform_6, window_bounds = array<i64: 32, 32>}, {pipeline_mode = #tpu.pipeline_mode<synchronous>, transform_indices = @transform_7, window_bounds = array<i64: 1, 32>}, {pipeline_mode = #tpu.pipeline_mode<synchronous>, transform_indices = @transform_8, window_bounds = array<i64: 32, 32>}, {pipeline_mode = #tpu.pipeline_mode<synchronous>, transform_indices = @transform_9, window_bounds = array<i64: 1, 32>}, {pipeline_mode = #tpu.pipeline_mode<synchronous>, transform_indices = @transform_10, window_bounds = array<i64: 32, 128>}, {pipeline_mode = #tpu.pipeline_mode<synchronous>, transform_indices = @transform_11, window_bounds = array<i64: 1, 128>}, {pipeline_mode = #tpu.pipeline_mode<synchronous>, transform_indices = @transform_12, window_bounds = array<i64: 32, 3>}, {pipeline_mode = #tpu.pipeline_mode<synchronous>, transform_indices = @transform_13, window_bounds = array<i64: 1, 3>}, {transform_indices = @transform_14, window_bounds = array<i64: 8, 3>}]} {
    %c0 = arith.constant 0 : index
    %c0_0 = arith.constant 0 : index
    %0 = vector.load %arg5[%c0, %c0_0] : memref<4x32xf32, #tpu.memory_space<vmem>>, vector<4x32xf32>
    %c0_1 = arith.constant 0 : index
    %c0_2 = arith.constant 0 : index
    %1 = vector.load %arg6[%c0_1, %c0_2] : memref<1x32xf32, #tpu.memory_space<vmem>>, vector<1x32xf32>
    %c0_3 = arith.constant 0 : index
    %c0_4 = arith.constant 0 : index
    %2 = vector.load %arg7[%c0_3, %c0_4] : memref<32x32xf32, #tpu.memory_space<vmem>>, vector<32x32xf32>
    %c0_5 = arith.constant 0 : index
    %c0_6 = arith.constant 0 : index
    %3 = vector.load %arg8[%c0_5, %c0_6] : memref<1x32xf32, #tpu.memory_space<vmem>>, vector<1x32xf32>
    %c0_7 = arith.constant 0 : index
    %c0_8 = arith.constant 0 : index
    %4 = vector.load %arg9[%c0_7, %c0_8] : memref<32x32xf32, #tpu.memory_space<vmem>>, vector<32x32xf32>
    %c0_9 = arith.constant 0 : index
    %c0_10 = arith.constant 0 : index
    %5 = vector.load %arg10[%c0_9, %c0_10] : memref<1x32xf32, #tpu.memory_space<vmem>>, vector<1x32xf32>
    %c0_11 = arith.constant 0 : index
    %c0_12 = arith.constant 0 : index
    %6 = vector.load %arg11[%c0_11, %c0_12] : memref<32x128xf32, #tpu.memory_space<vmem>>, vector<32x128xf32>
    %c0_13 = arith.constant 0 : index
    %c0_14 = arith.constant 0 : index
    %7 = vector.load %arg12[%c0_13, %c0_14] : memref<1x128xf32, #tpu.memory_space<vmem>>, vector<1x128xf32>
    %c0_15 = arith.constant 0 : index
    %c0_16 = arith.constant 0 : index
    %8 = vector.load %arg13[%c0_15, %c0_16] : memref<32x3xf32, #tpu.memory_space<vmem>>, vector<32x3xf32>
    %c0_17 = arith.constant 0 : index
    %c0_18 = arith.constant 0 : index
    %9 = vector.load %arg14[%c0_17, %c0_18] : memref<1x3xf32, #tpu.memory_space<vmem>>, vector<1x3xf32>
    %c0_19 = arith.constant 0 : index
    %c0_20 = arith.constant 0 : index
    %10 = vector.load %arg2[%c0_19, %c0_20] : memref<8x1xi32, #tpu.memory_space<vmem>>, vector<8x1xi32>
    %c0_21 = arith.constant 0 : index
    %c0_22 = arith.constant 0 : index
    %11 = vector.load %arg3[%c0_21, %c0_22] : memref<8x4xf32, #tpu.memory_space<vmem>>, vector<8x4xf32>
    %cst = arith.constant dense<0.000000e+00> : vector<8x32xf32>
    %12 = tpu.matmul %11, %0, %cst {dimension_numbers = #tpu.dot_dimension_numbers<[1], [0], [0], [1], [0, 0, 1, 1], [], []>} : vector<8x4xf32>, vector<4x32xf32>, vector<8x32xf32> -> vector<8x32xf32>
    %13 = vector.broadcast %1 : vector<1x32xf32> to vector<8x32xf32>
    %14 = arith.addf %12, %13 : vector<8x32xf32>
    %c0_23 = arith.constant 0 : index
    %c0_24 = arith.constant 0 : index
    %c0_25 = arith.constant 0 : index
    %15 = vector.load %arg4[%c0_23, %c0_24, %c0_25] : memref<7x8x12xf32, #tpu.memory_space<vmem>>, vector<1x8x12xf32>
    %16 = vector.shape_cast %15 : vector<1x8x12xf32> to vector<8x12xf32>
    %17 = vector.extract_strided_slice %16 {offsets = [0, 0], sizes = [8, 4], strides = [1, 1]} : vector<8x12xf32> to vector<8x4xf32>
    %c0_i32 = arith.constant 0 : i32
    %18 = arith.index_cast %c0_i32 : i32 to index
    %19 = memref.load %arg1[%18] : memref<7xf32, #tpu.memory_space<smem>>
    %20 = arith.index_cast %c0_i32 : i32 to index
    %c0_26 = arith.constant 0 : index
    %c0_27 = arith.constant 0 : index
    %21 = vector.load %arg4[%20, %c0_26, %c0_27] : memref<7x8x12xf32, #tpu.memory_space<vmem>>, vector<1x8x12xf32>
    %22 = vector.shape_cast %21 : vector<1x8x12xf32> to vector<8x12xf32>
    %23 = vector.extract_strided_slice %22 {offsets = [0, 0], sizes = [8, 4], strides = [1, 1]} : vector<8x12xf32> to vector<8x4xf32>
    %24 = vector.extract_strided_slice %22 {offsets = [0, 4], sizes = [8, 4], strides = [1, 1]} : vector<8x12xf32> to vector<8x4xf32>
    %25 = vector.extract_strided_slice %22 {offsets = [0, 8], sizes = [8, 4], strides = [1, 1]} : vector<8x12xf32> to vector<8x4xf32>
    %cst_28 = arith.constant 0.333333343 : f32
    %26 = arith.mulf %19, %cst_28 : f32
    %cst_29 = arith.constant 0.666666686 : f32
    %27 = arith.mulf %19, %cst_29 : f32
    %28 = vector.broadcast %26 : f32 to vector<8x4xf32>
    %29 = arith.mulf %25, %28 : vector<8x4xf32>
    %30 = arith.addf %24, %29 : vector<8x4xf32>
    %31 = vector.broadcast %26 : f32 to vector<8x4xf32>
    %32 = arith.mulf %30, %31 : vector<8x4xf32>
    %33 = arith.addf %23, %32 : vector<8x4xf32>
    %34 = vector.broadcast %27 : f32 to vector<8x4xf32>
    %35 = arith.mulf %25, %34 : vector<8x4xf32>
    %36 = arith.addf %24, %35 : vector<8x4xf32>
    %37 = vector.broadcast %27 : f32 to vector<8x4xf32>
    %38 = arith.mulf %36, %37 : vector<8x4xf32>
    %39 = arith.addf %23, %38 : vector<8x4xf32>
    %40 = vector.broadcast %19 : f32 to vector<8x4xf32>
    %41 = arith.mulf %25, %40 : vector<8x4xf32>
    %42 = arith.addf %24, %41 : vector<8x4xf32>
    %43 = vector.broadcast %19 : f32 to vector<8x4xf32>
    %44 = arith.mulf %42, %43 : vector<8x4xf32>
    %45 = arith.addf %23, %44 : vector<8x4xf32>
    %cst_30 = arith.constant dense<0.000000e+00> : vector<8x32xf32>
    %46 = tpu.matmul %14, %2, %cst_30 {dimension_numbers = #tpu.dot_dimension_numbers<[1], [0], [0], [1], [0, 0, 1, 1], [], []>} : vector<8x32xf32>, vector<32x32xf32>, vector<8x32xf32> -> vector<8x32xf32>
    %47 = vector.broadcast %3 : vector<1x32xf32> to vector<8x32xf32>
    %48 = arith.addf %46, %47 : vector<8x32xf32>
    %cst_31 = arith.constant 0.000000e+00 : f32
    %49 = vector.broadcast %cst_31 : f32 to vector<8x32xf32>
    %50 = arith.maximumf %48, %49 : vector<8x32xf32>
    %cst_32 = arith.constant dense<0.000000e+00> : vector<8x32xf32>
    %51 = tpu.matmul %50, %4, %cst_32 {dimension_numbers = #tpu.dot_dimension_numbers<[1], [0], [0], [1], [0, 0, 1, 1], [], []>} : vector<8x32xf32>, vector<32x32xf32>, vector<8x32xf32> -> vector<8x32xf32>
    %52 = vector.broadcast %5 : vector<1x32xf32> to vector<8x32xf32>
    %53 = arith.addf %51, %52 : vector<8x32xf32>
    %cst_33 = arith.constant 0.000000e+00 : f32
    %54 = vector.broadcast %cst_33 : f32 to vector<8x32xf32>
    %55 = arith.maximumf %53, %54 : vector<8x32xf32>
    %cst_34 = arith.constant dense<0.000000e+00> : vector<8x128xf32>
    %56 = tpu.matmul %55, %6, %cst_34 {dimension_numbers = #tpu.dot_dimension_numbers<[1], [0], [0], [1], [0, 0, 1, 1], [], []>} : vector<8x32xf32>, vector<32x128xf32>, vector<8x128xf32> -> vector<8x128xf32>
    %57 = vector.broadcast %7 : vector<1x128xf32> to vector<8x128xf32>
    %58 = arith.addf %56, %57 : vector<8x128xf32>
    %59 = math.tanh %58 : vector<8x128xf32>
    %60 = vector.extract_strided_slice %59 {offsets = [0, 0], sizes = [8, 32], strides = [1, 1]} : vector<8x128xf32> to vector<8x32xf32>
    %61 = vector.extract_strided_slice %17 {offsets = [0, 0], sizes = [8, 1], strides = [1, 1]} : vector<8x4xf32> to vector<8x1xf32>
    %62 = vector.broadcast %61 : vector<8x1xf32> to vector<8x32xf32>
    %63 = arith.mulf %60, %62 : vector<8x32xf32>
    %64 = vector.extract_strided_slice %59 {offsets = [0, 32], sizes = [8, 32], strides = [1, 1]} : vector<8x128xf32> to vector<8x32xf32>
    %65 = vector.extract_strided_slice %17 {offsets = [0, 1], sizes = [8, 1], strides = [1, 1]} : vector<8x4xf32> to vector<8x1xf32>
    %66 = vector.broadcast %65 : vector<8x1xf32> to vector<8x32xf32>
    %67 = arith.mulf %64, %66 : vector<8x32xf32>
    %68 = arith.addf %63, %67 : vector<8x32xf32>
    %69 = vector.extract_strided_slice %59 {offsets = [0, 64], sizes = [8, 32], strides = [1, 1]} : vector<8x128xf32> to vector<8x32xf32>
    %70 = vector.extract_strided_slice %17 {offsets = [0, 2], sizes = [8, 1], strides = [1, 1]} : vector<8x4xf32> to vector<8x1xf32>
    %71 = vector.broadcast %70 : vector<8x1xf32> to vector<8x32xf32>
    %72 = arith.mulf %69, %71 : vector<8x32xf32>
    %73 = arith.addf %68, %72 : vector<8x32xf32>
    %74 = vector.extract_strided_slice %59 {offsets = [0, 96], sizes = [8, 32], strides = [1, 1]} : vector<8x128xf32> to vector<8x32xf32>
    %75 = vector.extract_strided_slice %17 {offsets = [0, 3], sizes = [8, 1], strides = [1, 1]} : vector<8x4xf32> to vector<8x1xf32>
    %76 = vector.broadcast %75 : vector<8x1xf32> to vector<8x32xf32>
    %77 = arith.mulf %74, %76 : vector<8x32xf32>
    %78 = arith.addf %73, %77 : vector<8x32xf32>
    %79 = vector.broadcast %19 : f32 to vector<8x32xf32>
    %80 = arith.mulf %79, %78 : vector<8x32xf32>
    %cst_35 = arith.constant 0.333333343 : f32
    %81 = vector.broadcast %cst_35 : f32 to vector<8x32xf32>
    %82 = arith.mulf %80, %81 : vector<8x32xf32>
    %83 = arith.addf %14, %82 : vector<8x32xf32>
    %cst_36 = arith.constant dense<0.000000e+00> : vector<8x32xf32>
    %84 = tpu.matmul %83, %2, %cst_36 {dimension_numbers = #tpu.dot_dimension_numbers<[1], [0], [0], [1], [0, 0, 1, 1], [], []>} : vector<8x32xf32>, vector<32x32xf32>, vector<8x32xf32> -> vector<8x32xf32>
    %85 = vector.broadcast %3 : vector<1x32xf32> to vector<8x32xf32>
    %86 = arith.addf %84, %85 : vector<8x32xf32>
    %cst_37 = arith.constant 0.000000e+00 : f32
    %87 = vector.broadcast %cst_37 : f32 to vector<8x32xf32>
    %88 = arith.maximumf %86, %87 : vector<8x32xf32>
    %cst_38 = arith.constant dense<0.000000e+00> : vector<8x32xf32>
    %89 = tpu.matmul %88, %4, %cst_38 {dimension_numbers = #tpu.dot_dimension_numbers<[1], [0], [0], [1], [0, 0, 1, 1], [], []>} : vector<8x32xf32>, vector<32x32xf32>, vector<8x32xf32> -> vector<8x32xf32>
    %90 = vector.broadcast %5 : vector<1x32xf32> to vector<8x32xf32>
    %91 = arith.addf %89, %90 : vector<8x32xf32>
    %cst_39 = arith.constant 0.000000e+00 : f32
    %92 = vector.broadcast %cst_39 : f32 to vector<8x32xf32>
    %93 = arith.maximumf %91, %92 : vector<8x32xf32>
    %cst_40 = arith.constant dense<0.000000e+00> : vector<8x128xf32>
    %94 = tpu.matmul %93, %6, %cst_40 {dimension_numbers = #tpu.dot_dimension_numbers<[1], [0], [0], [1], [0, 0, 1, 1], [], []>} : vector<8x32xf32>, vector<32x128xf32>, vector<8x128xf32> -> vector<8x128xf32>
    %95 = vector.broadcast %7 : vector<1x128xf32> to vector<8x128xf32>
    %96 = arith.addf %94, %95 : vector<8x128xf32>
    %97 = math.tanh %96 : vector<8x128xf32>
    %98 = vector.extract_strided_slice %97 {offsets = [0, 0], sizes = [8, 32], strides = [1, 1]} : vector<8x128xf32> to vector<8x32xf32>
    %99 = vector.extract_strided_slice %33 {offsets = [0, 0], sizes = [8, 1], strides = [1, 1]} : vector<8x4xf32> to vector<8x1xf32>
    %100 = vector.broadcast %99 : vector<8x1xf32> to vector<8x32xf32>
    %101 = arith.mulf %98, %100 : vector<8x32xf32>
    %102 = vector.extract_strided_slice %97 {offsets = [0, 32], sizes = [8, 32], strides = [1, 1]} : vector<8x128xf32> to vector<8x32xf32>
    %103 = vector.extract_strided_slice %33 {offsets = [0, 1], sizes = [8, 1], strides = [1, 1]} : vector<8x4xf32> to vector<8x1xf32>
    %104 = vector.broadcast %103 : vector<8x1xf32> to vector<8x32xf32>
    %105 = arith.mulf %102, %104 : vector<8x32xf32>
    %106 = arith.addf %101, %105 : vector<8x32xf32>
    %107 = vector.extract_strided_slice %97 {offsets = [0, 64], sizes = [8, 32], strides = [1, 1]} : vector<8x128xf32> to vector<8x32xf32>
    %108 = vector.extract_strided_slice %33 {offsets = [0, 2], sizes = [8, 1], strides = [1, 1]} : vector<8x4xf32> to vector<8x1xf32>
    %109 = vector.broadcast %108 : vector<8x1xf32> to vector<8x32xf32>
    %110 = arith.mulf %107, %109 : vector<8x32xf32>
    %111 = arith.addf %106, %110 : vector<8x32xf32>
    %112 = vector.extract_strided_slice %97 {offsets = [0, 96], sizes = [8, 32], strides = [1, 1]} : vector<8x128xf32> to vector<8x32xf32>
    %113 = vector.extract_strided_slice %33 {offsets = [0, 3], sizes = [8, 1], strides = [1, 1]} : vector<8x4xf32> to vector<8x1xf32>
    %114 = vector.broadcast %113 : vector<8x1xf32> to vector<8x32xf32>
    %115 = arith.mulf %112, %114 : vector<8x32xf32>
    %116 = arith.addf %111, %115 : vector<8x32xf32>
    %cst_41 = arith.constant 0.333333343 : f32
    %117 = vector.broadcast %cst_41 : f32 to vector<8x32xf32>
    %118 = arith.mulf %78, %117 : vector<8x32xf32>
    %119 = arith.subf %116, %118 : vector<8x32xf32>
    %120 = vector.broadcast %19 : f32 to vector<8x32xf32>
    %121 = arith.mulf %120, %119 : vector<8x32xf32>
    %122 = arith.addf %14, %121 : vector<8x32xf32>
    %cst_42 = arith.constant dense<0.000000e+00> : vector<8x32xf32>
    %123 = tpu.matmul %122, %2, %cst_42 {dimension_numbers = #tpu.dot_dimension_numbers<[1], [0], [0], [1], [0, 0, 1, 1], [], []>} : vector<8x32xf32>, vector<32x32xf32>, vector<8x32xf32> -> vector<8x32xf32>
    %124 = vector.broadcast %3 : vector<1x32xf32> to vector<8x32xf32>
    %125 = arith.addf %123, %124 : vector<8x32xf32>
    %cst_43 = arith.constant 0.000000e+00 : f32
    %126 = vector.broadcast %cst_43 : f32 to vector<8x32xf32>
    %127 = arith.maximumf %125, %126 : vector<8x32xf32>
    %cst_44 = arith.constant dense<0.000000e+00> : vector<8x32xf32>
    %128 = tpu.matmul %127, %4, %cst_44 {dimension_numbers = #tpu.dot_dimension_numbers<[1], [0], [0], [1], [0, 0, 1, 1], [], []>} : vector<8x32xf32>, vector<32x32xf32>, vector<8x32xf32> -> vector<8x32xf32>
    %129 = vector.broadcast %5 : vector<1x32xf32> to vector<8x32xf32>
    %130 = arith.addf %128, %129 : vector<8x32xf32>
    %cst_45 = arith.constant 0.000000e+00 : f32
    %131 = vector.broadcast %cst_45 : f32 to vector<8x32xf32>
    %132 = arith.maximumf %130, %131 : vector<8x32xf32>
    %cst_46 = arith.constant dense<0.000000e+00> : vector<8x128xf32>
    %133 = tpu.matmul %132, %6, %cst_46 {dimension_numbers = #tpu.dot_dimension_numbers<[1], [0], [0], [1], [0, 0, 1, 1], [], []>} : vector<8x32xf32>, vector<32x128xf32>, vector<8x128xf32> -> vector<8x128xf32>
    %134 = vector.broadcast %7 : vector<1x128xf32> to vector<8x128xf32>
    %135 = arith.addf %133, %134 : vector<8x128xf32>
    %136 = math.tanh %135 : vector<8x128xf32>
    %137 = vector.extract_strided_slice %136 {offsets = [0, 0], sizes = [8, 32], strides = [1, 1]} : vector<8x128xf32> to vector<8x32xf32>
    %138 = vector.extract_strided_slice %39 {offsets = [0, 0], sizes = [8, 1], strides = [1, 1]} : vector<8x4xf32> to vector<8x1xf32>
    %139 = vector.broadcast %138 : vector<8x1xf32> to vector<8x32xf32>
    %140 = arith.mulf %137, %139 : vector<8x32xf32>
    %141 = vector.extract_strided_slice %136 {offsets = [0, 32], sizes = [8, 32], strides = [1, 1]} : vector<8x128xf32> to vector<8x32xf32>
    %142 = vector.extract_strided_slice %39 {offsets = [0, 1], sizes = [8, 1], strides = [1, 1]} : vector<8x4xf32> to vector<8x1xf32>
    %143 = vector.broadcast %142 : vector<8x1xf32> to vector<8x32xf32>
    %144 = arith.mulf %141, %143 : vector<8x32xf32>
    %145 = arith.addf %140, %144 : vector<8x32xf32>
    %146 = vector.extract_strided_slice %136 {offsets = [0, 64], sizes = [8, 32], strides = [1, 1]} : vector<8x128xf32> to vector<8x32xf32>
    %147 = vector.extract_strided_slice %39 {offsets = [0, 2], sizes = [8, 1], strides = [1, 1]} : vector<8x4xf32> to vector<8x1xf32>
    %148 = vector.broadcast %147 : vector<8x1xf32> to vector<8x32xf32>
    %149 = arith.mulf %146, %148 : vector<8x32xf32>
    %150 = arith.addf %145, %149 : vector<8x32xf32>
    %151 = vector.extract_strided_slice %136 {offsets = [0, 96], sizes = [8, 32], strides = [1, 1]} : vector<8x128xf32> to vector<8x32xf32>
    %152 = vector.extract_strided_slice %39 {offsets = [0, 3], sizes = [8, 1], strides = [1, 1]} : vector<8x4xf32> to vector<8x1xf32>
    %153 = vector.broadcast %152 : vector<8x1xf32> to vector<8x32xf32>
    %154 = arith.mulf %151, %153 : vector<8x32xf32>
    %155 = arith.addf %150, %154 : vector<8x32xf32>
    %156 = arith.subf %78, %116 : vector<8x32xf32>
    %157 = arith.addf %156, %155 : vector<8x32xf32>
    %158 = vector.broadcast %19 : f32 to vector<8x32xf32>
    %159 = arith.mulf %158, %157 : vector<8x32xf32>
    %160 = arith.addf %14, %159 : vector<8x32xf32>
    %cst_47 = arith.constant dense<0.000000e+00> : vector<8x32xf32>
    %161 = tpu.matmul %160, %2, %cst_47 {dimension_numbers = #tpu.dot_dimension_numbers<[1], [0], [0], [1], [0, 0, 1, 1], [], []>} : vector<8x32xf32>, vector<32x32xf32>, vector<8x32xf32> -> vector<8x32xf32>
    %162 = vector.broadcast %3 : vector<1x32xf32> to vector<8x32xf32>
    %163 = arith.addf %161, %162 : vector<8x32xf32>
    %cst_48 = arith.constant 0.000000e+00 : f32
    %164 = vector.broadcast %cst_48 : f32 to vector<8x32xf32>
    %165 = arith.maximumf %163, %164 : vector<8x32xf32>
    %cst_49 = arith.constant dense<0.000000e+00> : vector<8x32xf32>
    %166 = tpu.matmul %165, %4, %cst_49 {dimension_numbers = #tpu.dot_dimension_numbers<[1], [0], [0], [1], [0, 0, 1, 1], [], []>} : vector<8x32xf32>, vector<32x32xf32>, vector<8x32xf32> -> vector<8x32xf32>
    %167 = vector.broadcast %5 : vector<1x32xf32> to vector<8x32xf32>
    %168 = arith.addf %166, %167 : vector<8x32xf32>
    %cst_50 = arith.constant 0.000000e+00 : f32
    %169 = vector.broadcast %cst_50 : f32 to vector<8x32xf32>
    %170 = arith.maximumf %168, %169 : vector<8x32xf32>
    %cst_51 = arith.constant dense<0.000000e+00> : vector<8x128xf32>
    %171 = tpu.matmul %170, %6, %cst_51 {dimension_numbers = #tpu.dot_dimension_numbers<[1], [0], [0], [1], [0, 0, 1, 1], [], []>} : vector<8x32xf32>, vector<32x128xf32>, vector<8x128xf32> -> vector<8x128xf32>
    %172 = vector.broadcast %7 : vector<1x128xf32> to vector<8x128xf32>
    %173 = arith.addf %171, %172 : vector<8x128xf32>
    %174 = math.tanh %173 : vector<8x128xf32>
    %175 = vector.extract_strided_slice %174 {offsets = [0, 0], sizes = [8, 32], strides = [1, 1]} : vector<8x128xf32> to vector<8x32xf32>
    %176 = vector.extract_strided_slice %45 {offsets = [0, 0], sizes = [8, 1], strides = [1, 1]} : vector<8x4xf32> to vector<8x1xf32>
    %177 = vector.broadcast %176 : vector<8x1xf32> to vector<8x32xf32>
    %178 = arith.mulf %175, %177 : vector<8x32xf32>
    %179 = vector.extract_strided_slice %174 {offsets = [0, 32], sizes = [8, 32], strides = [1, 1]} : vector<8x128xf32> to vector<8x32xf32>
    %180 = vector.extract_strided_slice %45 {offsets = [0, 1], sizes = [8, 1], strides = [1, 1]} : vector<8x4xf32> to vector<8x1xf32>
    %181 = vector.broadcast %180 : vector<8x1xf32> to vector<8x32xf32>
    %182 = arith.mulf %179, %181 : vector<8x32xf32>
    %183 = arith.addf %178, %182 : vector<8x32xf32>
    %184 = vector.extract_strided_slice %174 {offsets = [0, 64], sizes = [8, 32], strides = [1, 1]} : vector<8x128xf32> to vector<8x32xf32>
    %185 = vector.extract_strided_slice %45 {offsets = [0, 2], sizes = [8, 1], strides = [1, 1]} : vector<8x4xf32> to vector<8x1xf32>
    %186 = vector.broadcast %185 : vector<8x1xf32> to vector<8x32xf32>
    %187 = arith.mulf %184, %186 : vector<8x32xf32>
    %188 = arith.addf %183, %187 : vector<8x32xf32>
    %189 = vector.extract_strided_slice %174 {offsets = [0, 96], sizes = [8, 32], strides = [1, 1]} : vector<8x128xf32> to vector<8x32xf32>
    %190 = vector.extract_strided_slice %45 {offsets = [0, 3], sizes = [8, 1], strides = [1, 1]} : vector<8x4xf32> to vector<8x1xf32>
    %191 = vector.broadcast %190 : vector<8x1xf32> to vector<8x32xf32>
    %192 = arith.mulf %189, %191 : vector<8x32xf32>
    %193 = arith.addf %188, %192 : vector<8x32xf32>
    %194 = arith.addf %116, %155 : vector<8x32xf32>
    %cst_52 = arith.constant 3.000000e+00 : f32
    %195 = vector.broadcast %cst_52 : f32 to vector<8x32xf32>
    %196 = arith.mulf %195, %194 : vector<8x32xf32>
    %197 = arith.addf %78, %196 : vector<8x32xf32>
    %198 = arith.addf %197, %193 : vector<8x32xf32>
    %199 = vector.broadcast %19 : f32 to vector<8x32xf32>
    %200 = arith.mulf %198, %199 : vector<8x32xf32>
    %cst_53 = arith.constant 1.250000e-01 : f32
    %201 = vector.broadcast %cst_53 : f32 to vector<8x32xf32>
    %202 = arith.mulf %200, %201 : vector<8x32xf32>
    %203 = arith.addf %14, %202 : vector<8x32xf32>
    %c1_i32 = arith.constant 1 : i32
    %204 = arith.addi %c0_i32, %c1_i32 : i32
    %205 = vector.broadcast %204 : i32 to vector<8x1xi32>
    %206 = arith.cmpi eq, %10, %205 : vector<8x1xi32>
    %207 = vector.shape_cast %206 : vector<8x1xi1> to vector<8x1xi1>
    %208 = vector.broadcast %207 : vector<8x1xi1> to vector<8x32xi1>
    %209 = arith.select %208, %203, %14 : vector<8x32xi1>, vector<8x32xf32>
    %c1_i32_54 = arith.constant 1 : i32
    %210 = arith.index_cast %c1_i32_54 : i32 to index
    %211 = memref.load %arg1[%210] : memref<7xf32, #tpu.memory_space<smem>>
    %212 = arith.index_cast %c1_i32_54 : i32 to index
    %c0_55 = arith.constant 0 : index
    %c0_56 = arith.constant 0 : index
    %213 = vector.load %arg4[%212, %c0_55, %c0_56] : memref<7x8x12xf32, #tpu.memory_space<vmem>>, vector<1x8x12xf32>
    %214 = vector.shape_cast %213 : vector<1x8x12xf32> to vector<8x12xf32>
    %215 = vector.extract_strided_slice %214 {offsets = [0, 0], sizes = [8, 4], strides = [1, 1]} : vector<8x12xf32> to vector<8x4xf32>
    %216 = vector.extract_strided_slice %214 {offsets = [0, 4], sizes = [8, 4], strides = [1, 1]} : vector<8x12xf32> to vector<8x4xf32>
    %217 = vector.extract_strided_slice %214 {offsets = [0, 8], sizes = [8, 4], strides = [1, 1]} : vector<8x12xf32> to vector<8x4xf32>
    %cst_57 = arith.constant 0.333333343 : f32
    %218 = arith.mulf %211, %cst_57 : f32
    %cst_58 = arith.constant 0.666666686 : f32
    %219 = arith.mulf %211, %cst_58 : f32
    %220 = vector.broadcast %218 : f32 to vector<8x4xf32>
    %221 = arith.mulf %217, %220 : vector<8x4xf32>
    %222 = arith.addf %216, %221 : vector<8x4xf32>
    %223 = vector.broadcast %218 : f32 to vector<8x4xf32>
    %224 = arith.mulf %222, %223 : vector<8x4xf32>
    %225 = arith.addf %215, %224 : vector<8x4xf32>
    %226 = vector.broadcast %219 : f32 to vector<8x4xf32>
    %227 = arith.mulf %217, %226 : vector<8x4xf32>
    %228 = arith.addf %216, %227 : vector<8x4xf32>
    %229 = vector.broadcast %219 : f32 to vector<8x4xf32>
    %230 = arith.mulf %228, %229 : vector<8x4xf32>
    %231 = arith.addf %215, %230 : vector<8x4xf32>
    %232 = vector.broadcast %211 : f32 to vector<8x4xf32>
    %233 = arith.mulf %217, %232 : vector<8x4xf32>
    %234 = arith.addf %216, %233 : vector<8x4xf32>
    %235 = vector.broadcast %211 : f32 to vector<8x4xf32>
    %236 = arith.mulf %234, %235 : vector<8x4xf32>
    %237 = arith.addf %215, %236 : vector<8x4xf32>
    %cst_59 = arith.constant dense<0.000000e+00> : vector<8x32xf32>
    %238 = tpu.matmul %203, %2, %cst_59 {dimension_numbers = #tpu.dot_dimension_numbers<[1], [0], [0], [1], [0, 0, 1, 1], [], []>} : vector<8x32xf32>, vector<32x32xf32>, vector<8x32xf32> -> vector<8x32xf32>
    %239 = vector.broadcast %3 : vector<1x32xf32> to vector<8x32xf32>
    %240 = arith.addf %238, %239 : vector<8x32xf32>
    %cst_60 = arith.constant 0.000000e+00 : f32
    %241 = vector.broadcast %cst_60 : f32 to vector<8x32xf32>
    %242 = arith.maximumf %240, %241 : vector<8x32xf32>
    %cst_61 = arith.constant dense<0.000000e+00> : vector<8x32xf32>
    %243 = tpu.matmul %242, %4, %cst_61 {dimension_numbers = #tpu.dot_dimension_numbers<[1], [0], [0], [1], [0, 0, 1, 1], [], []>} : vector<8x32xf32>, vector<32x32xf32>, vector<8x32xf32> -> vector<8x32xf32>
    %244 = vector.broadcast %5 : vector<1x32xf32> to vector<8x32xf32>
    %245 = arith.addf %243, %244 : vector<8x32xf32>
    %cst_62 = arith.constant 0.000000e+00 : f32
    %246 = vector.broadcast %cst_62 : f32 to vector<8x32xf32>
    %247 = arith.maximumf %245, %246 : vector<8x32xf32>
    %cst_63 = arith.constant dense<0.000000e+00> : vector<8x128xf32>
    %248 = tpu.matmul %247, %6, %cst_63 {dimension_numbers = #tpu.dot_dimension_numbers<[1], [0], [0], [1], [0, 0, 1, 1], [], []>} : vector<8x32xf32>, vector<32x128xf32>, vector<8x128xf32> -> vector<8x128xf32>
    %249 = vector.broadcast %7 : vector<1x128xf32> to vector<8x128xf32>
    %250 = arith.addf %248, %249 : vector<8x128xf32>
    %251 = math.tanh %250 : vector<8x128xf32>
    %252 = vector.extract_strided_slice %251 {offsets = [0, 0], sizes = [8, 32], strides = [1, 1]} : vector<8x128xf32> to vector<8x32xf32>
    %253 = vector.extract_strided_slice %45 {offsets = [0, 0], sizes = [8, 1], strides = [1, 1]} : vector<8x4xf32> to vector<8x1xf32>
    %254 = vector.broadcast %253 : vector<8x1xf32> to vector<8x32xf32>
    %255 = arith.mulf %252, %254 : vector<8x32xf32>
    %256 = vector.extract_strided_slice %251 {offsets = [0, 32], sizes = [8, 32], strides = [1, 1]} : vector<8x128xf32> to vector<8x32xf32>
    %257 = vector.extract_strided_slice %45 {offsets = [0, 1], sizes = [8, 1], strides = [1, 1]} : vector<8x4xf32> to vector<8x1xf32>
    %258 = vector.broadcast %257 : vector<8x1xf32> to vector<8x32xf32>
    %259 = arith.mulf %256, %258 : vector<8x32xf32>
    %260 = arith.addf %255, %259 : vector<8x32xf32>
    %261 = vector.extract_strided_slice %251 {offsets = [0, 64], sizes = [8, 32], strides = [1, 1]} : vector<8x128xf32> to vector<8x32xf32>
    %262 = vector.extract_strided_slice %45 {offsets = [0, 2], sizes = [8, 1], strides = [1, 1]} : vector<8x4xf32> to vector<8x1xf32>
    %263 = vector.broadcast %262 : vector<8x1xf32> to vector<8x32xf32>
    %264 = arith.mulf %261, %263 : vector<8x32xf32>
    %265 = arith.addf %260, %264 : vector<8x32xf32>
    %266 = vector.extract_strided_slice %251 {offsets = [0, 96], sizes = [8, 32], strides = [1, 1]} : vector<8x128xf32> to vector<8x32xf32>
    %267 = vector.extract_strided_slice %45 {offsets = [0, 3], sizes = [8, 1], strides = [1, 1]} : vector<8x4xf32> to vector<8x1xf32>
    %268 = vector.broadcast %267 : vector<8x1xf32> to vector<8x32xf32>
    %269 = arith.mulf %266, %268 : vector<8x32xf32>
    %270 = arith.addf %265, %269 : vector<8x32xf32>
    %271 = vector.broadcast %211 : f32 to vector<8x32xf32>
    %272 = arith.mulf %271, %270 : vector<8x32xf32>
    %cst_64 = arith.constant 0.333333343 : f32
    %273 = vector.broadcast %cst_64 : f32 to vector<8x32xf32>
    %274 = arith.mulf %272, %273 : vector<8x32xf32>
    %275 = arith.addf %203, %274 : vector<8x32xf32>
    %cst_65 = arith.constant dense<0.000000e+00> : vector<8x32xf32>
    %276 = tpu.matmul %275, %2, %cst_65 {dimension_numbers = #tpu.dot_dimension_numbers<[1], [0], [0], [1], [0, 0, 1, 1], [], []>} : vector<8x32xf32>, vector<32x32xf32>, vector<8x32xf32> -> vector<8x32xf32>
    %277 = vector.broadcast %3 : vector<1x32xf32> to vector<8x32xf32>
    %278 = arith.addf %276, %277 : vector<8x32xf32>
    %cst_66 = arith.constant 0.000000e+00 : f32
    %279 = vector.broadcast %cst_66 : f32 to vector<8x32xf32>
    %280 = arith.maximumf %278, %279 : vector<8x32xf32>
    %cst_67 = arith.constant dense<0.000000e+00> : vector<8x32xf32>
    %281 = tpu.matmul %280, %4, %cst_67 {dimension_numbers = #tpu.dot_dimension_numbers<[1], [0], [0], [1], [0, 0, 1, 1], [], []>} : vector<8x32xf32>, vector<32x32xf32>, vector<8x32xf32> -> vector<8x32xf32>
    %282 = vector.broadcast %5 : vector<1x32xf32> to vector<8x32xf32>
    %283 = arith.addf %281, %282 : vector<8x32xf32>
    %cst_68 = arith.constant 0.000000e+00 : f32
    %284 = vector.broadcast %cst_68 : f32 to vector<8x32xf32>
    %285 = arith.maximumf %283, %284 : vector<8x32xf32>
    %cst_69 = arith.constant dense<0.000000e+00> : vector<8x128xf32>
    %286 = tpu.matmul %285, %6, %cst_69 {dimension_numbers = #tpu.dot_dimension_numbers<[1], [0], [0], [1], [0, 0, 1, 1], [], []>} : vector<8x32xf32>, vector<32x128xf32>, vector<8x128xf32> -> vector<8x128xf32>
    %287 = vector.broadcast %7 : vector<1x128xf32> to vector<8x128xf32>
    %288 = arith.addf %286, %287 : vector<8x128xf32>
    %289 = math.tanh %288 : vector<8x128xf32>
    %290 = vector.extract_strided_slice %289 {offsets = [0, 0], sizes = [8, 32], strides = [1, 1]} : vector<8x128xf32> to vector<8x32xf32>
    %291 = vector.extract_strided_slice %225 {offsets = [0, 0], sizes = [8, 1], strides = [1, 1]} : vector<8x4xf32> to vector<8x1xf32>
    %292 = vector.broadcast %291 : vector<8x1xf32> to vector<8x32xf32>
    %293 = arith.mulf %290, %292 : vector<8x32xf32>
    %294 = vector.extract_strided_slice %289 {offsets = [0, 32], sizes = [8, 32], strides = [1, 1]} : vector<8x128xf32> to vector<8x32xf32>
    %295 = vector.extract_strided_slice %225 {offsets = [0, 1], sizes = [8, 1], strides = [1, 1]} : vector<8x4xf32> to vector<8x1xf32>
    %296 = vector.broadcast %295 : vector<8x1xf32> to vector<8x32xf32>
    %297 = arith.mulf %294, %296 : vector<8x32xf32>
    %298 = arith.addf %293, %297 : vector<8x32xf32>
    %299 = vector.extract_strided_slice %289 {offsets = [0, 64], sizes = [8, 32], strides = [1, 1]} : vector<8x128xf32> to vector<8x32xf32>
    %300 = vector.extract_strided_slice %225 {offsets = [0, 2], sizes = [8, 1], strides = [1, 1]} : vector<8x4xf32> to vector<8x1xf32>
    %301 = vector.broadcast %300 : vector<8x1xf32> to vector<8x32xf32>
    %302 = arith.mulf %299, %301 : vector<8x32xf32>
    %303 = arith.addf %298, %302 : vector<8x32xf32>
    %304 = vector.extract_strided_slice %289 {offsets = [0, 96], sizes = [8, 32], strides = [1, 1]} : vector<8x128xf32> to vector<8x32xf32>
    %305 = vector.extract_strided_slice %225 {offsets = [0, 3], sizes = [8, 1], strides = [1, 1]} : vector<8x4xf32> to vector<8x1xf32>
    %306 = vector.broadcast %305 : vector<8x1xf32> to vector<8x32xf32>
    %307 = arith.mulf %304, %306 : vector<8x32xf32>
    %308 = arith.addf %303, %307 : vector<8x32xf32>
    %cst_70 = arith.constant 0.333333343 : f32
    %309 = vector.broadcast %cst_70 : f32 to vector<8x32xf32>
    %310 = arith.mulf %270, %309 : vector<8x32xf32>
    %311 = arith.subf %308, %310 : vector<8x32xf32>
    %312 = vector.broadcast %211 : f32 to vector<8x32xf32>
    %313 = arith.mulf %312, %311 : vector<8x32xf32>
    %314 = arith.addf %203, %313 : vector<8x32xf32>
    %cst_71 = arith.constant dense<0.000000e+00> : vector<8x32xf32>
    %315 = tpu.matmul %314, %2, %cst_71 {dimension_numbers = #tpu.dot_dimension_numbers<[1], [0], [0], [1], [0, 0, 1, 1], [], []>} : vector<8x32xf32>, vector<32x32xf32>, vector<8x32xf32> -> vector<8x32xf32>
    %316 = vector.broadcast %3 : vector<1x32xf32> to vector<8x32xf32>
    %317 = arith.addf %315, %316 : vector<8x32xf32>
    %cst_72 = arith.constant 0.000000e+00 : f32
    %318 = vector.broadcast %cst_72 : f32 to vector<8x32xf32>
    %319 = arith.maximumf %317, %318 : vector<8x32xf32>
    %cst_73 = arith.constant dense<0.000000e+00> : vector<8x32xf32>
    %320 = tpu.matmul %319, %4, %cst_73 {dimension_numbers = #tpu.dot_dimension_numbers<[1], [0], [0], [1], [0, 0, 1, 1], [], []>} : vector<8x32xf32>, vector<32x32xf32>, vector<8x32xf32> -> vector<8x32xf32>
    %321 = vector.broadcast %5 : vector<1x32xf32> to vector<8x32xf32>
    %322 = arith.addf %320, %321 : vector<8x32xf32>
    %cst_74 = arith.constant 0.000000e+00 : f32
    %323 = vector.broadcast %cst_74 : f32 to vector<8x32xf32>
    %324 = arith.maximumf %322, %323 : vector<8x32xf32>
    %cst_75 = arith.constant dense<0.000000e+00> : vector<8x128xf32>
    %325 = tpu.matmul %324, %6, %cst_75 {dimension_numbers = #tpu.dot_dimension_numbers<[1], [0], [0], [1], [0, 0, 1, 1], [], []>} : vector<8x32xf32>, vector<32x128xf32>, vector<8x128xf32> -> vector<8x128xf32>
    %326 = vector.broadcast %7 : vector<1x128xf32> to vector<8x128xf32>
    %327 = arith.addf %325, %326 : vector<8x128xf32>
    %328 = math.tanh %327 : vector<8x128xf32>
    %329 = vector.extract_strided_slice %328 {offsets = [0, 0], sizes = [8, 32], strides = [1, 1]} : vector<8x128xf32> to vector<8x32xf32>
    %330 = vector.extract_strided_slice %231 {offsets = [0, 0], sizes = [8, 1], strides = [1, 1]} : vector<8x4xf32> to vector<8x1xf32>
    %331 = vector.broadcast %330 : vector<8x1xf32> to vector<8x32xf32>
    %332 = arith.mulf %329, %331 : vector<8x32xf32>
    %333 = vector.extract_strided_slice %328 {offsets = [0, 32], sizes = [8, 32], strides = [1, 1]} : vector<8x128xf32> to vector<8x32xf32>
    %334 = vector.extract_strided_slice %231 {offsets = [0, 1], sizes = [8, 1], strides = [1, 1]} : vector<8x4xf32> to vector<8x1xf32>
    %335 = vector.broadcast %334 : vector<8x1xf32> to vector<8x32xf32>
    %336 = arith.mulf %333, %335 : vector<8x32xf32>
    %337 = arith.addf %332, %336 : vector<8x32xf32>
    %338 = vector.extract_strided_slice %328 {offsets = [0, 64], sizes = [8, 32], strides = [1, 1]} : vector<8x128xf32> to vector<8x32xf32>
    %339 = vector.extract_strided_slice %231 {offsets = [0, 2], sizes = [8, 1], strides = [1, 1]} : vector<8x4xf32> to vector<8x1xf32>
    %340 = vector.broadcast %339 : vector<8x1xf32> to vector<8x32xf32>
    %341 = arith.mulf %338, %340 : vector<8x32xf32>
    %342 = arith.addf %337, %341 : vector<8x32xf32>
    %343 = vector.extract_strided_slice %328 {offsets = [0, 96], sizes = [8, 32], strides = [1, 1]} : vector<8x128xf32> to vector<8x32xf32>
    %344 = vector.extract_strided_slice %231 {offsets = [0, 3], sizes = [8, 1], strides = [1, 1]} : vector<8x4xf32> to vector<8x1xf32>
    %345 = vector.broadcast %344 : vector<8x1xf32> to vector<8x32xf32>
    %346 = arith.mulf %343, %345 : vector<8x32xf32>
    %347 = arith.addf %342, %346 : vector<8x32xf32>
    %348 = arith.subf %270, %308 : vector<8x32xf32>
    %349 = arith.addf %348, %347 : vector<8x32xf32>
    %350 = vector.broadcast %211 : f32 to vector<8x32xf32>
    %351 = arith.mulf %350, %349 : vector<8x32xf32>
    %352 = arith.addf %203, %351 : vector<8x32xf32>
    %cst_76 = arith.constant dense<0.000000e+00> : vector<8x32xf32>
    %353 = tpu.matmul %352, %2, %cst_76 {dimension_numbers = #tpu.dot_dimension_numbers<[1], [0], [0], [1], [0, 0, 1, 1], [], []>} : vector<8x32xf32>, vector<32x32xf32>, vector<8x32xf32> -> vector<8x32xf32>
    %354 = vector.broadcast %3 : vector<1x32xf32> to vector<8x32xf32>
    %355 = arith.addf %353, %354 : vector<8x32xf32>
    %cst_77 = arith.constant 0.000000e+00 : f32
    %356 = vector.broadcast %cst_77 : f32 to vector<8x32xf32>
    %357 = arith.maximumf %355, %356 : vector<8x32xf32>
    %cst_78 = arith.constant dense<0.000000e+00> : vector<8x32xf32>
    %358 = tpu.matmul %357, %4, %cst_78 {dimension_numbers = #tpu.dot_dimension_numbers<[1], [0], [0], [1], [0, 0, 1, 1], [], []>} : vector<8x32xf32>, vector<32x32xf32>, vector<8x32xf32> -> vector<8x32xf32>
    %359 = vector.broadcast %5 : vector<1x32xf32> to vector<8x32xf32>
    %360 = arith.addf %358, %359 : vector<8x32xf32>
    %cst_79 = arith.constant 0.000000e+00 : f32
    %361 = vector.broadcast %cst_79 : f32 to vector<8x32xf32>
    %362 = arith.maximumf %360, %361 : vector<8x32xf32>
    %cst_80 = arith.constant dense<0.000000e+00> : vector<8x128xf32>
    %363 = tpu.matmul %362, %6, %cst_80 {dimension_numbers = #tpu.dot_dimension_numbers<[1], [0], [0], [1], [0, 0, 1, 1], [], []>} : vector<8x32xf32>, vector<32x128xf32>, vector<8x128xf32> -> vector<8x128xf32>
    %364 = vector.broadcast %7 : vector<1x128xf32> to vector<8x128xf32>
    %365 = arith.addf %363, %364 : vector<8x128xf32>
    %366 = math.tanh %365 : vector<8x128xf32>
    %367 = vector.extract_strided_slice %366 {offsets = [0, 0], sizes = [8, 32], strides = [1, 1]} : vector<8x128xf32> to vector<8x32xf32>
    %368 = vector.extract_strided_slice %237 {offsets = [0, 0], sizes = [8, 1], strides = [1, 1]} : vector<8x4xf32> to vector<8x1xf32>
    %369 = vector.broadcast %368 : vector<8x1xf32> to vector<8x32xf32>
    %370 = arith.mulf %367, %369 : vector<8x32xf32>
    %371 = vector.extract_strided_slice %366 {offsets = [0, 32], sizes = [8, 32], strides = [1, 1]} : vector<8x128xf32> to vector<8x32xf32>
    %372 = vector.extract_strided_slice %237 {offsets = [0, 1], sizes = [8, 1], strides = [1, 1]} : vector<8x4xf32> to vector<8x1xf32>
    %373 = vector.broadcast %372 : vector<8x1xf32> to vector<8x32xf32>
    %374 = arith.mulf %371, %373 : vector<8x32xf32>
    %375 = arith.addf %370, %374 : vector<8x32xf32>
    %376 = vector.extract_strided_slice %366 {offsets = [0, 64], sizes = [8, 32], strides = [1, 1]} : vector<8x128xf32> to vector<8x32xf32>
    %377 = vector.extract_strided_slice %237 {offsets = [0, 2], sizes = [8, 1], strides = [1, 1]} : vector<8x4xf32> to vector<8x1xf32>
    %378 = vector.broadcast %377 : vector<8x1xf32> to vector<8x32xf32>
    %379 = arith.mulf %376, %378 : vector<8x32xf32>
    %380 = arith.addf %375, %379 : vector<8x32xf32>
    %381 = vector.extract_strided_slice %366 {offsets = [0, 96], sizes = [8, 32], strides = [1, 1]} : vector<8x128xf32> to vector<8x32xf32>
    %382 = vector.extract_strided_slice %237 {offsets = [0, 3], sizes = [8, 1], strides = [1, 1]} : vector<8x4xf32> to vector<8x1xf32>
    %383 = vector.broadcast %382 : vector<8x1xf32> to vector<8x32xf32>
    %384 = arith.mulf %381, %383 : vector<8x32xf32>
    %385 = arith.addf %380, %384 : vector<8x32xf32>
    %386 = arith.addf %308, %347 : vector<8x32xf32>
    %cst_81 = arith.constant 3.000000e+00 : f32
    %387 = vector.broadcast %cst_81 : f32 to vector<8x32xf32>
    %388 = arith.mulf %387, %386 : vector<8x32xf32>
    %389 = arith.addf %270, %388 : vector<8x32xf32>
    %390 = arith.addf %389, %385 : vector<8x32xf32>
    %391 = vector.broadcast %211 : f32 to vector<8x32xf32>
    %392 = arith.mulf %390, %391 : vector<8x32xf32>
    %cst_82 = arith.constant 1.250000e-01 : f32
    %393 = vector.broadcast %cst_82 : f32 to vector<8x32xf32>
    %394 = arith.mulf %392, %393 : vector<8x32xf32>
    %395 = arith.addf %203, %394 : vector<8x32xf32>
    %c1_i32_83 = arith.constant 1 : i32
    %396 = arith.addi %c1_i32_54, %c1_i32_83 : i32
    %397 = vector.broadcast %396 : i32 to vector<8x1xi32>
    %398 = arith.cmpi eq, %10, %397 : vector<8x1xi32>
    %399 = vector.shape_cast %398 : vector<8x1xi1> to vector<8x1xi1>
    %400 = vector.broadcast %399 : vector<8x1xi1> to vector<8x32xi1>
    %401 = arith.select %400, %395, %209 : vector<8x32xi1>, vector<8x32xf32>
    %c2_i32 = arith.constant 2 : i32
    %402 = arith.index_cast %c2_i32 : i32 to index
    %403 = memref.load %arg1[%402] : memref<7xf32, #tpu.memory_space<smem>>
    %404 = arith.index_cast %c2_i32 : i32 to index
    %c0_84 = arith.constant 0 : index
    %c0_85 = arith.constant 0 : index
    %405 = vector.load %arg4[%404, %c0_84, %c0_85] : memref<7x8x12xf32, #tpu.memory_space<vmem>>, vector<1x8x12xf32>
    %406 = vector.shape_cast %405 : vector<1x8x12xf32> to vector<8x12xf32>
    %407 = vector.extract_strided_slice %406 {offsets = [0, 0], sizes = [8, 4], strides = [1, 1]} : vector<8x12xf32> to vector<8x4xf32>
    %408 = vector.extract_strided_slice %406 {offsets = [0, 4], sizes = [8, 4], strides = [1, 1]} : vector<8x12xf32> to vector<8x4xf32>
    %409 = vector.extract_strided_slice %406 {offsets = [0, 8], sizes = [8, 4], strides = [1, 1]} : vector<8x12xf32> to vector<8x4xf32>
    %cst_86 = arith.constant 0.333333343 : f32
    %410 = arith.mulf %403, %cst_86 : f32
    %cst_87 = arith.constant 0.666666686 : f32
    %411 = arith.mulf %403, %cst_87 : f32
    %412 = vector.broadcast %410 : f32 to vector<8x4xf32>
    %413 = arith.mulf %409, %412 : vector<8x4xf32>
    %414 = arith.addf %408, %413 : vector<8x4xf32>
    %415 = vector.broadcast %410 : f32 to vector<8x4xf32>
    %416 = arith.mulf %414, %415 : vector<8x4xf32>
    %417 = arith.addf %407, %416 : vector<8x4xf32>
    %418 = vector.broadcast %411 : f32 to vector<8x4xf32>
    %419 = arith.mulf %409, %418 : vector<8x4xf32>
    %420 = arith.addf %408, %419 : vector<8x4xf32>
    %421 = vector.broadcast %411 : f32 to vector<8x4xf32>
    %422 = arith.mulf %420, %421 : vector<8x4xf32>
    %423 = arith.addf %407, %422 : vector<8x4xf32>
    %424 = vector.broadcast %403 : f32 to vector<8x4xf32>
    %425 = arith.mulf %409, %424 : vector<8x4xf32>
    %426 = arith.addf %408, %425 : vector<8x4xf32>
    %427 = vector.broadcast %403 : f32 to vector<8x4xf32>
    %428 = arith.mulf %426, %427 : vector<8x4xf32>
    %429 = arith.addf %407, %428 : vector<8x4xf32>
    %cst_88 = arith.constant dense<0.000000e+00> : vector<8x32xf32>
    %430 = tpu.matmul %395, %2, %cst_88 {dimension_numbers = #tpu.dot_dimension_numbers<[1], [0], [0], [1], [0, 0, 1, 1], [], []>} : vector<8x32xf32>, vector<32x32xf32>, vector<8x32xf32> -> vector<8x32xf32>
    %431 = vector.broadcast %3 : vector<1x32xf32> to vector<8x32xf32>
    %432 = arith.addf %430, %431 : vector<8x32xf32>
    %cst_89 = arith.constant 0.000000e+00 : f32
    %433 = vector.broadcast %cst_89 : f32 to vector<8x32xf32>
    %434 = arith.maximumf %432, %433 : vector<8x32xf32>
    %cst_90 = arith.constant dense<0.000000e+00> : vector<8x32xf32>
    %435 = tpu.matmul %434, %4, %cst_90 {dimension_numbers = #tpu.dot_dimension_numbers<[1], [0], [0], [1], [0, 0, 1, 1], [], []>} : vector<8x32xf32>, vector<32x32xf32>, vector<8x32xf32> -> vector<8x32xf32>
    %436 = vector.broadcast %5 : vector<1x32xf32> to vector<8x32xf32>
    %437 = arith.addf %435, %436 : vector<8x32xf32>
    %cst_91 = arith.constant 0.000000e+00 : f32
    %438 = vector.broadcast %cst_91 : f32 to vector<8x32xf32>
    %439 = arith.maximumf %437, %438 : vector<8x32xf32>
    %cst_92 = arith.constant dense<0.000000e+00> : vector<8x128xf32>
    %440 = tpu.matmul %439, %6, %cst_92 {dimension_numbers = #tpu.dot_dimension_numbers<[1], [0], [0], [1], [0, 0, 1, 1], [], []>} : vector<8x32xf32>, vector<32x128xf32>, vector<8x128xf32> -> vector<8x128xf32>
    %441 = vector.broadcast %7 : vector<1x128xf32> to vector<8x128xf32>
    %442 = arith.addf %440, %441 : vector<8x128xf32>
    %443 = math.tanh %442 : vector<8x128xf32>
    %444 = vector.extract_strided_slice %443 {offsets = [0, 0], sizes = [8, 32], strides = [1, 1]} : vector<8x128xf32> to vector<8x32xf32>
    %445 = vector.extract_strided_slice %237 {offsets = [0, 0], sizes = [8, 1], strides = [1, 1]} : vector<8x4xf32> to vector<8x1xf32>
    %446 = vector.broadcast %445 : vector<8x1xf32> to vector<8x32xf32>
    %447 = arith.mulf %444, %446 : vector<8x32xf32>
    %448 = vector.extract_strided_slice %443 {offsets = [0, 32], sizes = [8, 32], strides = [1, 1]} : vector<8x128xf32> to vector<8x32xf32>
    %449 = vector.extract_strided_slice %237 {offsets = [0, 1], sizes = [8, 1], strides = [1, 1]} : vector<8x4xf32> to vector<8x1xf32>
    %450 = vector.broadcast %449 : vector<8x1xf32> to vector<8x32xf32>
    %451 = arith.mulf %448, %450 : vector<8x32xf32>
    %452 = arith.addf %447, %451 : vector<8x32xf32>
    %453 = vector.extract_strided_slice %443 {offsets = [0, 64], sizes = [8, 32], strides = [1, 1]} : vector<8x128xf32> to vector<8x32xf32>
    %454 = vector.extract_strided_slice %237 {offsets = [0, 2], sizes = [8, 1], strides = [1, 1]} : vector<8x4xf32> to vector<8x1xf32>
    %455 = vector.broadcast %454 : vector<8x1xf32> to vector<8x32xf32>
    %456 = arith.mulf %453, %455 : vector<8x32xf32>
    %457 = arith.addf %452, %456 : vector<8x32xf32>
    %458 = vector.extract_strided_slice %443 {offsets = [0, 96], sizes = [8, 32], strides = [1, 1]} : vector<8x128xf32> to vector<8x32xf32>
    %459 = vector.extract_strided_slice %237 {offsets = [0, 3], sizes = [8, 1], strides = [1, 1]} : vector<8x4xf32> to vector<8x1xf32>
    %460 = vector.broadcast %459 : vector<8x1xf32> to vector<8x32xf32>
    %461 = arith.mulf %458, %460 : vector<8x32xf32>
    %462 = arith.addf %457, %461 : vector<8x32xf32>
    %463 = vector.broadcast %403 : f32 to vector<8x32xf32>
    %464 = arith.mulf %463, %462 : vector<8x32xf32>
    %cst_93 = arith.constant 0.333333343 : f32
    %465 = vector.broadcast %cst_93 : f32 to vector<8x32xf32>
    %466 = arith.mulf %464, %465 : vector<8x32xf32>
    %467 = arith.addf %395, %466 : vector<8x32xf32>
    %cst_94 = arith.constant dense<0.000000e+00> : vector<8x32xf32>
    %468 = tpu.matmul %467, %2, %cst_94 {dimension_numbers = #tpu.dot_dimension_numbers<[1], [0], [0], [1], [0, 0, 1, 1], [], []>} : vector<8x32xf32>, vector<32x32xf32>, vector<8x32xf32> -> vector<8x32xf32>
    %469 = vector.broadcast %3 : vector<1x32xf32> to vector<8x32xf32>
    %470 = arith.addf %468, %469 : vector<8x32xf32>
    %cst_95 = arith.constant 0.000000e+00 : f32
    %471 = vector.broadcast %cst_95 : f32 to vector<8x32xf32>
    %472 = arith.maximumf %470, %471 : vector<8x32xf32>
    %cst_96 = arith.constant dense<0.000000e+00> : vector<8x32xf32>
    %473 = tpu.matmul %472, %4, %cst_96 {dimension_numbers = #tpu.dot_dimension_numbers<[1], [0], [0], [1], [0, 0, 1, 1], [], []>} : vector<8x32xf32>, vector<32x32xf32>, vector<8x32xf32> -> vector<8x32xf32>
    %474 = vector.broadcast %5 : vector<1x32xf32> to vector<8x32xf32>
    %475 = arith.addf %473, %474 : vector<8x32xf32>
    %cst_97 = arith.constant 0.000000e+00 : f32
    %476 = vector.broadcast %cst_97 : f32 to vector<8x32xf32>
    %477 = arith.maximumf %475, %476 : vector<8x32xf32>
    %cst_98 = arith.constant dense<0.000000e+00> : vector<8x128xf32>
    %478 = tpu.matmul %477, %6, %cst_98 {dimension_numbers = #tpu.dot_dimension_numbers<[1], [0], [0], [1], [0, 0, 1, 1], [], []>} : vector<8x32xf32>, vector<32x128xf32>, vector<8x128xf32> -> vector<8x128xf32>
    %479 = vector.broadcast %7 : vector<1x128xf32> to vector<8x128xf32>
    %480 = arith.addf %478, %479 : vector<8x128xf32>
    %481 = math.tanh %480 : vector<8x128xf32>
    %482 = vector.extract_strided_slice %481 {offsets = [0, 0], sizes = [8, 32], strides = [1, 1]} : vector<8x128xf32> to vector<8x32xf32>
    %483 = vector.extract_strided_slice %417 {offsets = [0, 0], sizes = [8, 1], strides = [1, 1]} : vector<8x4xf32> to vector<8x1xf32>
    %484 = vector.broadcast %483 : vector<8x1xf32> to vector<8x32xf32>
    %485 = arith.mulf %482, %484 : vector<8x32xf32>
    %486 = vector.extract_strided_slice %481 {offsets = [0, 32], sizes = [8, 32], strides = [1, 1]} : vector<8x128xf32> to vector<8x32xf32>
    %487 = vector.extract_strided_slice %417 {offsets = [0, 1], sizes = [8, 1], strides = [1, 1]} : vector<8x4xf32> to vector<8x1xf32>
    %488 = vector.broadcast %487 : vector<8x1xf32> to vector<8x32xf32>
    %489 = arith.mulf %486, %488 : vector<8x32xf32>
    %490 = arith.addf %485, %489 : vector<8x32xf32>
    %491 = vector.extract_strided_slice %481 {offsets = [0, 64], sizes = [8, 32], strides = [1, 1]} : vector<8x128xf32> to vector<8x32xf32>
    %492 = vector.extract_strided_slice %417 {offsets = [0, 2], sizes = [8, 1], strides = [1, 1]} : vector<8x4xf32> to vector<8x1xf32>
    %493 = vector.broadcast %492 : vector<8x1xf32> to vector<8x32xf32>
    %494 = arith.mulf %491, %493 : vector<8x32xf32>
    %495 = arith.addf %490, %494 : vector<8x32xf32>
    %496 = vector.extract_strided_slice %481 {offsets = [0, 96], sizes = [8, 32], strides = [1, 1]} : vector<8x128xf32> to vector<8x32xf32>
    %497 = vector.extract_strided_slice %417 {offsets = [0, 3], sizes = [8, 1], strides = [1, 1]} : vector<8x4xf32> to vector<8x1xf32>
    %498 = vector.broadcast %497 : vector<8x1xf32> to vector<8x32xf32>
    %499 = arith.mulf %496, %498 : vector<8x32xf32>
    %500 = arith.addf %495, %499 : vector<8x32xf32>
    %cst_99 = arith.constant 0.333333343 : f32
    %501 = vector.broadcast %cst_99 : f32 to vector<8x32xf32>
    %502 = arith.mulf %462, %501 : vector<8x32xf32>
    %503 = arith.subf %500, %502 : vector<8x32xf32>
    %504 = vector.broadcast %403 : f32 to vector<8x32xf32>
    %505 = arith.mulf %504, %503 : vector<8x32xf32>
    %506 = arith.addf %395, %505 : vector<8x32xf32>
    %cst_100 = arith.constant dense<0.000000e+00> : vector<8x32xf32>
    %507 = tpu.matmul %506, %2, %cst_100 {dimension_numbers = #tpu.dot_dimension_numbers<[1], [0], [0], [1], [0, 0, 1, 1], [], []>} : vector<8x32xf32>, vector<32x32xf32>, vector<8x32xf32> -> vector<8x32xf32>
    %508 = vector.broadcast %3 : vector<1x32xf32> to vector<8x32xf32>
    %509 = arith.addf %507, %508 : vector<8x32xf32>
    %cst_101 = arith.constant 0.000000e+00 : f32
    %510 = vector.broadcast %cst_101 : f32 to vector<8x32xf32>
    %511 = arith.maximumf %509, %510 : vector<8x32xf32>
    %cst_102 = arith.constant dense<0.000000e+00> : vector<8x32xf32>
    %512 = tpu.matmul %511, %4, %cst_102 {dimension_numbers = #tpu.dot_dimension_numbers<[1], [0], [0], [1], [0, 0, 1, 1], [], []>} : vector<8x32xf32>, vector<32x32xf32>, vector<8x32xf32> -> vector<8x32xf32>
    %513 = vector.broadcast %5 : vector<1x32xf32> to vector<8x32xf32>
    %514 = arith.addf %512, %513 : vector<8x32xf32>
    %cst_103 = arith.constant 0.000000e+00 : f32
    %515 = vector.broadcast %cst_103 : f32 to vector<8x32xf32>
    %516 = arith.maximumf %514, %515 : vector<8x32xf32>
    %cst_104 = arith.constant dense<0.000000e+00> : vector<8x128xf32>
    %517 = tpu.matmul %516, %6, %cst_104 {dimension_numbers = #tpu.dot_dimension_numbers<[1], [0], [0], [1], [0, 0, 1, 1], [], []>} : vector<8x32xf32>, vector<32x128xf32>, vector<8x128xf32> -> vector<8x128xf32>
    %518 = vector.broadcast %7 : vector<1x128xf32> to vector<8x128xf32>
    %519 = arith.addf %517, %518 : vector<8x128xf32>
    %520 = math.tanh %519 : vector<8x128xf32>
    %521 = vector.extract_strided_slice %520 {offsets = [0, 0], sizes = [8, 32], strides = [1, 1]} : vector<8x128xf32> to vector<8x32xf32>
    %522 = vector.extract_strided_slice %423 {offsets = [0, 0], sizes = [8, 1], strides = [1, 1]} : vector<8x4xf32> to vector<8x1xf32>
    %523 = vector.broadcast %522 : vector<8x1xf32> to vector<8x32xf32>
    %524 = arith.mulf %521, %523 : vector<8x32xf32>
    %525 = vector.extract_strided_slice %520 {offsets = [0, 32], sizes = [8, 32], strides = [1, 1]} : vector<8x128xf32> to vector<8x32xf32>
    %526 = vector.extract_strided_slice %423 {offsets = [0, 1], sizes = [8, 1], strides = [1, 1]} : vector<8x4xf32> to vector<8x1xf32>
    %527 = vector.broadcast %526 : vector<8x1xf32> to vector<8x32xf32>
    %528 = arith.mulf %525, %527 : vector<8x32xf32>
    %529 = arith.addf %524, %528 : vector<8x32xf32>
    %530 = vector.extract_strided_slice %520 {offsets = [0, 64], sizes = [8, 32], strides = [1, 1]} : vector<8x128xf32> to vector<8x32xf32>
    %531 = vector.extract_strided_slice %423 {offsets = [0, 2], sizes = [8, 1], strides = [1, 1]} : vector<8x4xf32> to vector<8x1xf32>
    %532 = vector.broadcast %531 : vector<8x1xf32> to vector<8x32xf32>
    %533 = arith.mulf %530, %532 : vector<8x32xf32>
    %534 = arith.addf %529, %533 : vector<8x32xf32>
    %535 = vector.extract_strided_slice %520 {offsets = [0, 96], sizes = [8, 32], strides = [1, 1]} : vector<8x128xf32> to vector<8x32xf32>
    %536 = vector.extract_strided_slice %423 {offsets = [0, 3], sizes = [8, 1], strides = [1, 1]} : vector<8x4xf32> to vector<8x1xf32>
    %537 = vector.broadcast %536 : vector<8x1xf32> to vector<8x32xf32>
    %538 = arith.mulf %535, %537 : vector<8x32xf32>
    %539 = arith.addf %534, %538 : vector<8x32xf32>
    %540 = arith.subf %462, %500 : vector<8x32xf32>
    %541 = arith.addf %540, %539 : vector<8x32xf32>
    %542 = vector.broadcast %403 : f32 to vector<8x32xf32>
    %543 = arith.mulf %542, %541 : vector<8x32xf32>
    %544 = arith.addf %395, %543 : vector<8x32xf32>
    %cst_105 = arith.constant dense<0.000000e+00> : vector<8x32xf32>
    %545 = tpu.matmul %544, %2, %cst_105 {dimension_numbers = #tpu.dot_dimension_numbers<[1], [0], [0], [1], [0, 0, 1, 1], [], []>} : vector<8x32xf32>, vector<32x32xf32>, vector<8x32xf32> -> vector<8x32xf32>
    %546 = vector.broadcast %3 : vector<1x32xf32> to vector<8x32xf32>
    %547 = arith.addf %545, %546 : vector<8x32xf32>
    %cst_106 = arith.constant 0.000000e+00 : f32
    %548 = vector.broadcast %cst_106 : f32 to vector<8x32xf32>
    %549 = arith.maximumf %547, %548 : vector<8x32xf32>
    %cst_107 = arith.constant dense<0.000000e+00> : vector<8x32xf32>
    %550 = tpu.matmul %549, %4, %cst_107 {dimension_numbers = #tpu.dot_dimension_numbers<[1], [0], [0], [1], [0, 0, 1, 1], [], []>} : vector<8x32xf32>, vector<32x32xf32>, vector<8x32xf32> -> vector<8x32xf32>
    %551 = vector.broadcast %5 : vector<1x32xf32> to vector<8x32xf32>
    %552 = arith.addf %550, %551 : vector<8x32xf32>
    %cst_108 = arith.constant 0.000000e+00 : f32
    %553 = vector.broadcast %cst_108 : f32 to vector<8x32xf32>
    %554 = arith.maximumf %552, %553 : vector<8x32xf32>
    %cst_109 = arith.constant dense<0.000000e+00> : vector<8x128xf32>
    %555 = tpu.matmul %554, %6, %cst_109 {dimension_numbers = #tpu.dot_dimension_numbers<[1], [0], [0], [1], [0, 0, 1, 1], [], []>} : vector<8x32xf32>, vector<32x128xf32>, vector<8x128xf32> -> vector<8x128xf32>
    %556 = vector.broadcast %7 : vector<1x128xf32> to vector<8x128xf32>
    %557 = arith.addf %555, %556 : vector<8x128xf32>
    %558 = math.tanh %557 : vector<8x128xf32>
    %559 = vector.extract_strided_slice %558 {offsets = [0, 0], sizes = [8, 32], strides = [1, 1]} : vector<8x128xf32> to vector<8x32xf32>
    %560 = vector.extract_strided_slice %429 {offsets = [0, 0], sizes = [8, 1], strides = [1, 1]} : vector<8x4xf32> to vector<8x1xf32>
    %561 = vector.broadcast %560 : vector<8x1xf32> to vector<8x32xf32>
    %562 = arith.mulf %559, %561 : vector<8x32xf32>
    %563 = vector.extract_strided_slice %558 {offsets = [0, 32], sizes = [8, 32], strides = [1, 1]} : vector<8x128xf32> to vector<8x32xf32>
    %564 = vector.extract_strided_slice %429 {offsets = [0, 1], sizes = [8, 1], strides = [1, 1]} : vector<8x4xf32> to vector<8x1xf32>
    %565 = vector.broadcast %564 : vector<8x1xf32> to vector<8x32xf32>
    %566 = arith.mulf %563, %565 : vector<8x32xf32>
    %567 = arith.addf %562, %566 : vector<8x32xf32>
    %568 = vector.extract_strided_slice %558 {offsets = [0, 64], sizes = [8, 32], strides = [1, 1]} : vector<8x128xf32> to vector<8x32xf32>
    %569 = vector.extract_strided_slice %429 {offsets = [0, 2], sizes = [8, 1], strides = [1, 1]} : vector<8x4xf32> to vector<8x1xf32>
    %570 = vector.broadcast %569 : vector<8x1xf32> to vector<8x32xf32>
    %571 = arith.mulf %568, %570 : vector<8x32xf32>
    %572 = arith.addf %567, %571 : vector<8x32xf32>
    %573 = vector.extract_strided_slice %558 {offsets = [0, 96], sizes = [8, 32], strides = [1, 1]} : vector<8x128xf32> to vector<8x32xf32>
    %574 = vector.extract_strided_slice %429 {offsets = [0, 3], sizes = [8, 1], strides = [1, 1]} : vector<8x4xf32> to vector<8x1xf32>
    %575 = vector.broadcast %574 : vector<8x1xf32> to vector<8x32xf32>
    %576 = arith.mulf %573, %575 : vector<8x32xf32>
    %577 = arith.addf %572, %576 : vector<8x32xf32>
    %578 = arith.addf %500, %539 : vector<8x32xf32>
    %cst_110 = arith.constant 3.000000e+00 : f32
    %579 = vector.broadcast %cst_110 : f32 to vector<8x32xf32>
    %580 = arith.mulf %579, %578 : vector<8x32xf32>
    %581 = arith.addf %462, %580 : vector<8x32xf32>
    %582 = arith.addf %581, %577 : vector<8x32xf32>
    %583 = vector.broadcast %403 : f32 to vector<8x32xf32>
    %584 = arith.mulf %582, %583 : vector<8x32xf32>
    %cst_111 = arith.constant 1.250000e-01 : f32
    %585 = vector.broadcast %cst_111 : f32 to vector<8x32xf32>
    %586 = arith.mulf %584, %585 : vector<8x32xf32>
    %587 = arith.addf %395, %586 : vector<8x32xf32>
    %c1_i32_112 = arith.constant 1 : i32
    %588 = arith.addi %c2_i32, %c1_i32_112 : i32
    %589 = vector.broadcast %588 : i32 to vector<8x1xi32>
    %590 = arith.cmpi eq, %10, %589 : vector<8x1xi32>
    %591 = vector.shape_cast %590 : vector<8x1xi1> to vector<8x1xi1>
    %592 = vector.broadcast %591 : vector<8x1xi1> to vector<8x32xi1>
    %593 = arith.select %592, %587, %401 : vector<8x32xi1>, vector<8x32xf32>
    %c3_i32 = arith.constant 3 : i32
    %594 = arith.index_cast %c3_i32 : i32 to index
    %595 = memref.load %arg1[%594] : memref<7xf32, #tpu.memory_space<smem>>
    %596 = arith.index_cast %c3_i32 : i32 to index
    %c0_113 = arith.constant 0 : index
    %c0_114 = arith.constant 0 : index
    %597 = vector.load %arg4[%596, %c0_113, %c0_114] : memref<7x8x12xf32, #tpu.memory_space<vmem>>, vector<1x8x12xf32>
    %598 = vector.shape_cast %597 : vector<1x8x12xf32> to vector<8x12xf32>
    %599 = vector.extract_strided_slice %598 {offsets = [0, 0], sizes = [8, 4], strides = [1, 1]} : vector<8x12xf32> to vector<8x4xf32>
    %600 = vector.extract_strided_slice %598 {offsets = [0, 4], sizes = [8, 4], strides = [1, 1]} : vector<8x12xf32> to vector<8x4xf32>
    %601 = vector.extract_strided_slice %598 {offsets = [0, 8], sizes = [8, 4], strides = [1, 1]} : vector<8x12xf32> to vector<8x4xf32>
    %cst_115 = arith.constant 0.333333343 : f32
    %602 = arith.mulf %595, %cst_115 : f32
    %cst_116 = arith.constant 0.666666686 : f32
    %603 = arith.mulf %595, %cst_116 : f32
    %604 = vector.broadcast %602 : f32 to vector<8x4xf32>
    %605 = arith.mulf %601, %604 : vector<8x4xf32>
    %606 = arith.addf %600, %605 : vector<8x4xf32>
    %607 = vector.broadcast %602 : f32 to vector<8x4xf32>
    %608 = arith.mulf %606, %607 : vector<8x4xf32>
    %609 = arith.addf %599, %608 : vector<8x4xf32>
    %610 = vector.broadcast %603 : f32 to vector<8x4xf32>
    %611 = arith.mulf %601, %610 : vector<8x4xf32>
    %612 = arith.addf %600, %611 : vector<8x4xf32>
    %613 = vector.broadcast %603 : f32 to vector<8x4xf32>
    %614 = arith.mulf %612, %613 : vector<8x4xf32>
    %615 = arith.addf %599, %614 : vector<8x4xf32>
    %616 = vector.broadcast %595 : f32 to vector<8x4xf32>
    %617 = arith.mulf %601, %616 : vector<8x4xf32>
    %618 = arith.addf %600, %617 : vector<8x4xf32>
    %619 = vector.broadcast %595 : f32 to vector<8x4xf32>
    %620 = arith.mulf %618, %619 : vector<8x4xf32>
    %621 = arith.addf %599, %620 : vector<8x4xf32>
    %cst_117 = arith.constant dense<0.000000e+00> : vector<8x32xf32>
    %622 = tpu.matmul %587, %2, %cst_117 {dimension_numbers = #tpu.dot_dimension_numbers<[1], [0], [0], [1], [0, 0, 1, 1], [], []>} : vector<8x32xf32>, vector<32x32xf32>, vector<8x32xf32> -> vector<8x32xf32>
    %623 = vector.broadcast %3 : vector<1x32xf32> to vector<8x32xf32>
    %624 = arith.addf %622, %623 : vector<8x32xf32>
    %cst_118 = arith.constant 0.000000e+00 : f32
    %625 = vector.broadcast %cst_118 : f32 to vector<8x32xf32>
    %626 = arith.maximumf %624, %625 : vector<8x32xf32>
    %cst_119 = arith.constant dense<0.000000e+00> : vector<8x32xf32>
    %627 = tpu.matmul %626, %4, %cst_119 {dimension_numbers = #tpu.dot_dimension_numbers<[1], [0], [0], [1], [0, 0, 1, 1], [], []>} : vector<8x32xf32>, vector<32x32xf32>, vector<8x32xf32> -> vector<8x32xf32>
    %628 = vector.broadcast %5 : vector<1x32xf32> to vector<8x32xf32>
    %629 = arith.addf %627, %628 : vector<8x32xf32>
    %cst_120 = arith.constant 0.000000e+00 : f32
    %630 = vector.broadcast %cst_120 : f32 to vector<8x32xf32>
    %631 = arith.maximumf %629, %630 : vector<8x32xf32>
    %cst_121 = arith.constant dense<0.000000e+00> : vector<8x128xf32>
    %632 = tpu.matmul %631, %6, %cst_121 {dimension_numbers = #tpu.dot_dimension_numbers<[1], [0], [0], [1], [0, 0, 1, 1], [], []>} : vector<8x32xf32>, vector<32x128xf32>, vector<8x128xf32> -> vector<8x128xf32>
    %633 = vector.broadcast %7 : vector<1x128xf32> to vector<8x128xf32>
    %634 = arith.addf %632, %633 : vector<8x128xf32>
    %635 = math.tanh %634 : vector<8x128xf32>
    %636 = vector.extract_strided_slice %635 {offsets = [0, 0], sizes = [8, 32], strides = [1, 1]} : vector<8x128xf32> to vector<8x32xf32>
    %637 = vector.extract_strided_slice %429 {offsets = [0, 0], sizes = [8, 1], strides = [1, 1]} : vector<8x4xf32> to vector<8x1xf32>
    %638 = vector.broadcast %637 : vector<8x1xf32> to vector<8x32xf32>
    %639 = arith.mulf %636, %638 : vector<8x32xf32>
    %640 = vector.extract_strided_slice %635 {offsets = [0, 32], sizes = [8, 32], strides = [1, 1]} : vector<8x128xf32> to vector<8x32xf32>
    %641 = vector.extract_strided_slice %429 {offsets = [0, 1], sizes = [8, 1], strides = [1, 1]} : vector<8x4xf32> to vector<8x1xf32>
    %642 = vector.broadcast %641 : vector<8x1xf32> to vector<8x32xf32>
    %643 = arith.mulf %640, %642 : vector<8x32xf32>
    %644 = arith.addf %639, %643 : vector<8x32xf32>
    %645 = vector.extract_strided_slice %635 {offsets = [0, 64], sizes = [8, 32], strides = [1, 1]} : vector<8x128xf32> to vector<8x32xf32>
    %646 = vector.extract_strided_slice %429 {offsets = [0, 2], sizes = [8, 1], strides = [1, 1]} : vector<8x4xf32> to vector<8x1xf32>
    %647 = vector.broadcast %646 : vector<8x1xf32> to vector<8x32xf32>
    %648 = arith.mulf %645, %647 : vector<8x32xf32>
    %649 = arith.addf %644, %648 : vector<8x32xf32>
    %650 = vector.extract_strided_slice %635 {offsets = [0, 96], sizes = [8, 32], strides = [1, 1]} : vector<8x128xf32> to vector<8x32xf32>
    %651 = vector.extract_strided_slice %429 {offsets = [0, 3], sizes = [8, 1], strides = [1, 1]} : vector<8x4xf32> to vector<8x1xf32>
    %652 = vector.broadcast %651 : vector<8x1xf32> to vector<8x32xf32>
    %653 = arith.mulf %650, %652 : vector<8x32xf32>
    %654 = arith.addf %649, %653 : vector<8x32xf32>
    %655 = vector.broadcast %595 : f32 to vector<8x32xf32>
    %656 = arith.mulf %655, %654 : vector<8x32xf32>
    %cst_122 = arith.constant 0.333333343 : f32
    %657 = vector.broadcast %cst_122 : f32 to vector<8x32xf32>
    %658 = arith.mulf %656, %657 : vector<8x32xf32>
    %659 = arith.addf %587, %658 : vector<8x32xf32>
    %cst_123 = arith.constant dense<0.000000e+00> : vector<8x32xf32>
    %660 = tpu.matmul %659, %2, %cst_123 {dimension_numbers = #tpu.dot_dimension_numbers<[1], [0], [0], [1], [0, 0, 1, 1], [], []>} : vector<8x32xf32>, vector<32x32xf32>, vector<8x32xf32> -> vector<8x32xf32>
    %661 = vector.broadcast %3 : vector<1x32xf32> to vector<8x32xf32>
    %662 = arith.addf %660, %661 : vector<8x32xf32>
    %cst_124 = arith.constant 0.000000e+00 : f32
    %663 = vector.broadcast %cst_124 : f32 to vector<8x32xf32>
    %664 = arith.maximumf %662, %663 : vector<8x32xf32>
    %cst_125 = arith.constant dense<0.000000e+00> : vector<8x32xf32>
    %665 = tpu.matmul %664, %4, %cst_125 {dimension_numbers = #tpu.dot_dimension_numbers<[1], [0], [0], [1], [0, 0, 1, 1], [], []>} : vector<8x32xf32>, vector<32x32xf32>, vector<8x32xf32> -> vector<8x32xf32>
    %666 = vector.broadcast %5 : vector<1x32xf32> to vector<8x32xf32>
    %667 = arith.addf %665, %666 : vector<8x32xf32>
    %cst_126 = arith.constant 0.000000e+00 : f32
    %668 = vector.broadcast %cst_126 : f32 to vector<8x32xf32>
    %669 = arith.maximumf %667, %668 : vector<8x32xf32>
    %cst_127 = arith.constant dense<0.000000e+00> : vector<8x128xf32>
    %670 = tpu.matmul %669, %6, %cst_127 {dimension_numbers = #tpu.dot_dimension_numbers<[1], [0], [0], [1], [0, 0, 1, 1], [], []>} : vector<8x32xf32>, vector<32x128xf32>, vector<8x128xf32> -> vector<8x128xf32>
    %671 = vector.broadcast %7 : vector<1x128xf32> to vector<8x128xf32>
    %672 = arith.addf %670, %671 : vector<8x128xf32>
    %673 = math.tanh %672 : vector<8x128xf32>
    %674 = vector.extract_strided_slice %673 {offsets = [0, 0], sizes = [8, 32], strides = [1, 1]} : vector<8x128xf32> to vector<8x32xf32>
    %675 = vector.extract_strided_slice %609 {offsets = [0, 0], sizes = [8, 1], strides = [1, 1]} : vector<8x4xf32> to vector<8x1xf32>
    %676 = vector.broadcast %675 : vector<8x1xf32> to vector<8x32xf32>
    %677 = arith.mulf %674, %676 : vector<8x32xf32>
    %678 = vector.extract_strided_slice %673 {offsets = [0, 32], sizes = [8, 32], strides = [1, 1]} : vector<8x128xf32> to vector<8x32xf32>
    %679 = vector.extract_strided_slice %609 {offsets = [0, 1], sizes = [8, 1], strides = [1, 1]} : vector<8x4xf32> to vector<8x1xf32>
    %680 = vector.broadcast %679 : vector<8x1xf32> to vector<8x32xf32>
    %681 = arith.mulf %678, %680 : vector<8x32xf32>
    %682 = arith.addf %677, %681 : vector<8x32xf32>
    %683 = vector.extract_strided_slice %673 {offsets = [0, 64], sizes = [8, 32], strides = [1, 1]} : vector<8x128xf32> to vector<8x32xf32>
    %684 = vector.extract_strided_slice %609 {offsets = [0, 2], sizes = [8, 1], strides = [1, 1]} : vector<8x4xf32> to vector<8x1xf32>
    %685 = vector.broadcast %684 : vector<8x1xf32> to vector<8x32xf32>
    %686 = arith.mulf %683, %685 : vector<8x32xf32>
    %687 = arith.addf %682, %686 : vector<8x32xf32>
    %688 = vector.extract_strided_slice %673 {offsets = [0, 96], sizes = [8, 32], strides = [1, 1]} : vector<8x128xf32> to vector<8x32xf32>
    %689 = vector.extract_strided_slice %609 {offsets = [0, 3], sizes = [8, 1], strides = [1, 1]} : vector<8x4xf32> to vector<8x1xf32>
    %690 = vector.broadcast %689 : vector<8x1xf32> to vector<8x32xf32>
    %691 = arith.mulf %688, %690 : vector<8x32xf32>
    %692 = arith.addf %687, %691 : vector<8x32xf32>
    %cst_128 = arith.constant 0.333333343 : f32
    %693 = vector.broadcast %cst_128 : f32 to vector<8x32xf32>
    %694 = arith.mulf %654, %693 : vector<8x32xf32>
    %695 = arith.subf %692, %694 : vector<8x32xf32>
    %696 = vector.broadcast %595 : f32 to vector<8x32xf32>
    %697 = arith.mulf %696, %695 : vector<8x32xf32>
    %698 = arith.addf %587, %697 : vector<8x32xf32>
    %cst_129 = arith.constant dense<0.000000e+00> : vector<8x32xf32>
    %699 = tpu.matmul %698, %2, %cst_129 {dimension_numbers = #tpu.dot_dimension_numbers<[1], [0], [0], [1], [0, 0, 1, 1], [], []>} : vector<8x32xf32>, vector<32x32xf32>, vector<8x32xf32> -> vector<8x32xf32>
    %700 = vector.broadcast %3 : vector<1x32xf32> to vector<8x32xf32>
    %701 = arith.addf %699, %700 : vector<8x32xf32>
    %cst_130 = arith.constant 0.000000e+00 : f32
    %702 = vector.broadcast %cst_130 : f32 to vector<8x32xf32>
    %703 = arith.maximumf %701, %702 : vector<8x32xf32>
    %cst_131 = arith.constant dense<0.000000e+00> : vector<8x32xf32>
    %704 = tpu.matmul %703, %4, %cst_131 {dimension_numbers = #tpu.dot_dimension_numbers<[1], [0], [0], [1], [0, 0, 1, 1], [], []>} : vector<8x32xf32>, vector<32x32xf32>, vector<8x32xf32> -> vector<8x32xf32>
    %705 = vector.broadcast %5 : vector<1x32xf32> to vector<8x32xf32>
    %706 = arith.addf %704, %705 : vector<8x32xf32>
    %cst_132 = arith.constant 0.000000e+00 : f32
    %707 = vector.broadcast %cst_132 : f32 to vector<8x32xf32>
    %708 = arith.maximumf %706, %707 : vector<8x32xf32>
    %cst_133 = arith.constant dense<0.000000e+00> : vector<8x128xf32>
    %709 = tpu.matmul %708, %6, %cst_133 {dimension_numbers = #tpu.dot_dimension_numbers<[1], [0], [0], [1], [0, 0, 1, 1], [], []>} : vector<8x32xf32>, vector<32x128xf32>, vector<8x128xf32> -> vector<8x128xf32>
    %710 = vector.broadcast %7 : vector<1x128xf32> to vector<8x128xf32>
    %711 = arith.addf %709, %710 : vector<8x128xf32>
    %712 = math.tanh %711 : vector<8x128xf32>
    %713 = vector.extract_strided_slice %712 {offsets = [0, 0], sizes = [8, 32], strides = [1, 1]} : vector<8x128xf32> to vector<8x32xf32>
    %714 = vector.extract_strided_slice %615 {offsets = [0, 0], sizes = [8, 1], strides = [1, 1]} : vector<8x4xf32> to vector<8x1xf32>
    %715 = vector.broadcast %714 : vector<8x1xf32> to vector<8x32xf32>
    %716 = arith.mulf %713, %715 : vector<8x32xf32>
    %717 = vector.extract_strided_slice %712 {offsets = [0, 32], sizes = [8, 32], strides = [1, 1]} : vector<8x128xf32> to vector<8x32xf32>
    %718 = vector.extract_strided_slice %615 {offsets = [0, 1], sizes = [8, 1], strides = [1, 1]} : vector<8x4xf32> to vector<8x1xf32>
    %719 = vector.broadcast %718 : vector<8x1xf32> to vector<8x32xf32>
    %720 = arith.mulf %717, %719 : vector<8x32xf32>
    %721 = arith.addf %716, %720 : vector<8x32xf32>
    %722 = vector.extract_strided_slice %712 {offsets = [0, 64], sizes = [8, 32], strides = [1, 1]} : vector<8x128xf32> to vector<8x32xf32>
    %723 = vector.extract_strided_slice %615 {offsets = [0, 2], sizes = [8, 1], strides = [1, 1]} : vector<8x4xf32> to vector<8x1xf32>
    %724 = vector.broadcast %723 : vector<8x1xf32> to vector<8x32xf32>
    %725 = arith.mulf %722, %724 : vector<8x32xf32>
    %726 = arith.addf %721, %725 : vector<8x32xf32>
    %727 = vector.extract_strided_slice %712 {offsets = [0, 96], sizes = [8, 32], strides = [1, 1]} : vector<8x128xf32> to vector<8x32xf32>
    %728 = vector.extract_strided_slice %615 {offsets = [0, 3], sizes = [8, 1], strides = [1, 1]} : vector<8x4xf32> to vector<8x1xf32>
    %729 = vector.broadcast %728 : vector<8x1xf32> to vector<8x32xf32>
    %730 = arith.mulf %727, %729 : vector<8x32xf32>
    %731 = arith.addf %726, %730 : vector<8x32xf32>
    %732 = arith.subf %654, %692 : vector<8x32xf32>
    %733 = arith.addf %732, %731 : vector<8x32xf32>
    %734 = vector.broadcast %595 : f32 to vector<8x32xf32>
    %735 = arith.mulf %734, %733 : vector<8x32xf32>
    %736 = arith.addf %587, %735 : vector<8x32xf32>
    %cst_134 = arith.constant dense<0.000000e+00> : vector<8x32xf32>
    %737 = tpu.matmul %736, %2, %cst_134 {dimension_numbers = #tpu.dot_dimension_numbers<[1], [0], [0], [1], [0, 0, 1, 1], [], []>} : vector<8x32xf32>, vector<32x32xf32>, vector<8x32xf32> -> vector<8x32xf32>
    %738 = vector.broadcast %3 : vector<1x32xf32> to vector<8x32xf32>
    %739 = arith.addf %737, %738 : vector<8x32xf32>
    %cst_135 = arith.constant 0.000000e+00 : f32
    %740 = vector.broadcast %cst_135 : f32 to vector<8x32xf32>
    %741 = arith.maximumf %739, %740 : vector<8x32xf32>
    %cst_136 = arith.constant dense<0.000000e+00> : vector<8x32xf32>
    %742 = tpu.matmul %741, %4, %cst_136 {dimension_numbers = #tpu.dot_dimension_numbers<[1], [0], [0], [1], [0, 0, 1, 1], [], []>} : vector<8x32xf32>, vector<32x32xf32>, vector<8x32xf32> -> vector<8x32xf32>
    %743 = vector.broadcast %5 : vector<1x32xf32> to vector<8x32xf32>
    %744 = arith.addf %742, %743 : vector<8x32xf32>
    %cst_137 = arith.constant 0.000000e+00 : f32
    %745 = vector.broadcast %cst_137 : f32 to vector<8x32xf32>
    %746 = arith.maximumf %744, %745 : vector<8x32xf32>
    %cst_138 = arith.constant dense<0.000000e+00> : vector<8x128xf32>
    %747 = tpu.matmul %746, %6, %cst_138 {dimension_numbers = #tpu.dot_dimension_numbers<[1], [0], [0], [1], [0, 0, 1, 1], [], []>} : vector<8x32xf32>, vector<32x128xf32>, vector<8x128xf32> -> vector<8x128xf32>
    %748 = vector.broadcast %7 : vector<1x128xf32> to vector<8x128xf32>
    %749 = arith.addf %747, %748 : vector<8x128xf32>
    %750 = math.tanh %749 : vector<8x128xf32>
    %751 = vector.extract_strided_slice %750 {offsets = [0, 0], sizes = [8, 32], strides = [1, 1]} : vector<8x128xf32> to vector<8x32xf32>
    %752 = vector.extract_strided_slice %621 {offsets = [0, 0], sizes = [8, 1], strides = [1, 1]} : vector<8x4xf32> to vector<8x1xf32>
    %753 = vector.broadcast %752 : vector<8x1xf32> to vector<8x32xf32>
    %754 = arith.mulf %751, %753 : vector<8x32xf32>
    %755 = vector.extract_strided_slice %750 {offsets = [0, 32], sizes = [8, 32], strides = [1, 1]} : vector<8x128xf32> to vector<8x32xf32>
    %756 = vector.extract_strided_slice %621 {offsets = [0, 1], sizes = [8, 1], strides = [1, 1]} : vector<8x4xf32> to vector<8x1xf32>
    %757 = vector.broadcast %756 : vector<8x1xf32> to vector<8x32xf32>
    %758 = arith.mulf %755, %757 : vector<8x32xf32>
    %759 = arith.addf %754, %758 : vector<8x32xf32>
    %760 = vector.extract_strided_slice %750 {offsets = [0, 64], sizes = [8, 32], strides = [1, 1]} : vector<8x128xf32> to vector<8x32xf32>
    %761 = vector.extract_strided_slice %621 {offsets = [0, 2], sizes = [8, 1], strides = [1, 1]} : vector<8x4xf32> to vector<8x1xf32>
    %762 = vector.broadcast %761 : vector<8x1xf32> to vector<8x32xf32>
    %763 = arith.mulf %760, %762 : vector<8x32xf32>
    %764 = arith.addf %759, %763 : vector<8x32xf32>
    %765 = vector.extract_strided_slice %750 {offsets = [0, 96], sizes = [8, 32], strides = [1, 1]} : vector<8x128xf32> to vector<8x32xf32>
    %766 = vector.extract_strided_slice %621 {offsets = [0, 3], sizes = [8, 1], strides = [1, 1]} : vector<8x4xf32> to vector<8x1xf32>
    %767 = vector.broadcast %766 : vector<8x1xf32> to vector<8x32xf32>
    %768 = arith.mulf %765, %767 : vector<8x32xf32>
    %769 = arith.addf %764, %768 : vector<8x32xf32>
    %770 = arith.addf %692, %731 : vector<8x32xf32>
    %cst_139 = arith.constant 3.000000e+00 : f32
    %771 = vector.broadcast %cst_139 : f32 to vector<8x32xf32>
    %772 = arith.mulf %771, %770 : vector<8x32xf32>
    %773 = arith.addf %654, %772 : vector<8x32xf32>
    %774 = arith.addf %773, %769 : vector<8x32xf32>
    %775 = vector.broadcast %595 : f32 to vector<8x32xf32>
    %776 = arith.mulf %774, %775 : vector<8x32xf32>
    %cst_140 = arith.constant 1.250000e-01 : f32
    %777 = vector.broadcast %cst_140 : f32 to vector<8x32xf32>
    %778 = arith.mulf %776, %777 : vector<8x32xf32>
    %779 = arith.addf %587, %778 : vector<8x32xf32>
    %c1_i32_141 = arith.constant 1 : i32
    %780 = arith.addi %c3_i32, %c1_i32_141 : i32
    %781 = vector.broadcast %780 : i32 to vector<8x1xi32>
    %782 = arith.cmpi eq, %10, %781 : vector<8x1xi32>
    %783 = vector.shape_cast %782 : vector<8x1xi1> to vector<8x1xi1>
    %784 = vector.broadcast %783 : vector<8x1xi1> to vector<8x32xi1>
    %785 = arith.select %784, %779, %593 : vector<8x32xi1>, vector<8x32xf32>
    %c4_i32 = arith.constant 4 : i32
    %786 = arith.index_cast %c4_i32 : i32 to index
    %787 = memref.load %arg1[%786] : memref<7xf32, #tpu.memory_space<smem>>
    %788 = arith.index_cast %c4_i32 : i32 to index
    %c0_142 = arith.constant 0 : index
    %c0_143 = arith.constant 0 : index
    %789 = vector.load %arg4[%788, %c0_142, %c0_143] : memref<7x8x12xf32, #tpu.memory_space<vmem>>, vector<1x8x12xf32>
    %790 = vector.shape_cast %789 : vector<1x8x12xf32> to vector<8x12xf32>
    %791 = vector.extract_strided_slice %790 {offsets = [0, 0], sizes = [8, 4], strides = [1, 1]} : vector<8x12xf32> to vector<8x4xf32>
    %792 = vector.extract_strided_slice %790 {offsets = [0, 4], sizes = [8, 4], strides = [1, 1]} : vector<8x12xf32> to vector<8x4xf32>
    %793 = vector.extract_strided_slice %790 {offsets = [0, 8], sizes = [8, 4], strides = [1, 1]} : vector<8x12xf32> to vector<8x4xf32>
    %cst_144 = arith.constant 0.333333343 : f32
    %794 = arith.mulf %787, %cst_144 : f32
    %cst_145 = arith.constant 0.666666686 : f32
    %795 = arith.mulf %787, %cst_145 : f32
    %796 = vector.broadcast %794 : f32 to vector<8x4xf32>
    %797 = arith.mulf %793, %796 : vector<8x4xf32>
    %798 = arith.addf %792, %797 : vector<8x4xf32>
    %799 = vector.broadcast %794 : f32 to vector<8x4xf32>
    %800 = arith.mulf %798, %799 : vector<8x4xf32>
    %801 = arith.addf %791, %800 : vector<8x4xf32>
    %802 = vector.broadcast %795 : f32 to vector<8x4xf32>
    %803 = arith.mulf %793, %802 : vector<8x4xf32>
    %804 = arith.addf %792, %803 : vector<8x4xf32>
    %805 = vector.broadcast %795 : f32 to vector<8x4xf32>
    %806 = arith.mulf %804, %805 : vector<8x4xf32>
    %807 = arith.addf %791, %806 : vector<8x4xf32>
    %808 = vector.broadcast %787 : f32 to vector<8x4xf32>
    %809 = arith.mulf %793, %808 : vector<8x4xf32>
    %810 = arith.addf %792, %809 : vector<8x4xf32>
    %811 = vector.broadcast %787 : f32 to vector<8x4xf32>
    %812 = arith.mulf %810, %811 : vector<8x4xf32>
    %813 = arith.addf %791, %812 : vector<8x4xf32>
    %cst_146 = arith.constant dense<0.000000e+00> : vector<8x32xf32>
    %814 = tpu.matmul %779, %2, %cst_146 {dimension_numbers = #tpu.dot_dimension_numbers<[1], [0], [0], [1], [0, 0, 1, 1], [], []>} : vector<8x32xf32>, vector<32x32xf32>, vector<8x32xf32> -> vector<8x32xf32>
    %815 = vector.broadcast %3 : vector<1x32xf32> to vector<8x32xf32>
    %816 = arith.addf %814, %815 : vector<8x32xf32>
    %cst_147 = arith.constant 0.000000e+00 : f32
    %817 = vector.broadcast %cst_147 : f32 to vector<8x32xf32>
    %818 = arith.maximumf %816, %817 : vector<8x32xf32>
    %cst_148 = arith.constant dense<0.000000e+00> : vector<8x32xf32>
    %819 = tpu.matmul %818, %4, %cst_148 {dimension_numbers = #tpu.dot_dimension_numbers<[1], [0], [0], [1], [0, 0, 1, 1], [], []>} : vector<8x32xf32>, vector<32x32xf32>, vector<8x32xf32> -> vector<8x32xf32>
    %820 = vector.broadcast %5 : vector<1x32xf32> to vector<8x32xf32>
    %821 = arith.addf %819, %820 : vector<8x32xf32>
    %cst_149 = arith.constant 0.000000e+00 : f32
    %822 = vector.broadcast %cst_149 : f32 to vector<8x32xf32>
    %823 = arith.maximumf %821, %822 : vector<8x32xf32>
    %cst_150 = arith.constant dense<0.000000e+00> : vector<8x128xf32>
    %824 = tpu.matmul %823, %6, %cst_150 {dimension_numbers = #tpu.dot_dimension_numbers<[1], [0], [0], [1], [0, 0, 1, 1], [], []>} : vector<8x32xf32>, vector<32x128xf32>, vector<8x128xf32> -> vector<8x128xf32>
    %825 = vector.broadcast %7 : vector<1x128xf32> to vector<8x128xf32>
    %826 = arith.addf %824, %825 : vector<8x128xf32>
    %827 = math.tanh %826 : vector<8x128xf32>
    %828 = vector.extract_strided_slice %827 {offsets = [0, 0], sizes = [8, 32], strides = [1, 1]} : vector<8x128xf32> to vector<8x32xf32>
    %829 = vector.extract_strided_slice %621 {offsets = [0, 0], sizes = [8, 1], strides = [1, 1]} : vector<8x4xf32> to vector<8x1xf32>
    %830 = vector.broadcast %829 : vector<8x1xf32> to vector<8x32xf32>
    %831 = arith.mulf %828, %830 : vector<8x32xf32>
    %832 = vector.extract_strided_slice %827 {offsets = [0, 32], sizes = [8, 32], strides = [1, 1]} : vector<8x128xf32> to vector<8x32xf32>
    %833 = vector.extract_strided_slice %621 {offsets = [0, 1], sizes = [8, 1], strides = [1, 1]} : vector<8x4xf32> to vector<8x1xf32>
    %834 = vector.broadcast %833 : vector<8x1xf32> to vector<8x32xf32>
    %835 = arith.mulf %832, %834 : vector<8x32xf32>
    %836 = arith.addf %831, %835 : vector<8x32xf32>
    %837 = vector.extract_strided_slice %827 {offsets = [0, 64], sizes = [8, 32], strides = [1, 1]} : vector<8x128xf32> to vector<8x32xf32>
    %838 = vector.extract_strided_slice %621 {offsets = [0, 2], sizes = [8, 1], strides = [1, 1]} : vector<8x4xf32> to vector<8x1xf32>
    %839 = vector.broadcast %838 : vector<8x1xf32> to vector<8x32xf32>
    %840 = arith.mulf %837, %839 : vector<8x32xf32>
    %841 = arith.addf %836, %840 : vector<8x32xf32>
    %842 = vector.extract_strided_slice %827 {offsets = [0, 96], sizes = [8, 32], strides = [1, 1]} : vector<8x128xf32> to vector<8x32xf32>
    %843 = vector.extract_strided_slice %621 {offsets = [0, 3], sizes = [8, 1], strides = [1, 1]} : vector<8x4xf32> to vector<8x1xf32>
    %844 = vector.broadcast %843 : vector<8x1xf32> to vector<8x32xf32>
    %845 = arith.mulf %842, %844 : vector<8x32xf32>
    %846 = arith.addf %841, %845 : vector<8x32xf32>
    %847 = vector.broadcast %787 : f32 to vector<8x32xf32>
    %848 = arith.mulf %847, %846 : vector<8x32xf32>
    %cst_151 = arith.constant 0.333333343 : f32
    %849 = vector.broadcast %cst_151 : f32 to vector<8x32xf32>
    %850 = arith.mulf %848, %849 : vector<8x32xf32>
    %851 = arith.addf %779, %850 : vector<8x32xf32>
    %cst_152 = arith.constant dense<0.000000e+00> : vector<8x32xf32>
    %852 = tpu.matmul %851, %2, %cst_152 {dimension_numbers = #tpu.dot_dimension_numbers<[1], [0], [0], [1], [0, 0, 1, 1], [], []>} : vector<8x32xf32>, vector<32x32xf32>, vector<8x32xf32> -> vector<8x32xf32>
    %853 = vector.broadcast %3 : vector<1x32xf32> to vector<8x32xf32>
    %854 = arith.addf %852, %853 : vector<8x32xf32>
    %cst_153 = arith.constant 0.000000e+00 : f32
    %855 = vector.broadcast %cst_153 : f32 to vector<8x32xf32>
    %856 = arith.maximumf %854, %855 : vector<8x32xf32>
    %cst_154 = arith.constant dense<0.000000e+00> : vector<8x32xf32>
    %857 = tpu.matmul %856, %4, %cst_154 {dimension_numbers = #tpu.dot_dimension_numbers<[1], [0], [0], [1], [0, 0, 1, 1], [], []>} : vector<8x32xf32>, vector<32x32xf32>, vector<8x32xf32> -> vector<8x32xf32>
    %858 = vector.broadcast %5 : vector<1x32xf32> to vector<8x32xf32>
    %859 = arith.addf %857, %858 : vector<8x32xf32>
    %cst_155 = arith.constant 0.000000e+00 : f32
    %860 = vector.broadcast %cst_155 : f32 to vector<8x32xf32>
    %861 = arith.maximumf %859, %860 : vector<8x32xf32>
    %cst_156 = arith.constant dense<0.000000e+00> : vector<8x128xf32>
    %862 = tpu.matmul %861, %6, %cst_156 {dimension_numbers = #tpu.dot_dimension_numbers<[1], [0], [0], [1], [0, 0, 1, 1], [], []>} : vector<8x32xf32>, vector<32x128xf32>, vector<8x128xf32> -> vector<8x128xf32>
    %863 = vector.broadcast %7 : vector<1x128xf32> to vector<8x128xf32>
    %864 = arith.addf %862, %863 : vector<8x128xf32>
    %865 = math.tanh %864 : vector<8x128xf32>
    %866 = vector.extract_strided_slice %865 {offsets = [0, 0], sizes = [8, 32], strides = [1, 1]} : vector<8x128xf32> to vector<8x32xf32>
    %867 = vector.extract_strided_slice %801 {offsets = [0, 0], sizes = [8, 1], strides = [1, 1]} : vector<8x4xf32> to vector<8x1xf32>
    %868 = vector.broadcast %867 : vector<8x1xf32> to vector<8x32xf32>
    %869 = arith.mulf %866, %868 : vector<8x32xf32>
    %870 = vector.extract_strided_slice %865 {offsets = [0, 32], sizes = [8, 32], strides = [1, 1]} : vector<8x128xf32> to vector<8x32xf32>
    %871 = vector.extract_strided_slice %801 {offsets = [0, 1], sizes = [8, 1], strides = [1, 1]} : vector<8x4xf32> to vector<8x1xf32>
    %872 = vector.broadcast %871 : vector<8x1xf32> to vector<8x32xf32>
    %873 = arith.mulf %870, %872 : vector<8x32xf32>
    %874 = arith.addf %869, %873 : vector<8x32xf32>
    %875 = vector.extract_strided_slice %865 {offsets = [0, 64], sizes = [8, 32], strides = [1, 1]} : vector<8x128xf32> to vector<8x32xf32>
    %876 = vector.extract_strided_slice %801 {offsets = [0, 2], sizes = [8, 1], strides = [1, 1]} : vector<8x4xf32> to vector<8x1xf32>
    %877 = vector.broadcast %876 : vector<8x1xf32> to vector<8x32xf32>
    %878 = arith.mulf %875, %877 : vector<8x32xf32>
    %879 = arith.addf %874, %878 : vector<8x32xf32>
    %880 = vector.extract_strided_slice %865 {offsets = [0, 96], sizes = [8, 32], strides = [1, 1]} : vector<8x128xf32> to vector<8x32xf32>
    %881 = vector.extract_strided_slice %801 {offsets = [0, 3], sizes = [8, 1], strides = [1, 1]} : vector<8x4xf32> to vector<8x1xf32>
    %882 = vector.broadcast %881 : vector<8x1xf32> to vector<8x32xf32>
    %883 = arith.mulf %880, %882 : vector<8x32xf32>
    %884 = arith.addf %879, %883 : vector<8x32xf32>
    %cst_157 = arith.constant 0.333333343 : f32
    %885 = vector.broadcast %cst_157 : f32 to vector<8x32xf32>
    %886 = arith.mulf %846, %885 : vector<8x32xf32>
    %887 = arith.subf %884, %886 : vector<8x32xf32>
    %888 = vector.broadcast %787 : f32 to vector<8x32xf32>
    %889 = arith.mulf %888, %887 : vector<8x32xf32>
    %890 = arith.addf %779, %889 : vector<8x32xf32>
    %cst_158 = arith.constant dense<0.000000e+00> : vector<8x32xf32>
    %891 = tpu.matmul %890, %2, %cst_158 {dimension_numbers = #tpu.dot_dimension_numbers<[1], [0], [0], [1], [0, 0, 1, 1], [], []>} : vector<8x32xf32>, vector<32x32xf32>, vector<8x32xf32> -> vector<8x32xf32>
    %892 = vector.broadcast %3 : vector<1x32xf32> to vector<8x32xf32>
    %893 = arith.addf %891, %892 : vector<8x32xf32>
    %cst_159 = arith.constant 0.000000e+00 : f32
    %894 = vector.broadcast %cst_159 : f32 to vector<8x32xf32>
    %895 = arith.maximumf %893, %894 : vector<8x32xf32>
    %cst_160 = arith.constant dense<0.000000e+00> : vector<8x32xf32>
    %896 = tpu.matmul %895, %4, %cst_160 {dimension_numbers = #tpu.dot_dimension_numbers<[1], [0], [0], [1], [0, 0, 1, 1], [], []>} : vector<8x32xf32>, vector<32x32xf32>, vector<8x32xf32> -> vector<8x32xf32>
    %897 = vector.broadcast %5 : vector<1x32xf32> to vector<8x32xf32>
    %898 = arith.addf %896, %897 : vector<8x32xf32>
    %cst_161 = arith.constant 0.000000e+00 : f32
    %899 = vector.broadcast %cst_161 : f32 to vector<8x32xf32>
    %900 = arith.maximumf %898, %899 : vector<8x32xf32>
    %cst_162 = arith.constant dense<0.000000e+00> : vector<8x128xf32>
    %901 = tpu.matmul %900, %6, %cst_162 {dimension_numbers = #tpu.dot_dimension_numbers<[1], [0], [0], [1], [0, 0, 1, 1], [], []>} : vector<8x32xf32>, vector<32x128xf32>, vector<8x128xf32> -> vector<8x128xf32>
    %902 = vector.broadcast %7 : vector<1x128xf32> to vector<8x128xf32>
    %903 = arith.addf %901, %902 : vector<8x128xf32>
    %904 = math.tanh %903 : vector<8x128xf32>
    %905 = vector.extract_strided_slice %904 {offsets = [0, 0], sizes = [8, 32], strides = [1, 1]} : vector<8x128xf32> to vector<8x32xf32>
    %906 = vector.extract_strided_slice %807 {offsets = [0, 0], sizes = [8, 1], strides = [1, 1]} : vector<8x4xf32> to vector<8x1xf32>
    %907 = vector.broadcast %906 : vector<8x1xf32> to vector<8x32xf32>
    %908 = arith.mulf %905, %907 : vector<8x32xf32>
    %909 = vector.extract_strided_slice %904 {offsets = [0, 32], sizes = [8, 32], strides = [1, 1]} : vector<8x128xf32> to vector<8x32xf32>
    %910 = vector.extract_strided_slice %807 {offsets = [0, 1], sizes = [8, 1], strides = [1, 1]} : vector<8x4xf32> to vector<8x1xf32>
    %911 = vector.broadcast %910 : vector<8x1xf32> to vector<8x32xf32>
    %912 = arith.mulf %909, %911 : vector<8x32xf32>
    %913 = arith.addf %908, %912 : vector<8x32xf32>
    %914 = vector.extract_strided_slice %904 {offsets = [0, 64], sizes = [8, 32], strides = [1, 1]} : vector<8x128xf32> to vector<8x32xf32>
    %915 = vector.extract_strided_slice %807 {offsets = [0, 2], sizes = [8, 1], strides = [1, 1]} : vector<8x4xf32> to vector<8x1xf32>
    %916 = vector.broadcast %915 : vector<8x1xf32> to vector<8x32xf32>
    %917 = arith.mulf %914, %916 : vector<8x32xf32>
    %918 = arith.addf %913, %917 : vector<8x32xf32>
    %919 = vector.extract_strided_slice %904 {offsets = [0, 96], sizes = [8, 32], strides = [1, 1]} : vector<8x128xf32> to vector<8x32xf32>
    %920 = vector.extract_strided_slice %807 {offsets = [0, 3], sizes = [8, 1], strides = [1, 1]} : vector<8x4xf32> to vector<8x1xf32>
    %921 = vector.broadcast %920 : vector<8x1xf32> to vector<8x32xf32>
    %922 = arith.mulf %919, %921 : vector<8x32xf32>
    %923 = arith.addf %918, %922 : vector<8x32xf32>
    %924 = arith.subf %846, %884 : vector<8x32xf32>
    %925 = arith.addf %924, %923 : vector<8x32xf32>
    %926 = vector.broadcast %787 : f32 to vector<8x32xf32>
    %927 = arith.mulf %926, %925 : vector<8x32xf32>
    %928 = arith.addf %779, %927 : vector<8x32xf32>
    %cst_163 = arith.constant dense<0.000000e+00> : vector<8x32xf32>
    %929 = tpu.matmul %928, %2, %cst_163 {dimension_numbers = #tpu.dot_dimension_numbers<[1], [0], [0], [1], [0, 0, 1, 1], [], []>} : vector<8x32xf32>, vector<32x32xf32>, vector<8x32xf32> -> vector<8x32xf32>
    %930 = vector.broadcast %3 : vector<1x32xf32> to vector<8x32xf32>
    %931 = arith.addf %929, %930 : vector<8x32xf32>
    %cst_164 = arith.constant 0.000000e+00 : f32
    %932 = vector.broadcast %cst_164 : f32 to vector<8x32xf32>
    %933 = arith.maximumf %931, %932 : vector<8x32xf32>
    %cst_165 = arith.constant dense<0.000000e+00> : vector<8x32xf32>
    %934 = tpu.matmul %933, %4, %cst_165 {dimension_numbers = #tpu.dot_dimension_numbers<[1], [0], [0], [1], [0, 0, 1, 1], [], []>} : vector<8x32xf32>, vector<32x32xf32>, vector<8x32xf32> -> vector<8x32xf32>
    %935 = vector.broadcast %5 : vector<1x32xf32> to vector<8x32xf32>
    %936 = arith.addf %934, %935 : vector<8x32xf32>
    %cst_166 = arith.constant 0.000000e+00 : f32
    %937 = vector.broadcast %cst_166 : f32 to vector<8x32xf32>
    %938 = arith.maximumf %936, %937 : vector<8x32xf32>
    %cst_167 = arith.constant dense<0.000000e+00> : vector<8x128xf32>
    %939 = tpu.matmul %938, %6, %cst_167 {dimension_numbers = #tpu.dot_dimension_numbers<[1], [0], [0], [1], [0, 0, 1, 1], [], []>} : vector<8x32xf32>, vector<32x128xf32>, vector<8x128xf32> -> vector<8x128xf32>
    %940 = vector.broadcast %7 : vector<1x128xf32> to vector<8x128xf32>
    %941 = arith.addf %939, %940 : vector<8x128xf32>
    %942 = math.tanh %941 : vector<8x128xf32>
    %943 = vector.extract_strided_slice %942 {offsets = [0, 0], sizes = [8, 32], strides = [1, 1]} : vector<8x128xf32> to vector<8x32xf32>
    %944 = vector.extract_strided_slice %813 {offsets = [0, 0], sizes = [8, 1], strides = [1, 1]} : vector<8x4xf32> to vector<8x1xf32>
    %945 = vector.broadcast %944 : vector<8x1xf32> to vector<8x32xf32>
    %946 = arith.mulf %943, %945 : vector<8x32xf32>
    %947 = vector.extract_strided_slice %942 {offsets = [0, 32], sizes = [8, 32], strides = [1, 1]} : vector<8x128xf32> to vector<8x32xf32>
    %948 = vector.extract_strided_slice %813 {offsets = [0, 1], sizes = [8, 1], strides = [1, 1]} : vector<8x4xf32> to vector<8x1xf32>
    %949 = vector.broadcast %948 : vector<8x1xf32> to vector<8x32xf32>
    %950 = arith.mulf %947, %949 : vector<8x32xf32>
    %951 = arith.addf %946, %950 : vector<8x32xf32>
    %952 = vector.extract_strided_slice %942 {offsets = [0, 64], sizes = [8, 32], strides = [1, 1]} : vector<8x128xf32> to vector<8x32xf32>
    %953 = vector.extract_strided_slice %813 {offsets = [0, 2], sizes = [8, 1], strides = [1, 1]} : vector<8x4xf32> to vector<8x1xf32>
    %954 = vector.broadcast %953 : vector<8x1xf32> to vector<8x32xf32>
    %955 = arith.mulf %952, %954 : vector<8x32xf32>
    %956 = arith.addf %951, %955 : vector<8x32xf32>
    %957 = vector.extract_strided_slice %942 {offsets = [0, 96], sizes = [8, 32], strides = [1, 1]} : vector<8x128xf32> to vector<8x32xf32>
    %958 = vector.extract_strided_slice %813 {offsets = [0, 3], sizes = [8, 1], strides = [1, 1]} : vector<8x4xf32> to vector<8x1xf32>
    %959 = vector.broadcast %958 : vector<8x1xf32> to vector<8x32xf32>
    %960 = arith.mulf %957, %959 : vector<8x32xf32>
    %961 = arith.addf %956, %960 : vector<8x32xf32>
    %962 = arith.addf %884, %923 : vector<8x32xf32>
    %cst_168 = arith.constant 3.000000e+00 : f32
    %963 = vector.broadcast %cst_168 : f32 to vector<8x32xf32>
    %964 = arith.mulf %963, %962 : vector<8x32xf32>
    %965 = arith.addf %846, %964 : vector<8x32xf32>
    %966 = arith.addf %965, %961 : vector<8x32xf32>
    %967 = vector.broadcast %787 : f32 to vector<8x32xf32>
    %968 = arith.mulf %966, %967 : vector<8x32xf32>
    %cst_169 = arith.constant 1.250000e-01 : f32
    %969 = vector.broadcast %cst_169 : f32 to vector<8x32xf32>
    %970 = arith.mulf %968, %969 : vector<8x32xf32>
    %971 = arith.addf %779, %970 : vector<8x32xf32>
    %c1_i32_170 = arith.constant 1 : i32
    %972 = arith.addi %c4_i32, %c1_i32_170 : i32
    %973 = vector.broadcast %972 : i32 to vector<8x1xi32>
    %974 = arith.cmpi eq, %10, %973 : vector<8x1xi32>
    %975 = vector.shape_cast %974 : vector<8x1xi1> to vector<8x1xi1>
    %976 = vector.broadcast %975 : vector<8x1xi1> to vector<8x32xi1>
    %977 = arith.select %976, %971, %785 : vector<8x32xi1>, vector<8x32xf32>
    %c5_i32 = arith.constant 5 : i32
    %978 = arith.index_cast %c5_i32 : i32 to index
    %979 = memref.load %arg1[%978] : memref<7xf32, #tpu.memory_space<smem>>
    %980 = arith.index_cast %c5_i32 : i32 to index
    %c0_171 = arith.constant 0 : index
    %c0_172 = arith.constant 0 : index
    %981 = vector.load %arg4[%980, %c0_171, %c0_172] : memref<7x8x12xf32, #tpu.memory_space<vmem>>, vector<1x8x12xf32>
    %982 = vector.shape_cast %981 : vector<1x8x12xf32> to vector<8x12xf32>
    %983 = vector.extract_strided_slice %982 {offsets = [0, 0], sizes = [8, 4], strides = [1, 1]} : vector<8x12xf32> to vector<8x4xf32>
    %984 = vector.extract_strided_slice %982 {offsets = [0, 4], sizes = [8, 4], strides = [1, 1]} : vector<8x12xf32> to vector<8x4xf32>
    %985 = vector.extract_strided_slice %982 {offsets = [0, 8], sizes = [8, 4], strides = [1, 1]} : vector<8x12xf32> to vector<8x4xf32>
    %cst_173 = arith.constant 0.333333343 : f32
    %986 = arith.mulf %979, %cst_173 : f32
    %cst_174 = arith.constant 0.666666686 : f32
    %987 = arith.mulf %979, %cst_174 : f32
    %988 = vector.broadcast %986 : f32 to vector<8x4xf32>
    %989 = arith.mulf %985, %988 : vector<8x4xf32>
    %990 = arith.addf %984, %989 : vector<8x4xf32>
    %991 = vector.broadcast %986 : f32 to vector<8x4xf32>
    %992 = arith.mulf %990, %991 : vector<8x4xf32>
    %993 = arith.addf %983, %992 : vector<8x4xf32>
    %994 = vector.broadcast %987 : f32 to vector<8x4xf32>
    %995 = arith.mulf %985, %994 : vector<8x4xf32>
    %996 = arith.addf %984, %995 : vector<8x4xf32>
    %997 = vector.broadcast %987 : f32 to vector<8x4xf32>
    %998 = arith.mulf %996, %997 : vector<8x4xf32>
    %999 = arith.addf %983, %998 : vector<8x4xf32>
    %1000 = vector.broadcast %979 : f32 to vector<8x4xf32>
    %1001 = arith.mulf %985, %1000 : vector<8x4xf32>
    %1002 = arith.addf %984, %1001 : vector<8x4xf32>
    %1003 = vector.broadcast %979 : f32 to vector<8x4xf32>
    %1004 = arith.mulf %1002, %1003 : vector<8x4xf32>
    %1005 = arith.addf %983, %1004 : vector<8x4xf32>
    %cst_175 = arith.constant dense<0.000000e+00> : vector<8x32xf32>
    %1006 = tpu.matmul %971, %2, %cst_175 {dimension_numbers = #tpu.dot_dimension_numbers<[1], [0], [0], [1], [0, 0, 1, 1], [], []>} : vector<8x32xf32>, vector<32x32xf32>, vector<8x32xf32> -> vector<8x32xf32>
    %1007 = vector.broadcast %3 : vector<1x32xf32> to vector<8x32xf32>
    %1008 = arith.addf %1006, %1007 : vector<8x32xf32>
    %cst_176 = arith.constant 0.000000e+00 : f32
    %1009 = vector.broadcast %cst_176 : f32 to vector<8x32xf32>
    %1010 = arith.maximumf %1008, %1009 : vector<8x32xf32>
    %cst_177 = arith.constant dense<0.000000e+00> : vector<8x32xf32>
    %1011 = tpu.matmul %1010, %4, %cst_177 {dimension_numbers = #tpu.dot_dimension_numbers<[1], [0], [0], [1], [0, 0, 1, 1], [], []>} : vector<8x32xf32>, vector<32x32xf32>, vector<8x32xf32> -> vector<8x32xf32>
    %1012 = vector.broadcast %5 : vector<1x32xf32> to vector<8x32xf32>
    %1013 = arith.addf %1011, %1012 : vector<8x32xf32>
    %cst_178 = arith.constant 0.000000e+00 : f32
    %1014 = vector.broadcast %cst_178 : f32 to vector<8x32xf32>
    %1015 = arith.maximumf %1013, %1014 : vector<8x32xf32>
    %cst_179 = arith.constant dense<0.000000e+00> : vector<8x128xf32>
    %1016 = tpu.matmul %1015, %6, %cst_179 {dimension_numbers = #tpu.dot_dimension_numbers<[1], [0], [0], [1], [0, 0, 1, 1], [], []>} : vector<8x32xf32>, vector<32x128xf32>, vector<8x128xf32> -> vector<8x128xf32>
    %1017 = vector.broadcast %7 : vector<1x128xf32> to vector<8x128xf32>
    %1018 = arith.addf %1016, %1017 : vector<8x128xf32>
    %1019 = math.tanh %1018 : vector<8x128xf32>
    %1020 = vector.extract_strided_slice %1019 {offsets = [0, 0], sizes = [8, 32], strides = [1, 1]} : vector<8x128xf32> to vector<8x32xf32>
    %1021 = vector.extract_strided_slice %813 {offsets = [0, 0], sizes = [8, 1], strides = [1, 1]} : vector<8x4xf32> to vector<8x1xf32>
    %1022 = vector.broadcast %1021 : vector<8x1xf32> to vector<8x32xf32>
    %1023 = arith.mulf %1020, %1022 : vector<8x32xf32>
    %1024 = vector.extract_strided_slice %1019 {offsets = [0, 32], sizes = [8, 32], strides = [1, 1]} : vector<8x128xf32> to vector<8x32xf32>
    %1025 = vector.extract_strided_slice %813 {offsets = [0, 1], sizes = [8, 1], strides = [1, 1]} : vector<8x4xf32> to vector<8x1xf32>
    %1026 = vector.broadcast %1025 : vector<8x1xf32> to vector<8x32xf32>
    %1027 = arith.mulf %1024, %1026 : vector<8x32xf32>
    %1028 = arith.addf %1023, %1027 : vector<8x32xf32>
    %1029 = vector.extract_strided_slice %1019 {offsets = [0, 64], sizes = [8, 32], strides = [1, 1]} : vector<8x128xf32> to vector<8x32xf32>
    %1030 = vector.extract_strided_slice %813 {offsets = [0, 2], sizes = [8, 1], strides = [1, 1]} : vector<8x4xf32> to vector<8x1xf32>
    %1031 = vector.broadcast %1030 : vector<8x1xf32> to vector<8x32xf32>
    %1032 = arith.mulf %1029, %1031 : vector<8x32xf32>
    %1033 = arith.addf %1028, %1032 : vector<8x32xf32>
    %1034 = vector.extract_strided_slice %1019 {offsets = [0, 96], sizes = [8, 32], strides = [1, 1]} : vector<8x128xf32> to vector<8x32xf32>
    %1035 = vector.extract_strided_slice %813 {offsets = [0, 3], sizes = [8, 1], strides = [1, 1]} : vector<8x4xf32> to vector<8x1xf32>
    %1036 = vector.broadcast %1035 : vector<8x1xf32> to vector<8x32xf32>
    %1037 = arith.mulf %1034, %1036 : vector<8x32xf32>
    %1038 = arith.addf %1033, %1037 : vector<8x32xf32>
    %1039 = vector.broadcast %979 : f32 to vector<8x32xf32>
    %1040 = arith.mulf %1039, %1038 : vector<8x32xf32>
    %cst_180 = arith.constant 0.333333343 : f32
    %1041 = vector.broadcast %cst_180 : f32 to vector<8x32xf32>
    %1042 = arith.mulf %1040, %1041 : vector<8x32xf32>
    %1043 = arith.addf %971, %1042 : vector<8x32xf32>
    %cst_181 = arith.constant dense<0.000000e+00> : vector<8x32xf32>
    %1044 = tpu.matmul %1043, %2, %cst_181 {dimension_numbers = #tpu.dot_dimension_numbers<[1], [0], [0], [1], [0, 0, 1, 1], [], []>} : vector<8x32xf32>, vector<32x32xf32>, vector<8x32xf32> -> vector<8x32xf32>
    %1045 = vector.broadcast %3 : vector<1x32xf32> to vector<8x32xf32>
    %1046 = arith.addf %1044, %1045 : vector<8x32xf32>
    %cst_182 = arith.constant 0.000000e+00 : f32
    %1047 = vector.broadcast %cst_182 : f32 to vector<8x32xf32>
    %1048 = arith.maximumf %1046, %1047 : vector<8x32xf32>
    %cst_183 = arith.constant dense<0.000000e+00> : vector<8x32xf32>
    %1049 = tpu.matmul %1048, %4, %cst_183 {dimension_numbers = #tpu.dot_dimension_numbers<[1], [0], [0], [1], [0, 0, 1, 1], [], []>} : vector<8x32xf32>, vector<32x32xf32>, vector<8x32xf32> -> vector<8x32xf32>
    %1050 = vector.broadcast %5 : vector<1x32xf32> to vector<8x32xf32>
    %1051 = arith.addf %1049, %1050 : vector<8x32xf32>
    %cst_184 = arith.constant 0.000000e+00 : f32
    %1052 = vector.broadcast %cst_184 : f32 to vector<8x32xf32>
    %1053 = arith.maximumf %1051, %1052 : vector<8x32xf32>
    %cst_185 = arith.constant dense<0.000000e+00> : vector<8x128xf32>
    %1054 = tpu.matmul %1053, %6, %cst_185 {dimension_numbers = #tpu.dot_dimension_numbers<[1], [0], [0], [1], [0, 0, 1, 1], [], []>} : vector<8x32xf32>, vector<32x128xf32>, vector<8x128xf32> -> vector<8x128xf32>
    %1055 = vector.broadcast %7 : vector<1x128xf32> to vector<8x128xf32>
    %1056 = arith.addf %1054, %1055 : vector<8x128xf32>
    %1057 = math.tanh %1056 : vector<8x128xf32>
    %1058 = vector.extract_strided_slice %1057 {offsets = [0, 0], sizes = [8, 32], strides = [1, 1]} : vector<8x128xf32> to vector<8x32xf32>
    %1059 = vector.extract_strided_slice %993 {offsets = [0, 0], sizes = [8, 1], strides = [1, 1]} : vector<8x4xf32> to vector<8x1xf32>
    %1060 = vector.broadcast %1059 : vector<8x1xf32> to vector<8x32xf32>
    %1061 = arith.mulf %1058, %1060 : vector<8x32xf32>
    %1062 = vector.extract_strided_slice %1057 {offsets = [0, 32], sizes = [8, 32], strides = [1, 1]} : vector<8x128xf32> to vector<8x32xf32>
    %1063 = vector.extract_strided_slice %993 {offsets = [0, 1], sizes = [8, 1], strides = [1, 1]} : vector<8x4xf32> to vector<8x1xf32>
    %1064 = vector.broadcast %1063 : vector<8x1xf32> to vector<8x32xf32>
    %1065 = arith.mulf %1062, %1064 : vector<8x32xf32>
    %1066 = arith.addf %1061, %1065 : vector<8x32xf32>
    %1067 = vector.extract_strided_slice %1057 {offsets = [0, 64], sizes = [8, 32], strides = [1, 1]} : vector<8x128xf32> to vector<8x32xf32>
    %1068 = vector.extract_strided_slice %993 {offsets = [0, 2], sizes = [8, 1], strides = [1, 1]} : vector<8x4xf32> to vector<8x1xf32>
    %1069 = vector.broadcast %1068 : vector<8x1xf32> to vector<8x32xf32>
    %1070 = arith.mulf %1067, %1069 : vector<8x32xf32>
    %1071 = arith.addf %1066, %1070 : vector<8x32xf32>
    %1072 = vector.extract_strided_slice %1057 {offsets = [0, 96], sizes = [8, 32], strides = [1, 1]} : vector<8x128xf32> to vector<8x32xf32>
    %1073 = vector.extract_strided_slice %993 {offsets = [0, 3], sizes = [8, 1], strides = [1, 1]} : vector<8x4xf32> to vector<8x1xf32>
    %1074 = vector.broadcast %1073 : vector<8x1xf32> to vector<8x32xf32>
    %1075 = arith.mulf %1072, %1074 : vector<8x32xf32>
    %1076 = arith.addf %1071, %1075 : vector<8x32xf32>
    %cst_186 = arith.constant 0.333333343 : f32
    %1077 = vector.broadcast %cst_186 : f32 to vector<8x32xf32>
    %1078 = arith.mulf %1038, %1077 : vector<8x32xf32>
    %1079 = arith.subf %1076, %1078 : vector<8x32xf32>
    %1080 = vector.broadcast %979 : f32 to vector<8x32xf32>
    %1081 = arith.mulf %1080, %1079 : vector<8x32xf32>
    %1082 = arith.addf %971, %1081 : vector<8x32xf32>
    %cst_187 = arith.constant dense<0.000000e+00> : vector<8x32xf32>
    %1083 = tpu.matmul %1082, %2, %cst_187 {dimension_numbers = #tpu.dot_dimension_numbers<[1], [0], [0], [1], [0, 0, 1, 1], [], []>} : vector<8x32xf32>, vector<32x32xf32>, vector<8x32xf32> -> vector<8x32xf32>
    %1084 = vector.broadcast %3 : vector<1x32xf32> to vector<8x32xf32>
    %1085 = arith.addf %1083, %1084 : vector<8x32xf32>
    %cst_188 = arith.constant 0.000000e+00 : f32
    %1086 = vector.broadcast %cst_188 : f32 to vector<8x32xf32>
    %1087 = arith.maximumf %1085, %1086 : vector<8x32xf32>
    %cst_189 = arith.constant dense<0.000000e+00> : vector<8x32xf32>
    %1088 = tpu.matmul %1087, %4, %cst_189 {dimension_numbers = #tpu.dot_dimension_numbers<[1], [0], [0], [1], [0, 0, 1, 1], [], []>} : vector<8x32xf32>, vector<32x32xf32>, vector<8x32xf32> -> vector<8x32xf32>
    %1089 = vector.broadcast %5 : vector<1x32xf32> to vector<8x32xf32>
    %1090 = arith.addf %1088, %1089 : vector<8x32xf32>
    %cst_190 = arith.constant 0.000000e+00 : f32
    %1091 = vector.broadcast %cst_190 : f32 to vector<8x32xf32>
    %1092 = arith.maximumf %1090, %1091 : vector<8x32xf32>
    %cst_191 = arith.constant dense<0.000000e+00> : vector<8x128xf32>
    %1093 = tpu.matmul %1092, %6, %cst_191 {dimension_numbers = #tpu.dot_dimension_numbers<[1], [0], [0], [1], [0, 0, 1, 1], [], []>} : vector<8x32xf32>, vector<32x128xf32>, vector<8x128xf32> -> vector<8x128xf32>
    %1094 = vector.broadcast %7 : vector<1x128xf32> to vector<8x128xf32>
    %1095 = arith.addf %1093, %1094 : vector<8x128xf32>
    %1096 = math.tanh %1095 : vector<8x128xf32>
    %1097 = vector.extract_strided_slice %1096 {offsets = [0, 0], sizes = [8, 32], strides = [1, 1]} : vector<8x128xf32> to vector<8x32xf32>
    %1098 = vector.extract_strided_slice %999 {offsets = [0, 0], sizes = [8, 1], strides = [1, 1]} : vector<8x4xf32> to vector<8x1xf32>
    %1099 = vector.broadcast %1098 : vector<8x1xf32> to vector<8x32xf32>
    %1100 = arith.mulf %1097, %1099 : vector<8x32xf32>
    %1101 = vector.extract_strided_slice %1096 {offsets = [0, 32], sizes = [8, 32], strides = [1, 1]} : vector<8x128xf32> to vector<8x32xf32>
    %1102 = vector.extract_strided_slice %999 {offsets = [0, 1], sizes = [8, 1], strides = [1, 1]} : vector<8x4xf32> to vector<8x1xf32>
    %1103 = vector.broadcast %1102 : vector<8x1xf32> to vector<8x32xf32>
    %1104 = arith.mulf %1101, %1103 : vector<8x32xf32>
    %1105 = arith.addf %1100, %1104 : vector<8x32xf32>
    %1106 = vector.extract_strided_slice %1096 {offsets = [0, 64], sizes = [8, 32], strides = [1, 1]} : vector<8x128xf32> to vector<8x32xf32>
    %1107 = vector.extract_strided_slice %999 {offsets = [0, 2], sizes = [8, 1], strides = [1, 1]} : vector<8x4xf32> to vector<8x1xf32>
    %1108 = vector.broadcast %1107 : vector<8x1xf32> to vector<8x32xf32>
    %1109 = arith.mulf %1106, %1108 : vector<8x32xf32>
    %1110 = arith.addf %1105, %1109 : vector<8x32xf32>
    %1111 = vector.extract_strided_slice %1096 {offsets = [0, 96], sizes = [8, 32], strides = [1, 1]} : vector<8x128xf32> to vector<8x32xf32>
    %1112 = vector.extract_strided_slice %999 {offsets = [0, 3], sizes = [8, 1], strides = [1, 1]} : vector<8x4xf32> to vector<8x1xf32>
    %1113 = vector.broadcast %1112 : vector<8x1xf32> to vector<8x32xf32>
    %1114 = arith.mulf %1111, %1113 : vector<8x32xf32>
    %1115 = arith.addf %1110, %1114 : vector<8x32xf32>
    %1116 = arith.subf %1038, %1076 : vector<8x32xf32>
    %1117 = arith.addf %1116, %1115 : vector<8x32xf32>
    %1118 = vector.broadcast %979 : f32 to vector<8x32xf32>
    %1119 = arith.mulf %1118, %1117 : vector<8x32xf32>
    %1120 = arith.addf %971, %1119 : vector<8x32xf32>
    %cst_192 = arith.constant dense<0.000000e+00> : vector<8x32xf32>
    %1121 = tpu.matmul %1120, %2, %cst_192 {dimension_numbers = #tpu.dot_dimension_numbers<[1], [0], [0], [1], [0, 0, 1, 1], [], []>} : vector<8x32xf32>, vector<32x32xf32>, vector<8x32xf32> -> vector<8x32xf32>
    %1122 = vector.broadcast %3 : vector<1x32xf32> to vector<8x32xf32>
    %1123 = arith.addf %1121, %1122 : vector<8x32xf32>
    %cst_193 = arith.constant 0.000000e+00 : f32
    %1124 = vector.broadcast %cst_193 : f32 to vector<8x32xf32>
    %1125 = arith.maximumf %1123, %1124 : vector<8x32xf32>
    %cst_194 = arith.constant dense<0.000000e+00> : vector<8x32xf32>
    %1126 = tpu.matmul %1125, %4, %cst_194 {dimension_numbers = #tpu.dot_dimension_numbers<[1], [0], [0], [1], [0, 0, 1, 1], [], []>} : vector<8x32xf32>, vector<32x32xf32>, vector<8x32xf32> -> vector<8x32xf32>
    %1127 = vector.broadcast %5 : vector<1x32xf32> to vector<8x32xf32>
    %1128 = arith.addf %1126, %1127 : vector<8x32xf32>
    %cst_195 = arith.constant 0.000000e+00 : f32
    %1129 = vector.broadcast %cst_195 : f32 to vector<8x32xf32>
    %1130 = arith.maximumf %1128, %1129 : vector<8x32xf32>
    %cst_196 = arith.constant dense<0.000000e+00> : vector<8x128xf32>
    %1131 = tpu.matmul %1130, %6, %cst_196 {dimension_numbers = #tpu.dot_dimension_numbers<[1], [0], [0], [1], [0, 0, 1, 1], [], []>} : vector<8x32xf32>, vector<32x128xf32>, vector<8x128xf32> -> vector<8x128xf32>
    %1132 = vector.broadcast %7 : vector<1x128xf32> to vector<8x128xf32>
    %1133 = arith.addf %1131, %1132 : vector<8x128xf32>
    %1134 = math.tanh %1133 : vector<8x128xf32>
    %1135 = vector.extract_strided_slice %1134 {offsets = [0, 0], sizes = [8, 32], strides = [1, 1]} : vector<8x128xf32> to vector<8x32xf32>
    %1136 = vector.extract_strided_slice %1005 {offsets = [0, 0], sizes = [8, 1], strides = [1, 1]} : vector<8x4xf32> to vector<8x1xf32>
    %1137 = vector.broadcast %1136 : vector<8x1xf32> to vector<8x32xf32>
    %1138 = arith.mulf %1135, %1137 : vector<8x32xf32>
    %1139 = vector.extract_strided_slice %1134 {offsets = [0, 32], sizes = [8, 32], strides = [1, 1]} : vector<8x128xf32> to vector<8x32xf32>
    %1140 = vector.extract_strided_slice %1005 {offsets = [0, 1], sizes = [8, 1], strides = [1, 1]} : vector<8x4xf32> to vector<8x1xf32>
    %1141 = vector.broadcast %1140 : vector<8x1xf32> to vector<8x32xf32>
    %1142 = arith.mulf %1139, %1141 : vector<8x32xf32>
    %1143 = arith.addf %1138, %1142 : vector<8x32xf32>
    %1144 = vector.extract_strided_slice %1134 {offsets = [0, 64], sizes = [8, 32], strides = [1, 1]} : vector<8x128xf32> to vector<8x32xf32>
    %1145 = vector.extract_strided_slice %1005 {offsets = [0, 2], sizes = [8, 1], strides = [1, 1]} : vector<8x4xf32> to vector<8x1xf32>
    %1146 = vector.broadcast %1145 : vector<8x1xf32> to vector<8x32xf32>
    %1147 = arith.mulf %1144, %1146 : vector<8x32xf32>
    %1148 = arith.addf %1143, %1147 : vector<8x32xf32>
    %1149 = vector.extract_strided_slice %1134 {offsets = [0, 96], sizes = [8, 32], strides = [1, 1]} : vector<8x128xf32> to vector<8x32xf32>
    %1150 = vector.extract_strided_slice %1005 {offsets = [0, 3], sizes = [8, 1], strides = [1, 1]} : vector<8x4xf32> to vector<8x1xf32>
    %1151 = vector.broadcast %1150 : vector<8x1xf32> to vector<8x32xf32>
    %1152 = arith.mulf %1149, %1151 : vector<8x32xf32>
    %1153 = arith.addf %1148, %1152 : vector<8x32xf32>
    %1154 = arith.addf %1076, %1115 : vector<8x32xf32>
    %cst_197 = arith.constant 3.000000e+00 : f32
    %1155 = vector.broadcast %cst_197 : f32 to vector<8x32xf32>
    %1156 = arith.mulf %1155, %1154 : vector<8x32xf32>
    %1157 = arith.addf %1038, %1156 : vector<8x32xf32>
    %1158 = arith.addf %1157, %1153 : vector<8x32xf32>
    %1159 = vector.broadcast %979 : f32 to vector<8x32xf32>
    %1160 = arith.mulf %1158, %1159 : vector<8x32xf32>
    %cst_198 = arith.constant 1.250000e-01 : f32
    %1161 = vector.broadcast %cst_198 : f32 to vector<8x32xf32>
    %1162 = arith.mulf %1160, %1161 : vector<8x32xf32>
    %1163 = arith.addf %971, %1162 : vector<8x32xf32>
    %c1_i32_199 = arith.constant 1 : i32
    %1164 = arith.addi %c5_i32, %c1_i32_199 : i32
    %1165 = vector.broadcast %1164 : i32 to vector<8x1xi32>
    %1166 = arith.cmpi eq, %10, %1165 : vector<8x1xi32>
    %1167 = vector.shape_cast %1166 : vector<8x1xi1> to vector<8x1xi1>
    %1168 = vector.broadcast %1167 : vector<8x1xi1> to vector<8x32xi1>
    %1169 = arith.select %1168, %1163, %977 : vector<8x32xi1>, vector<8x32xf32>
    %c6_i32 = arith.constant 6 : i32
    %1170 = arith.index_cast %c6_i32 : i32 to index
    %1171 = memref.load %arg1[%1170] : memref<7xf32, #tpu.memory_space<smem>>
    %1172 = arith.index_cast %c6_i32 : i32 to index
    %c0_200 = arith.constant 0 : index
    %c0_201 = arith.constant 0 : index
    %1173 = vector.load %arg4[%1172, %c0_200, %c0_201] : memref<7x8x12xf32, #tpu.memory_space<vmem>>, vector<1x8x12xf32>
    %1174 = vector.shape_cast %1173 : vector<1x8x12xf32> to vector<8x12xf32>
    %1175 = vector.extract_strided_slice %1174 {offsets = [0, 0], sizes = [8, 4], strides = [1, 1]} : vector<8x12xf32> to vector<8x4xf32>
    %1176 = vector.extract_strided_slice %1174 {offsets = [0, 4], sizes = [8, 4], strides = [1, 1]} : vector<8x12xf32> to vector<8x4xf32>
    %1177 = vector.extract_strided_slice %1174 {offsets = [0, 8], sizes = [8, 4], strides = [1, 1]} : vector<8x12xf32> to vector<8x4xf32>
    %cst_202 = arith.constant 0.333333343 : f32
    %1178 = arith.mulf %1171, %cst_202 : f32
    %cst_203 = arith.constant 0.666666686 : f32
    %1179 = arith.mulf %1171, %cst_203 : f32
    %1180 = vector.broadcast %1178 : f32 to vector<8x4xf32>
    %1181 = arith.mulf %1177, %1180 : vector<8x4xf32>
    %1182 = arith.addf %1176, %1181 : vector<8x4xf32>
    %1183 = vector.broadcast %1178 : f32 to vector<8x4xf32>
    %1184 = arith.mulf %1182, %1183 : vector<8x4xf32>
    %1185 = arith.addf %1175, %1184 : vector<8x4xf32>
    %1186 = vector.broadcast %1179 : f32 to vector<8x4xf32>
    %1187 = arith.mulf %1177, %1186 : vector<8x4xf32>
    %1188 = arith.addf %1176, %1187 : vector<8x4xf32>
    %1189 = vector.broadcast %1179 : f32 to vector<8x4xf32>
    %1190 = arith.mulf %1188, %1189 : vector<8x4xf32>
    %1191 = arith.addf %1175, %1190 : vector<8x4xf32>
    %1192 = vector.broadcast %1171 : f32 to vector<8x4xf32>
    %1193 = arith.mulf %1177, %1192 : vector<8x4xf32>
    %1194 = arith.addf %1176, %1193 : vector<8x4xf32>
    %1195 = vector.broadcast %1171 : f32 to vector<8x4xf32>
    %1196 = arith.mulf %1194, %1195 : vector<8x4xf32>
    %1197 = arith.addf %1175, %1196 : vector<8x4xf32>
    %cst_204 = arith.constant dense<0.000000e+00> : vector<8x32xf32>
    %1198 = tpu.matmul %1163, %2, %cst_204 {dimension_numbers = #tpu.dot_dimension_numbers<[1], [0], [0], [1], [0, 0, 1, 1], [], []>} : vector<8x32xf32>, vector<32x32xf32>, vector<8x32xf32> -> vector<8x32xf32>
    %1199 = vector.broadcast %3 : vector<1x32xf32> to vector<8x32xf32>
    %1200 = arith.addf %1198, %1199 : vector<8x32xf32>
    %cst_205 = arith.constant 0.000000e+00 : f32
    %1201 = vector.broadcast %cst_205 : f32 to vector<8x32xf32>
    %1202 = arith.maximumf %1200, %1201 : vector<8x32xf32>
    %cst_206 = arith.constant dense<0.000000e+00> : vector<8x32xf32>
    %1203 = tpu.matmul %1202, %4, %cst_206 {dimension_numbers = #tpu.dot_dimension_numbers<[1], [0], [0], [1], [0, 0, 1, 1], [], []>} : vector<8x32xf32>, vector<32x32xf32>, vector<8x32xf32> -> vector<8x32xf32>
    %1204 = vector.broadcast %5 : vector<1x32xf32> to vector<8x32xf32>
    %1205 = arith.addf %1203, %1204 : vector<8x32xf32>
    %cst_207 = arith.constant 0.000000e+00 : f32
    %1206 = vector.broadcast %cst_207 : f32 to vector<8x32xf32>
    %1207 = arith.maximumf %1205, %1206 : vector<8x32xf32>
    %cst_208 = arith.constant dense<0.000000e+00> : vector<8x128xf32>
    %1208 = tpu.matmul %1207, %6, %cst_208 {dimension_numbers = #tpu.dot_dimension_numbers<[1], [0], [0], [1], [0, 0, 1, 1], [], []>} : vector<8x32xf32>, vector<32x128xf32>, vector<8x128xf32> -> vector<8x128xf32>
    %1209 = vector.broadcast %7 : vector<1x128xf32> to vector<8x128xf32>
    %1210 = arith.addf %1208, %1209 : vector<8x128xf32>
    %1211 = math.tanh %1210 : vector<8x128xf32>
    %1212 = vector.extract_strided_slice %1211 {offsets = [0, 0], sizes = [8, 32], strides = [1, 1]} : vector<8x128xf32> to vector<8x32xf32>
    %1213 = vector.extract_strided_slice %1005 {offsets = [0, 0], sizes = [8, 1], strides = [1, 1]} : vector<8x4xf32> to vector<8x1xf32>
    %1214 = vector.broadcast %1213 : vector<8x1xf32> to vector<8x32xf32>
    %1215 = arith.mulf %1212, %1214 : vector<8x32xf32>
    %1216 = vector.extract_strided_slice %1211 {offsets = [0, 32], sizes = [8, 32], strides = [1, 1]} : vector<8x128xf32> to vector<8x32xf32>
    %1217 = vector.extract_strided_slice %1005 {offsets = [0, 1], sizes = [8, 1], strides = [1, 1]} : vector<8x4xf32> to vector<8x1xf32>
    %1218 = vector.broadcast %1217 : vector<8x1xf32> to vector<8x32xf32>
    %1219 = arith.mulf %1216, %1218 : vector<8x32xf32>
    %1220 = arith.addf %1215, %1219 : vector<8x32xf32>
    %1221 = vector.extract_strided_slice %1211 {offsets = [0, 64], sizes = [8, 32], strides = [1, 1]} : vector<8x128xf32> to vector<8x32xf32>
    %1222 = vector.extract_strided_slice %1005 {offsets = [0, 2], sizes = [8, 1], strides = [1, 1]} : vector<8x4xf32> to vector<8x1xf32>
    %1223 = vector.broadcast %1222 : vector<8x1xf32> to vector<8x32xf32>
    %1224 = arith.mulf %1221, %1223 : vector<8x32xf32>
    %1225 = arith.addf %1220, %1224 : vector<8x32xf32>
    %1226 = vector.extract_strided_slice %1211 {offsets = [0, 96], sizes = [8, 32], strides = [1, 1]} : vector<8x128xf32> to vector<8x32xf32>
    %1227 = vector.extract_strided_slice %1005 {offsets = [0, 3], sizes = [8, 1], strides = [1, 1]} : vector<8x4xf32> to vector<8x1xf32>
    %1228 = vector.broadcast %1227 : vector<8x1xf32> to vector<8x32xf32>
    %1229 = arith.mulf %1226, %1228 : vector<8x32xf32>
    %1230 = arith.addf %1225, %1229 : vector<8x32xf32>
    %1231 = vector.broadcast %1171 : f32 to vector<8x32xf32>
    %1232 = arith.mulf %1231, %1230 : vector<8x32xf32>
    %cst_209 = arith.constant 0.333333343 : f32
    %1233 = vector.broadcast %cst_209 : f32 to vector<8x32xf32>
    %1234 = arith.mulf %1232, %1233 : vector<8x32xf32>
    %1235 = arith.addf %1163, %1234 : vector<8x32xf32>
    %cst_210 = arith.constant dense<0.000000e+00> : vector<8x32xf32>
    %1236 = tpu.matmul %1235, %2, %cst_210 {dimension_numbers = #tpu.dot_dimension_numbers<[1], [0], [0], [1], [0, 0, 1, 1], [], []>} : vector<8x32xf32>, vector<32x32xf32>, vector<8x32xf32> -> vector<8x32xf32>
    %1237 = vector.broadcast %3 : vector<1x32xf32> to vector<8x32xf32>
    %1238 = arith.addf %1236, %1237 : vector<8x32xf32>
    %cst_211 = arith.constant 0.000000e+00 : f32
    %1239 = vector.broadcast %cst_211 : f32 to vector<8x32xf32>
    %1240 = arith.maximumf %1238, %1239 : vector<8x32xf32>
    %cst_212 = arith.constant dense<0.000000e+00> : vector<8x32xf32>
    %1241 = tpu.matmul %1240, %4, %cst_212 {dimension_numbers = #tpu.dot_dimension_numbers<[1], [0], [0], [1], [0, 0, 1, 1], [], []>} : vector<8x32xf32>, vector<32x32xf32>, vector<8x32xf32> -> vector<8x32xf32>
    %1242 = vector.broadcast %5 : vector<1x32xf32> to vector<8x32xf32>
    %1243 = arith.addf %1241, %1242 : vector<8x32xf32>
    %cst_213 = arith.constant 0.000000e+00 : f32
    %1244 = vector.broadcast %cst_213 : f32 to vector<8x32xf32>
    %1245 = arith.maximumf %1243, %1244 : vector<8x32xf32>
    %cst_214 = arith.constant dense<0.000000e+00> : vector<8x128xf32>
    %1246 = tpu.matmul %1245, %6, %cst_214 {dimension_numbers = #tpu.dot_dimension_numbers<[1], [0], [0], [1], [0, 0, 1, 1], [], []>} : vector<8x32xf32>, vector<32x128xf32>, vector<8x128xf32> -> vector<8x128xf32>
    %1247 = vector.broadcast %7 : vector<1x128xf32> to vector<8x128xf32>
    %1248 = arith.addf %1246, %1247 : vector<8x128xf32>
    %1249 = math.tanh %1248 : vector<8x128xf32>
    %1250 = vector.extract_strided_slice %1249 {offsets = [0, 0], sizes = [8, 32], strides = [1, 1]} : vector<8x128xf32> to vector<8x32xf32>
    %1251 = vector.extract_strided_slice %1185 {offsets = [0, 0], sizes = [8, 1], strides = [1, 1]} : vector<8x4xf32> to vector<8x1xf32>
    %1252 = vector.broadcast %1251 : vector<8x1xf32> to vector<8x32xf32>
    %1253 = arith.mulf %1250, %1252 : vector<8x32xf32>
    %1254 = vector.extract_strided_slice %1249 {offsets = [0, 32], sizes = [8, 32], strides = [1, 1]} : vector<8x128xf32> to vector<8x32xf32>
    %1255 = vector.extract_strided_slice %1185 {offsets = [0, 1], sizes = [8, 1], strides = [1, 1]} : vector<8x4xf32> to vector<8x1xf32>
    %1256 = vector.broadcast %1255 : vector<8x1xf32> to vector<8x32xf32>
    %1257 = arith.mulf %1254, %1256 : vector<8x32xf32>
    %1258 = arith.addf %1253, %1257 : vector<8x32xf32>
    %1259 = vector.extract_strided_slice %1249 {offsets = [0, 64], sizes = [8, 32], strides = [1, 1]} : vector<8x128xf32> to vector<8x32xf32>
    %1260 = vector.extract_strided_slice %1185 {offsets = [0, 2], sizes = [8, 1], strides = [1, 1]} : vector<8x4xf32> to vector<8x1xf32>
    %1261 = vector.broadcast %1260 : vector<8x1xf32> to vector<8x32xf32>
    %1262 = arith.mulf %1259, %1261 : vector<8x32xf32>
    %1263 = arith.addf %1258, %1262 : vector<8x32xf32>
    %1264 = vector.extract_strided_slice %1249 {offsets = [0, 96], sizes = [8, 32], strides = [1, 1]} : vector<8x128xf32> to vector<8x32xf32>
    %1265 = vector.extract_strided_slice %1185 {offsets = [0, 3], sizes = [8, 1], strides = [1, 1]} : vector<8x4xf32> to vector<8x1xf32>
    %1266 = vector.broadcast %1265 : vector<8x1xf32> to vector<8x32xf32>
    %1267 = arith.mulf %1264, %1266 : vector<8x32xf32>
    %1268 = arith.addf %1263, %1267 : vector<8x32xf32>
    %cst_215 = arith.constant 0.333333343 : f32
    %1269 = vector.broadcast %cst_215 : f32 to vector<8x32xf32>
    %1270 = arith.mulf %1230, %1269 : vector<8x32xf32>
    %1271 = arith.subf %1268, %1270 : vector<8x32xf32>
    %1272 = vector.broadcast %1171 : f32 to vector<8x32xf32>
    %1273 = arith.mulf %1272, %1271 : vector<8x32xf32>
    %1274 = arith.addf %1163, %1273 : vector<8x32xf32>
    %cst_216 = arith.constant dense<0.000000e+00> : vector<8x32xf32>
    %1275 = tpu.matmul %1274, %2, %cst_216 {dimension_numbers = #tpu.dot_dimension_numbers<[1], [0], [0], [1], [0, 0, 1, 1], [], []>} : vector<8x32xf32>, vector<32x32xf32>, vector<8x32xf32> -> vector<8x32xf32>
    %1276 = vector.broadcast %3 : vector<1x32xf32> to vector<8x32xf32>
    %1277 = arith.addf %1275, %1276 : vector<8x32xf32>
    %cst_217 = arith.constant 0.000000e+00 : f32
    %1278 = vector.broadcast %cst_217 : f32 to vector<8x32xf32>
    %1279 = arith.maximumf %1277, %1278 : vector<8x32xf32>
    %cst_218 = arith.constant dense<0.000000e+00> : vector<8x32xf32>
    %1280 = tpu.matmul %1279, %4, %cst_218 {dimension_numbers = #tpu.dot_dimension_numbers<[1], [0], [0], [1], [0, 0, 1, 1], [], []>} : vector<8x32xf32>, vector<32x32xf32>, vector<8x32xf32> -> vector<8x32xf32>
    %1281 = vector.broadcast %5 : vector<1x32xf32> to vector<8x32xf32>
    %1282 = arith.addf %1280, %1281 : vector<8x32xf32>
    %cst_219 = arith.constant 0.000000e+00 : f32
    %1283 = vector.broadcast %cst_219 : f32 to vector<8x32xf32>
    %1284 = arith.maximumf %1282, %1283 : vector<8x32xf32>
    %cst_220 = arith.constant dense<0.000000e+00> : vector<8x128xf32>
    %1285 = tpu.matmul %1284, %6, %cst_220 {dimension_numbers = #tpu.dot_dimension_numbers<[1], [0], [0], [1], [0, 0, 1, 1], [], []>} : vector<8x32xf32>, vector<32x128xf32>, vector<8x128xf32> -> vector<8x128xf32>
    %1286 = vector.broadcast %7 : vector<1x128xf32> to vector<8x128xf32>
    %1287 = arith.addf %1285, %1286 : vector<8x128xf32>
    %1288 = math.tanh %1287 : vector<8x128xf32>
    %1289 = vector.extract_strided_slice %1288 {offsets = [0, 0], sizes = [8, 32], strides = [1, 1]} : vector<8x128xf32> to vector<8x32xf32>
    %1290 = vector.extract_strided_slice %1191 {offsets = [0, 0], sizes = [8, 1], strides = [1, 1]} : vector<8x4xf32> to vector<8x1xf32>
    %1291 = vector.broadcast %1290 : vector<8x1xf32> to vector<8x32xf32>
    %1292 = arith.mulf %1289, %1291 : vector<8x32xf32>
    %1293 = vector.extract_strided_slice %1288 {offsets = [0, 32], sizes = [8, 32], strides = [1, 1]} : vector<8x128xf32> to vector<8x32xf32>
    %1294 = vector.extract_strided_slice %1191 {offsets = [0, 1], sizes = [8, 1], strides = [1, 1]} : vector<8x4xf32> to vector<8x1xf32>
    %1295 = vector.broadcast %1294 : vector<8x1xf32> to vector<8x32xf32>
    %1296 = arith.mulf %1293, %1295 : vector<8x32xf32>
    %1297 = arith.addf %1292, %1296 : vector<8x32xf32>
    %1298 = vector.extract_strided_slice %1288 {offsets = [0, 64], sizes = [8, 32], strides = [1, 1]} : vector<8x128xf32> to vector<8x32xf32>
    %1299 = vector.extract_strided_slice %1191 {offsets = [0, 2], sizes = [8, 1], strides = [1, 1]} : vector<8x4xf32> to vector<8x1xf32>
    %1300 = vector.broadcast %1299 : vector<8x1xf32> to vector<8x32xf32>
    %1301 = arith.mulf %1298, %1300 : vector<8x32xf32>
    %1302 = arith.addf %1297, %1301 : vector<8x32xf32>
    %1303 = vector.extract_strided_slice %1288 {offsets = [0, 96], sizes = [8, 32], strides = [1, 1]} : vector<8x128xf32> to vector<8x32xf32>
    %1304 = vector.extract_strided_slice %1191 {offsets = [0, 3], sizes = [8, 1], strides = [1, 1]} : vector<8x4xf32> to vector<8x1xf32>
    %1305 = vector.broadcast %1304 : vector<8x1xf32> to vector<8x32xf32>
    %1306 = arith.mulf %1303, %1305 : vector<8x32xf32>
    %1307 = arith.addf %1302, %1306 : vector<8x32xf32>
    %1308 = arith.subf %1230, %1268 : vector<8x32xf32>
    %1309 = arith.addf %1308, %1307 : vector<8x32xf32>
    %1310 = vector.broadcast %1171 : f32 to vector<8x32xf32>
    %1311 = arith.mulf %1310, %1309 : vector<8x32xf32>
    %1312 = arith.addf %1163, %1311 : vector<8x32xf32>
    %cst_221 = arith.constant dense<0.000000e+00> : vector<8x32xf32>
    %1313 = tpu.matmul %1312, %2, %cst_221 {dimension_numbers = #tpu.dot_dimension_numbers<[1], [0], [0], [1], [0, 0, 1, 1], [], []>} : vector<8x32xf32>, vector<32x32xf32>, vector<8x32xf32> -> vector<8x32xf32>
    %1314 = vector.broadcast %3 : vector<1x32xf32> to vector<8x32xf32>
    %1315 = arith.addf %1313, %1314 : vector<8x32xf32>
    %cst_222 = arith.constant 0.000000e+00 : f32
    %1316 = vector.broadcast %cst_222 : f32 to vector<8x32xf32>
    %1317 = arith.maximumf %1315, %1316 : vector<8x32xf32>
    %cst_223 = arith.constant dense<0.000000e+00> : vector<8x32xf32>
    %1318 = tpu.matmul %1317, %4, %cst_223 {dimension_numbers = #tpu.dot_dimension_numbers<[1], [0], [0], [1], [0, 0, 1, 1], [], []>} : vector<8x32xf32>, vector<32x32xf32>, vector<8x32xf32> -> vector<8x32xf32>
    %1319 = vector.broadcast %5 : vector<1x32xf32> to vector<8x32xf32>
    %1320 = arith.addf %1318, %1319 : vector<8x32xf32>
    %cst_224 = arith.constant 0.000000e+00 : f32
    %1321 = vector.broadcast %cst_224 : f32 to vector<8x32xf32>
    %1322 = arith.maximumf %1320, %1321 : vector<8x32xf32>
    %cst_225 = arith.constant dense<0.000000e+00> : vector<8x128xf32>
    %1323 = tpu.matmul %1322, %6, %cst_225 {dimension_numbers = #tpu.dot_dimension_numbers<[1], [0], [0], [1], [0, 0, 1, 1], [], []>} : vector<8x32xf32>, vector<32x128xf32>, vector<8x128xf32> -> vector<8x128xf32>
    %1324 = vector.broadcast %7 : vector<1x128xf32> to vector<8x128xf32>
    %1325 = arith.addf %1323, %1324 : vector<8x128xf32>
    %1326 = math.tanh %1325 : vector<8x128xf32>
    %1327 = vector.extract_strided_slice %1326 {offsets = [0, 0], sizes = [8, 32], strides = [1, 1]} : vector<8x128xf32> to vector<8x32xf32>
    %1328 = vector.extract_strided_slice %1197 {offsets = [0, 0], sizes = [8, 1], strides = [1, 1]} : vector<8x4xf32> to vector<8x1xf32>
    %1329 = vector.broadcast %1328 : vector<8x1xf32> to vector<8x32xf32>
    %1330 = arith.mulf %1327, %1329 : vector<8x32xf32>
    %1331 = vector.extract_strided_slice %1326 {offsets = [0, 32], sizes = [8, 32], strides = [1, 1]} : vector<8x128xf32> to vector<8x32xf32>
    %1332 = vector.extract_strided_slice %1197 {offsets = [0, 1], sizes = [8, 1], strides = [1, 1]} : vector<8x4xf32> to vector<8x1xf32>
    %1333 = vector.broadcast %1332 : vector<8x1xf32> to vector<8x32xf32>
    %1334 = arith.mulf %1331, %1333 : vector<8x32xf32>
    %1335 = arith.addf %1330, %1334 : vector<8x32xf32>
    %1336 = vector.extract_strided_slice %1326 {offsets = [0, 64], sizes = [8, 32], strides = [1, 1]} : vector<8x128xf32> to vector<8x32xf32>
    %1337 = vector.extract_strided_slice %1197 {offsets = [0, 2], sizes = [8, 1], strides = [1, 1]} : vector<8x4xf32> to vector<8x1xf32>
    %1338 = vector.broadcast %1337 : vector<8x1xf32> to vector<8x32xf32>
    %1339 = arith.mulf %1336, %1338 : vector<8x32xf32>
    %1340 = arith.addf %1335, %1339 : vector<8x32xf32>
    %1341 = vector.extract_strided_slice %1326 {offsets = [0, 96], sizes = [8, 32], strides = [1, 1]} : vector<8x128xf32> to vector<8x32xf32>
    %1342 = vector.extract_strided_slice %1197 {offsets = [0, 3], sizes = [8, 1], strides = [1, 1]} : vector<8x4xf32> to vector<8x1xf32>
    %1343 = vector.broadcast %1342 : vector<8x1xf32> to vector<8x32xf32>
    %1344 = arith.mulf %1341, %1343 : vector<8x32xf32>
    %1345 = arith.addf %1340, %1344 : vector<8x32xf32>
    %1346 = arith.addf %1268, %1307 : vector<8x32xf32>
    %cst_226 = arith.constant 3.000000e+00 : f32
    %1347 = vector.broadcast %cst_226 : f32 to vector<8x32xf32>
    %1348 = arith.mulf %1347, %1346 : vector<8x32xf32>
    %1349 = arith.addf %1230, %1348 : vector<8x32xf32>
    %1350 = arith.addf %1349, %1345 : vector<8x32xf32>
    %1351 = vector.broadcast %1171 : f32 to vector<8x32xf32>
    %1352 = arith.mulf %1350, %1351 : vector<8x32xf32>
    %cst_227 = arith.constant 1.250000e-01 : f32
    %1353 = vector.broadcast %cst_227 : f32 to vector<8x32xf32>
    %1354 = arith.mulf %1352, %1353 : vector<8x32xf32>
    %1355 = arith.addf %1163, %1354 : vector<8x32xf32>
    %c1_i32_228 = arith.constant 1 : i32
    %1356 = arith.addi %c6_i32, %c1_i32_228 : i32
    %1357 = vector.broadcast %1356 : i32 to vector<8x1xi32>
    %1358 = arith.cmpi eq, %10, %1357 : vector<8x1xi32>
    %1359 = vector.shape_cast %1358 : vector<8x1xi1> to vector<8x1xi1>
    %1360 = vector.broadcast %1359 : vector<8x1xi1> to vector<8x32xi1>
    %1361 = arith.select %1360, %1355, %1169 : vector<8x32xi1>, vector<8x32xf32>
    %c7_i32 = arith.constant 7 : i32
    %cst_229 = arith.constant dense<0.000000e+00> : vector<8x3xf32>
    %1362 = tpu.matmul %1361, %8, %cst_229 {dimension_numbers = #tpu.dot_dimension_numbers<[1], [0], [0], [1], [0, 0, 1, 1], [], []>} : vector<8x32xf32>, vector<32x3xf32>, vector<8x3xf32> -> vector<8x3xf32>
    %1363 = vector.broadcast %9 : vector<1x3xf32> to vector<8x3xf32>
    %1364 = arith.addf %1362, %1363 : vector<8x3xf32>
    %c0_230 = arith.constant 0 : index
    %c0_231 = arith.constant 0 : index
    %1365 = vector.load %arg15[%c0_230, %c0_231] : memref<8x3xf32, #tpu.memory_space<vmem>>, vector<8x3xf32>
    tpu.vector_store %arg15[%c0_230, %c0_231], %1364 {strides = array<i32>} : memref<8x3xf32, #tpu.memory_space<vmem>>, vector<8x3xf32>,
    return
  }
  func.func @transform_0(%arg0: i32) -> i32 {
    %c0_i32 = arith.constant 0 : i32
    %c0_i32_0 = arith.constant 0 : i32
    return %c0_i32 : i32
  }
  func.func @transform_1(%arg0: i32) -> (i32, i32) {
    %c0_i32 = arith.constant 0 : i32
    %c0_i32_0 = arith.constant 0 : i32
    return %arg0, %c0_i32 : i32, i32
  }
  func.func @transform_2(%arg0: i32) -> (i32, i32) {
    %c0_i32 = arith.constant 0 : i32
    %c0_i32_0 = arith.constant 0 : i32
    return %arg0, %c0_i32 : i32, i32
  }
  func.func @transform_3(%arg0: i32) -> (i32, i32, i32) {
    %c0_i32 = arith.constant 0 : i32
    %c0_i32_0 = arith.constant 0 : i32
    %c0_i32_1 = arith.constant 0 : i32
    return %c0_i32, %arg0, %c0_i32_0 : i32, i32, i32
  }
  func.func @transform_4(%arg0: i32) -> (i32, i32) {
    %c0_i32 = arith.constant 0 : i32
    %c0_i32_0 = arith.constant 0 : i32
    %c0_i32_1 = arith.constant 0 : i32
    return %c0_i32, %c0_i32_0 : i32, i32
  }
  func.func @transform_5(%arg0: i32) -> (i32, i32) {
    %c0_i32 = arith.constant 0 : i32
    %c0_i32_0 = arith.constant 0 : i32
    %c0_i32_1 = arith.constant 0 : i32
    return %c0_i32, %c0_i32_0 : i32, i32
  }
  func.func @transform_6(%arg0: i32) -> (i32, i32) {
    %c0_i32 = arith.constant 0 : i32
    %c0_i32_0 = arith.constant 0 : i32
    %c0_i32_1 = arith.constant 0 : i32
    return %c0_i32, %c0_i32_0 : i32, i32
  }
  func.func @transform_7(%arg0: i32) -> (i32, i32) {
    %c0_i32 = arith.constant 0 : i32
    %c0_i32_0 = arith.constant 0 : i32
    %c0_i32_1 = arith.constant 0 : i32
    return %c0_i32, %c0_i32_0 : i32, i32
  }
  func.func @transform_8(%arg0: i32) -> (i32, i32) {
    %c0_i32 = arith.constant 0 : i32
    %c0_i32_0 = arith.constant 0 : i32
    %c0_i32_1 = arith.constant 0 : i32
    return %c0_i32, %c0_i32_0 : i32, i32
  }
  func.func @transform_9(%arg0: i32) -> (i32, i32) {
    %c0_i32 = arith.constant 0 : i32
    %c0_i32_0 = arith.constant 0 : i32
    %c0_i32_1 = arith.constant 0 : i32
    return %c0_i32, %c0_i32_0 : i32, i32
  }
  func.func @transform_10(%arg0: i32) -> (i32, i32) {
    %c0_i32 = arith.constant 0 : i32
    %c0_i32_0 = arith.constant 0 : i32
    %c0_i32_1 = arith.constant 0 : i32
    return %c0_i32, %c0_i32_0 : i32, i32
  }
  func.func @transform_11(%arg0: i32) -> (i32, i32) {
    %c0_i32 = arith.constant 0 : i32
    %c0_i32_0 = arith.constant 0 : i32
    %c0_i32_1 = arith.constant 0 : i32
    return %c0_i32, %c0_i32_0 : i32, i32
  }
  func.func @transform_12(%arg0: i32) -> (i32, i32) {
    %c0_i32 = arith.constant 0 : i32
    %c0_i32_0 = arith.constant 0 : i32
    %c0_i32_1 = arith.constant 0 : i32
    return %c0_i32, %c0_i32_0 : i32, i32
  }
  func.func @transform_13(%arg0: i32) -> (i32, i32) {
    %c0_i32 = arith.constant 0 : i32
    %c0_i32_0 = arith.constant 0 : i32
    %c0_i32_1 = arith.constant 0 : i32
    return %c0_i32, %c0_i32_0 : i32, i32
  }
  func.func @transform_14(%arg0: i32) -> (i32, i32) {
    %c0_i32 = arith.constant 0 : i32
    %c0_i32_0 = arith.constant 0 : i32
    return %arg0, %c0_i32 : i32, i32
  }
}

</mosaic_0001>

<llo_original>
// kernel: tpu_custom_call.1
$region0: #{tpu_custom_call.1}
  #allocation0 [shape = 'u32[]', space=smem, size = 0x4, offset = 0x4, fixed_abs, tag = 'smem constant byte address 0x4 - core index']
  #allocation1 [shape = 'u32[72,128]{1,0:T(1,128)}', space=vmem, size = 0x9000, scoped, tag = 'internal scratch']
  %s0 = inlined_call_operand.vmem [shape: f32[7], index: 0, kind: input, shape index: {}]
  %s1 = inlined_call_operand.vmem [shape: s32[8,1], index: 1, kind: input, shape index: {}]
  %s2 = inlined_call_operand.vmem [shape: f32[8,4], index: 2, kind: input, shape index: {}]
  %s3 = inlined_call_operand.hbm [shape: f32[7,8,12], index: 3, kind: input, shape index: {}]
  %s4 = inlined_call_operand.vmem [shape: f32[4,32], index: 4, kind: input, shape index: {}]
  %s5 = inlined_call_operand.vmem [shape: f32[1,32], index: 5, kind: input, shape index: {}]
  %s6 = inlined_call_operand.vmem [shape: f32[32,32], index: 6, kind: input, shape index: {}]
  %s7 = inlined_call_operand.vmem [shape: f32[1,32], index: 7, kind: input, shape index: {}]
  %s8 = inlined_call_operand.hbm [shape: f32[32,32], index: 8, kind: input, shape index: {}]
  %s9 = inlined_call_operand.vmem [shape: f32[1,32], index: 9, kind: input, shape index: {}]
  %s10 = inlined_call_operand.hbm [shape: f32[32,128], index: 10, kind: input, shape index: {}]
  %s11 = inlined_call_operand.vmem [shape: f32[1,128], index: 11, kind: input, shape index: {}]
  %s12 = inlined_call_operand.vmem [shape: f32[32,3], index: 12, kind: input, shape index: {}]
  %s13 = inlined_call_operand.vmem [shape: f32[1,3], index: 13, kind: input, shape index: {}]
  %s14 = inlined_call_operand.vmem [shape: f32[8,3], index: 14, kind: output, shape index: {}]
  %s15 = sld [smem:[#allocation0]]
  $region82: #{tpu_custom_call.1} parent=0
    _
  %s17 = ssub.s32 1, %s15
  %s18 = scalar_select 0, %s17, %s15
  $region1: #{tpu_custom_call.1} parent=0
    #allocation2 [shape = 'u8[512]{0}', space=smem, size = 0x200, scoped, tag = 'input window, operand 0, single buffered']
    #allocation3 [shape = 's32[1]{0}', space=sflag, size = 0x4, scoped, tag = 'scoped memory for tpu_custom_call.1']
    #allocation4 [shape = 's32[1]{0}', space=sflag, size = 0x4, scoped, tag = 'scoped memory for tpu_custom_call.1']
    #allocation5 [shape = 'u8[28672]{0}', space=vmem, size = 0x7000, scoped, tag = 'input window, operand 3, single buffered']
    #allocation6 [shape = 'u8[16384]{0}', space=vmem, size = 0x4000, scoped, tag = 'input window, operand 8, single buffered']
    #allocation7 [shape = 's32[1]{0}', space=sflag, size = 0x4, scoped, tag = 'scoped memory for tpu_custom_call.1']
    #allocation8 [shape = 'u8[16384]{0}', space=vmem, size = 0x4000, scoped, tag = 'input window, operand 10, single buffered']
    %19 = vsyncpa [#allocation4], 0
    %20 = vsyncpa [#allocation3], 0
    %21 = vsyncpa [#allocation7], 0
    // Predicated region
    $region2: #{tpu_custom_call.1} parent=1 // pred_check
      _
    $region3: #{tpu_custom_call.1} parent=1 // pred_check_branch
      %23 = sbr.rel (0) target = $region5
    $region4: #{tpu_custom_call.1} parent=1 // pred_region
      %25 = vsyncadd [#allocation4], 0
      %s27 = sshll.u32 %s0, 4
      %s28 = int_to_ptr.vmem [resolvable:$true] %s27
      %30 = dma.vmem_to_smem %s28, 16, [#allocation2], [#allocation4]
    $region5: #{tpu_custom_call.1} parent=1 // pred_fallthru
      _
    // Predicated region
    $region6: #{tpu_custom_call.1} parent=1 // pred_check
      _
    $region7: #{tpu_custom_call.1} parent=1 // pred_check_branch
      %32 = sbr.rel (0) target = $region9
    $region8: #{tpu_custom_call.1} parent=1 // pred_region
      _
    $region9: #{tpu_custom_call.1} parent=1 // pred_fallthru
      _
    // Predicated region
    $region10: #{tpu_custom_call.1} parent=1 // pred_check
      _
    $region11: #{tpu_custom_call.1} parent=1 // pred_check_branch
      %34 = sbr.rel (0) target = $region13
    $region12: #{tpu_custom_call.1} parent=1 // pred_region
      _
    $region13: #{tpu_custom_call.1} parent=1 // pred_fallthru
      _
    // Predicated region
    $region14: #{tpu_custom_call.1} parent=1 // pred_check
      _
    $region15: #{tpu_custom_call.1} parent=1 // pred_check_branch
      %36 = sbr.rel (0) target = $region17
    $region16: #{tpu_custom_call.1} parent=1 // pred_region
      %38 = vsyncadd [#allocation3], 0
      %s39 = sshll.u32 %s3, 4
      %s40 = int_to_ptr.hbm [resolvable:$true] %s39
      %s41 = sshll.u32 [#allocation5], 4
      %s42 = int_to_ptr.vmem [resolvable:$true] %s41
      %47 = dma.hbm_to_vmem [thread:$0]  %s40, 896, %s42, [#allocation3], 128, 128, 8
    $region17: #{tpu_custom_call.1} parent=1 // pred_fallthru
      _
    // Predicated region
    $region18: #{tpu_custom_call.1} parent=1 // pred_check
      _
    $region19: #{tpu_custom_call.1} parent=1 // pred_check_branch
      %49 = sbr.rel (0) target = $region21
    $region20: #{tpu_custom_call.1} parent=1 // pred_region
      _
    $region21: #{tpu_custom_call.1} parent=1 // pred_fallthru
      _
    // Predicated region
    $region22: #{tpu_custom_call.1} parent=1 // pred_check
      _
    $region23: #{tpu_custom_call.1} parent=1 // pred_check_branch
      %51 = sbr.rel (0) target = $region25
    $region24: #{tpu_custom_call.1} parent=1 // pred_region
      _
    $region25: #{tpu_custom_call.1} parent=1 // pred_fallthru
      _
    // Predicated region
    $region26: #{tpu_custom_call.1} parent=1 // pred_check
      _
    $region27: #{tpu_custom_call.1} parent=1 // pred_check_branch
      %53 = sbr.rel (0) target = $region29
    $region28: #{tpu_custom_call.1} parent=1 // pred_region
      _
    $region29: #{tpu_custom_call.1} parent=1 // pred_fallthru
      _
    // Predicated region
    $region30: #{tpu_custom_call.1} parent=1 // pred_check
      _
    $region31: #{tpu_custom_call.1} parent=1 // pred_check_branch
      %55 = sbr.rel (0) target = $region33
    $region32: #{tpu_custom_call.1} parent=1 // pred_region
      _
    $region33: #{tpu_custom_call.1} parent=1 // pred_fallthru
      _
    // Predicated region
    $region34: #{tpu_custom_call.1} parent=1 // pred_check
      _
    $region35: #{tpu_custom_call.1} parent=1 // pred_check_branch
      %57 = sbr.rel (0) target = $region37
    $region36: #{tpu_custom_call.1} parent=1 // pred_region
      %59 = vsyncadd [#allocation7], 0
      %s60 = sshll.u32 %s8, 4
      %s61 = int_to_ptr.hbm [resolvable:$true] %s60
      %s62 = sshll.u32 [#allocation6], 4
      %s63 = int_to_ptr.vmem [resolvable:$true] %s62
      %68 = dma.hbm_to_vmem [thread:$0]  %s61, 512, %s63, [#allocation7], 128, 128, 8
    $region37: #{tpu_custom_call.1} parent=1 // pred_fallthru
      _
    // Predicated region
    $region38: #{tpu_custom_call.1} parent=1 // pred_check
      _
    $region39: #{tpu_custom_call.1} parent=1 // pred_check_branch
      %70 = sbr.rel (0) target = $region41
    $region40: #{tpu_custom_call.1} parent=1 // pred_region
      _
    $region41: #{tpu_custom_call.1} parent=1 // pred_fallthru
      _
    // Predicated region
    $region42: #{tpu_custom_call.1} parent=1 // pred_check
      _
    $region43: #{tpu_custom_call.1} parent=1 // pred_check_branch
      %72 = sbr.rel (0) target = $region45
    $region44: #{tpu_custom_call.1} parent=1 // pred_region
      %74 = vsyncadd [#allocation7], 0
      %s75 = sshll.u32 %s10, 4
      %s76 = int_to_ptr.hbm [resolvable:$true] %s75
      %s77 = sshll.u32 [#allocation8], 4
      %s78 = int_to_ptr.vmem [resolvable:$true] %s77
      %83 = dma.hbm_to_vmem [thread:$0]  %s76, 512, %s78, [#allocation7], 128, 128, 8
    $region45: #{tpu_custom_call.1} parent=1 // pred_fallthru
      _
    // Predicated region
    $region46: #{tpu_custom_call.1} parent=1 // pred_check
      _
    $region47: #{tpu_custom_call.1} parent=1 // pred_check_branch
      %85 = sbr.rel (0) target = $region49
    $region48: #{tpu_custom_call.1} parent=1 // pred_region
      _
    $region49: #{tpu_custom_call.1} parent=1 // pred_fallthru
      _
    // Predicated region
    $region50: #{tpu_custom_call.1} parent=1 // pred_check
      _
    $region51: #{tpu_custom_call.1} parent=1 // pred_check_branch
      %87 = sbr.rel (0) target = $region53
    $region52: #{tpu_custom_call.1} parent=1 // pred_region
      _
    $region53: #{tpu_custom_call.1} parent=1 // pred_fallthru
      _
    // Predicated region
    $region54: #{tpu_custom_call.1} parent=1 // pred_check
      _
    $region55: #{tpu_custom_call.1} parent=1 // pred_check_branch
      %89 = sbr.rel (0) target = $region57
    $region56: #{tpu_custom_call.1} parent=1 // pred_region
      _
    $region57: #{tpu_custom_call.1} parent=1 // pred_fallthru
      _
    // Predicated region
    $region58: #{tpu_custom_call.1} parent=1 // pred_check
      _
    $region59: #{tpu_custom_call.1} parent=1 // pred_check_branch
      %91 = sbr.rel (0) target = $region61
    $region60: #{tpu_custom_call.1} parent=1 // pred_region
      %93 = dma.done [#allocation4], 16
    $region61: #{tpu_custom_call.1} parent=1 // pred_fallthru
      _
    // Predicated region
    $region62: #{tpu_custom_call.1} parent=1 // pred_check
      _
    $region63: #{tpu_custom_call.1} parent=1 // pred_check_branch
      %95 = sbr.rel (0) target = $region65
    $region64: #{tpu_custom_call.1} parent=1 // pred_region
      %97 = dma.done [#allocation3], 896
    $region65: #{tpu_custom_call.1} parent=1 // pred_fallthru
      _
    // Predicated region
    $region66: #{tpu_custom_call.1} parent=1 // pred_check
      _
    $region67: #{tpu_custom_call.1} parent=1 // pred_check_branch
      %99 = sbr.rel (0) target = $region69
    $region68: #{tpu_custom_call.1} parent=1 // pred_region
      %101 = dma.done [#allocation7], 512
    $region69: #{tpu_custom_call.1} parent=1 // pred_fallthru
      _
    // Predicated region
    $region70: #{tpu_custom_call.1} parent=1 // pred_check
      _
    $region71: #{tpu_custom_call.1} parent=1 // pred_check_branch
      %103 = sbr.rel (0) target = $region73
    $region72: #{tpu_custom_call.1} parent=1 // pred_region
      %105 = dma.done [#allocation7], 512
    $region73: #{tpu_custom_call.1} parent=1 // pred_fallthru
      _
    %106 = sfence
    %v107 = vld [vmem:[%s4] sm:$0xf]
    %v108 = vld [vmem:[%s5] sm:$0x1]
    %v109 = vld [vmem:[%s6] sm:$0xff]
    %v110 = vld [vmem:[%s6 + $0x8] sm:$0xff]
    %v111 = vld [vmem:[%s6 + $0x10] sm:$0xff]
    %v112 = vld [vmem:[%s6 + $0x18] sm:$0xff]
    %v113 = vld [vmem:[%s7] sm:$0x1]
    %v114 = vld [vmem:[#allocation6] sm:$0xff]
    %v115 = vld [vmem:[#allocation6 + $0x8] sm:$0xff]
    %v116 = vld [vmem:[#allocation6 + $0x10] sm:$0xff]
    %v117 = vld [vmem:[#allocation6 + $0x18] sm:$0xff]
    %v118 = vld [vmem:[%s9] sm:$0x1]
    %v119 = vld [vmem:[#allocation8] sm:$0xff]
    %v120 = vld [vmem:[#allocation8 + $0x8] sm:$0xff]
    %v121 = vld [vmem:[#allocation8 + $0x10] sm:$0xff]
    %v122 = vld [vmem:[#allocation8 + $0x18] sm:$0xff]
    %v123 = vld [vmem:[%s11] sm:$0x1]
    %v124 = vld [vmem:[%s12] sm:$0xff]
    %v125 = vld [vmem:[%s12 + $0x8] sm:$0xff]
    %v126 = vld [vmem:[%s12 + $0x10] sm:$0xff]
    %v127 = vld [vmem:[%s12 + $0x18] sm:$0xff]
    %v128 = vld [vmem:[%s13] sm:$0x1]
    %v129 = vld [vmem:[%s1] sm:$0xff]
    %v130 = vld [vmem:[%s2] sm:$0xff]
    %v132 = vperm.slane %v108, 0
    %vm134 = vcmask 31744
    %v136 = vsel %vm134, %v130, 0
    %vm138 = vcmask 1043456
    %v140 = vsel %vm138, %v107, 0
    %142 = vmatpush.msra.mxu0 0.0
    %143 = vmatpush.msra.mxu0 0.0
    %144 = vmatpush.msra.mxu0 0.0
    %145 = vmatpush.msra.mxu0 0.0
    %146 = vmatpush.msra.mxu0 0.0
    %147 = vmatpush.msra.mxu0 0.0
    %148 = vmatpush.msra.mxu0 0.0
    %149 = vmatpush.msra.mxu0 0.0
    %150 = vmatpush.msra.mxu0 0.0
    %151 = vmatpush.msra.mxu0 0.0
    %152 = vmatpush.msra.mxu0 0.0
    %153 = vmatpush.msra.mxu0 0.0
    %154 = vmatpush.msra.mxu0 0.0
    %155 = vmatpush.msra.mxu0 0.0
    %156 = vmatpush.msra.mxu0 0.0
    %157 = vmatpush.msra.mxu0 %v140
    %158 = vmatmul.f32.gmra.mxu0 %v136
    %v159 = vpop.f32.mrf.mxu0
    %v160 = vadd.f32 %v132, %v159
    %161 = vdwg.mxu0
    %v162 = vld [vmem:[#allocation5] sm:$0xff]
    %s163 = sld [smem:[#allocation2]]
    %s164 = smul.f32 %s163, 0.33333334
    %s165 = smul.f32 %s163, 0.6666667
    %v166 = vstv %s164
    %v167 = vmul.f32 %v162, %v166
    %169 = vrot.lane.b32.xlu0 %v167, 124
    %v170 = vpop.permute.xlu0 %169
    %v172 = vadd.f32 %v162, %v170
    %v173 = vmul.f32 %v172, %v166
    %175 = vrot.lane.b32.xlu0 %v173, 124
    %v176 = vpop.permute.xlu0 %175
    %v178 = vadd.f32 %v162, %v176
    %v179 = vstv %s165
    %v180 = vmul.f32 %v162, %v179
    %182 = vrot.lane.b32.xlu0 %v180, 124
    %v183 = vpop.permute.xlu0 %182
    %v185 = vadd.f32 %v162, %v183
    %v186 = vmul.f32 %v185, %v179
    %188 = vrot.lane.b32.xlu0 %v186, 124
    %v189 = vpop.permute.xlu0 %188
    %v191 = vadd.f32 %v162, %v189
    %v192 = vstv %s163
    %v193 = vmul.f32 %v162, %v192
    %195 = vrot.lane.b32.xlu0 %v193, 124
    %v196 = vpop.permute.xlu0 %195
    %v198 = vadd.f32 %v162, %v196
    %v199 = vmul.f32 %v198, %v192
    %201 = vrot.lane.b32.xlu0 %v199, 124
    %v202 = vpop.permute.xlu0 %201
    %v204 = vadd.f32 %v162, %v202
    %v206 = vperm.slane %v113, 0
    %vm208 = vcmask 261120
    %v210 = vsel %vm208, %v160, 0
    %212 = vmatpush.msra.mxu0 0.0
    %213 = vmatpush.msra.mxu0 0.0
    %214 = vmatpush.msra.mxu0 0.0
    %215 = vmatpush.msra.mxu0 0.0
    %216 = vmatpush.msra.mxu0 0.0
    %217 = vmatpush.msra.mxu0 0.0
    %218 = vmatpush.msra.mxu0 0.0
    %219 = vmatpush.msra.mxu0 0.0
    %220 = vmatpush.msra.mxu0 0.0
    %221 = vmatpush.msra.mxu0 0.0
    %222 = vmatpush.msra.mxu0 0.0
    %223 = vmatpush.msra.mxu0 0.0
    %224 = vmatpush.msra.mxu0 %v112
    %225 = vmatpush.msra.mxu0 %v111
    %226 = vmatpush.msra.mxu0 %v110
    %227 = vmatpush.msra.mxu0 %v109
    %228 = vmatmul.f32.gmra.mxu0 %v210
    %v229 = vpop.f32.mrf.mxu0
    %v230 = vadd.f32 %v206, %v229
    %231 = vdwg.mxu0
    %v232 = vmax.f32 %v230, 0.0
    %v234 = vperm.slane %v118, 0
    %v237 = vsel %vm208, %v232, 0
    %239 = vmatpush.msra.mxu0 0.0
    %240 = vmatpush.msra.mxu0 0.0
    %241 = vmatpush.msra.mxu0 0.0
    %242 = vmatpush.msra.mxu0 0.0
    %243 = vmatpush.msra.mxu0 0.0
    %244 = vmatpush.msra.mxu0 0.0
    %245 = vmatpush.msra.mxu0 0.0
    %246 = vmatpush.msra.mxu0 0.0
    %247 = vmatpush.msra.mxu0 0.0
    %248 = vmatpush.msra.mxu0 0.0
    %249 = vmatpush.msra.mxu0 0.0
    %250 = vmatpush.msra.mxu0 0.0
    %251 = vmatpush.msra.mxu0 %v117
    %252 = vmatpush.msra.mxu0 %v116
    %253 = vmatpush.msra.mxu0 %v115
    %254 = vmatpush.msra.mxu0 %v114
    %255 = vmatmul.f32.gmra.mxu0 %v237
    %v256 = vpop.f32.mrf.mxu0
    %v257 = vadd.f32 %v234, %v256
    %258 = vdwg.mxu0
    %v259 = vmax.f32 %v257, 0.0
    %v261 = vperm.slane %v123, 0
    %v264 = vsel %vm208, %v259, 0
    %266 = vmatpush.msra.mxu0 0.0
    %267 = vmatpush.msra.mxu0 0.0
    %268 = vmatpush.msra.mxu0 0.0
    %269 = vmatpush.msra.mxu0 0.0
    %270 = vmatpush.msra.mxu0 0.0
    %271 = vmatpush.msra.mxu0 0.0
    %272 = vmatpush.msra.mxu0 0.0
    %273 = vmatpush.msra.mxu0 0.0
    %274 = vmatpush.msra.mxu0 0.0
    %275 = vmatpush.msra.mxu0 0.0
    %276 = vmatpush.msra.mxu0 0.0
    %277 = vmatpush.msra.mxu0 0.0
    %278 = vmatpush.msra.mxu0 %v122
    %279 = vmatpush.msra.mxu0 %v121
    %280 = vmatpush.msra.mxu0 %v120
    %281 = vmatpush.msra.mxu0 %v119
    %282 = vmatmul.f32.gmra.mxu0 %v264
    %v283 = vpop.f32.mrf.mxu0
    %v284 = vadd.f32 %v261, %v283
    %285 = vdwg.mxu0
    %v286 = vtanh.pop %v284
    %288 = vset.pattern.permute.xlu0 0
    %289 = vperm.xlu0 %288, %v162
    %v290 = vpop.permute.xlu0 %289
    %v292 = vmul.f32 %v286, %v290
    %293 = vset.pattern.permute.xlu0 1
    %294 = vperm.xlu0 %293, %v162
    %v295 = vpop.permute.xlu0 %294
    %v297 = vmul.f32 %v286, %v295
    %299 = vrot.lane.b32.xlu0 %v297, 96
    %v300 = vpop.permute.xlu0 %299
    %v302 = vadd.f32 %v292, %v300
    %303 = vset.pattern.permute.xlu0 2
    %304 = vperm.xlu0 %303, %v162
    %v305 = vpop.permute.xlu0 %304
    %v307 = vmul.f32 %v286, %v305
    %309 = vrot.lane.b32.xlu0 %v307, 64
    %v310 = vpop.permute.xlu0 %309
    %v312 = vadd.f32 %v302, %v310
    %313 = vset.pattern.permute.xlu0 3
    %314 = vperm.xlu0 %313, %v162
    %v315 = vpop.permute.xlu0 %314
    %v317 = vmul.f32 %v286, %v315
    %319 = vrot.lane.b32.xlu0 %v317, 32
    %v320 = vpop.permute.xlu0 %319
    %v322 = vadd.f32 %v312, %v320
    %v323 = vmul.f32 %v192, %v322
    %v324 = vmul.f32 %v323, 0.33333334
    %v325 = vadd.f32 %v160, %v324
    %v327 = vsel %vm208, %v325, 0
    %329 = vmatpush.msra.mxu0 0.0
    %330 = vmatpush.msra.mxu0 0.0
    %331 = vmatpush.msra.mxu0 0.0
    %332 = vmatpush.msra.mxu0 0.0
    %333 = vmatpush.msra.mxu0 0.0
    %334 = vmatpush.msra.mxu0 0.0
    %335 = vmatpush.msra.mxu0 0.0
    %336 = vmatpush.msra.mxu0 0.0
    %337 = vmatpush.msra.mxu0 0.0
    %338 = vmatpush.msra.mxu0 0.0
    %339 = vmatpush.msra.mxu0 0.0
    %340 = vmatpush.msra.mxu0 0.0
    %341 = vmatpush.msra.mxu0 %v112
    %342 = vmatpush.msra.mxu0 %v111
    %343 = vmatpush.msra.mxu0 %v110
    %344 = vmatpush.msra.mxu0 %v109
    %345 = vmatmul.f32.gmra.mxu0 %v327
    %v346 = vpop.f32.mrf.mxu0
    %v347 = vadd.f32 %v206, %v346
    %348 = vdwg.mxu0
    %v349 = vmax.f32 %v347, 0.0
    %v351 = vsel %vm208, %v349, 0
    %353 = vmatpush.msra.mxu0 0.0
    %354 = vmatpush.msra.mxu0 0.0
    %355 = vmatpush.msra.mxu0 0.0
    %356 = vmatpush.msra.mxu0 0.0
    %357 = vmatpush.msra.mxu0 0.0
    %358 = vmatpush.msra.mxu0 0.0
    %359 = vmatpush.msra.mxu0 0.0
    %360 = vmatpush.msra.mxu0 0.0
    %361 = vmatpush.msra.mxu0 0.0
    %362 = vmatpush.msra.mxu0 0.0
    %363 = vmatpush.msra.mxu0 0.0
    %364 = vmatpush.msra.mxu0 0.0
    %365 = vmatpush.msra.mxu0 %v117
    %366 = vmatpush.msra.mxu0 %v116
    %367 = vmatpush.msra.mxu0 %v115
    %368 = vmatpush.msra.mxu0 %v114
    %369 = vmatmul.f32.gmra.mxu0 %v351
    %v370 = vpop.f32.mrf.mxu0
    %v371 = vadd.f32 %v234, %v370
    %372 = vdwg.mxu0
    %v373 = vmax.f32 %v371, 0.0
    %v375 = vsel %vm208, %v373, 0
    %377 = vmatpush.msra.mxu0 0.0
    %378 = vmatpush.msra.mxu0 0.0
    %379 = vmatpush.msra.mxu0 0.0
    %380 = vmatpush.msra.mxu0 0.0
    %381 = vmatpush.msra.mxu0 0.0
    %382 = vmatpush.msra.mxu0 0.0
    %383 = vmatpush.msra.mxu0 0.0
    %384 = vmatpush.msra.mxu0 0.0
    %385 = vmatpush.msra.mxu0 0.0
    %386 = vmatpush.msra.mxu0 0.0
    %387 = vmatpush.msra.mxu0 0.0
    %388 = vmatpush.msra.mxu0 0.0
    %389 = vmatpush.msra.mxu0 %v122
    %390 = vmatpush.msra.mxu0 %v121
    %391 = vmatpush.msra.mxu0 %v120
    %392 = vmatpush.msra.mxu0 %v119
    %393 = vmatmul.f32.gmra.mxu0 %v375
    %v394 = vpop.f32.mrf.mxu0
    %v395 = vadd.f32 %v261, %v394
    %396 = vdwg.mxu0
    %v397 = vtanh.pop %v395
    %399 = vset.pattern.permute.xlu0 0
    %400 = vperm.xlu0 %399, %v178
    %v401 = vpop.permute.xlu0 %400
    %v403 = vmul.f32 %v397, %v401
    %404 = vset.pattern.permute.xlu0 1
    %405 = vperm.xlu0 %404, %v178
    %v406 = vpop.permute.xlu0 %405
    %v408 = vmul.f32 %v397, %v406
    %410 = vrot.lane.b32.xlu0 %v408, 96
    %v411 = vpop.permute.xlu0 %410
    %v413 = vadd.f32 %v403, %v411
    %414 = vset.pattern.permute.xlu0 2
    %415 = vperm.xlu0 %414, %v178
    %v416 = vpop.permute.xlu0 %415
    %v418 = vmul.f32 %v397, %v416
    %420 = vrot.lane.b32.xlu0 %v418, 64
    %v421 = vpop.permute.xlu0 %420
    %v423 = vadd.f32 %v413, %v421
    %424 = vset.pattern.permute.xlu0 3
    %425 = vperm.xlu0 %424, %v178
    %v426 = vpop.permute.xlu0 %425
    %v428 = vmul.f32 %v397, %v426
    %430 = vrot.lane.b32.xlu0 %v428, 32
    %v431 = vpop.permute.xlu0 %430
    %v433 = vadd.f32 %v423, %v431
    %v434 = vmul.f32 %v322, 0.33333334
    %v435 = vsub.f32 %v433, %v434
    %v436 = vmul.f32 %v192, %v435
    %v437 = vadd.f32 %v160, %v436
    %v439 = vsel %vm208, %v437, 0
    %441 = vmatpush.msra.mxu0 0.0
    %442 = vmatpush.msra.mxu0 0.0
    %443 = vmatpush.msra.mxu0 0.0
    %444 = vmatpush.msra.mxu0 0.0
    %445 = vmatpush.msra.mxu0 0.0
    %446 = vmatpush.msra.mxu0 0.0
    %447 = vmatpush.msra.mxu0 0.0
    %448 = vmatpush.msra.mxu0 0.0
    %449 = vmatpush.msra.mxu0 0.0
    %450 = vmatpush.msra.mxu0 0.0
    %451 = vmatpush.msra.mxu0 0.0
    %452 = vmatpush.msra.mxu0 0.0
    %453 = vmatpush.msra.mxu0 %v112
    %454 = vmatpush.msra.mxu0 %v111
    %455 = vmatpush.msra.mxu0 %v110
    %456 = vmatpush.msra.mxu0 %v109
    %457 = vmatmul.f32.gmra.mxu0 %v439
    %v458 = vpop.f32.mrf.mxu0
    %v459 = vadd.f32 %v206, %v458
    %460 = vdwg.mxu0
    %v461 = vmax.f32 %v459, 0.0
    %v463 = vsel %vm208, %v461, 0
    %465 = vmatpush.msra.mxu0 0.0
    %466 = vmatpush.msra.mxu0 0.0
    %467 = vmatpush.msra.mxu0 0.0
    %468 = vmatpush.msra.mxu0 0.0
    %469 = vmatpush.msra.mxu0 0.0
    %470 = vmatpush.msra.mxu0 0.0
    %471 = vmatpush.msra.mxu0 0.0
    %472 = vmatpush.msra.mxu0 0.0
    %473 = vmatpush.msra.mxu0 0.0
    %474 = vmatpush.msra.mxu0 0.0
    %475 = vmatpush.msra.mxu0 0.0
    %476 = vmatpush.msra.mxu0 0.0
    %477 = vmatpush.msra.mxu0 %v117
    %478 = vmatpush.msra.mxu0 %v116
    %479 = vmatpush.msra.mxu0 %v115
    %480 = vmatpush.msra.mxu0 %v114
    %481 = vmatmul.f32.gmra.mxu0 %v463
    %v482 = vpop.f32.mrf.mxu0
    %v483 = vadd.f32 %v234, %v482
    %484 = vdwg.mxu0
    %v485 = vmax.f32 %v483, 0.0
    %v487 = vsel %vm208, %v485, 0
    %489 = vmatpush.msra.mxu0 0.0
    %490 = vmatpush.msra.mxu0 0.0
    %491 = vmatpush.msra.mxu0 0.0
    %492 = vmatpush.msra.mxu0 0.0
    %493 = vmatpush.msra.mxu0 0.0
    %494 = vmatpush.msra.mxu0 0.0
    %495 = vmatpush.msra.mxu0 0.0
    %496 = vmatpush.msra.mxu0 0.0
    %497 = vmatpush.msra.mxu0 0.0
    %498 = vmatpush.msra.mxu0 0.0
    %499 = vmatpush.msra.mxu0 0.0
    %500 = vmatpush.msra.mxu0 0.0
    %501 = vmatpush.msra.mxu0 %v122
    %502 = vmatpush.msra.mxu0 %v121
    %503 = vmatpush.msra.mxu0 %v120
    %504 = vmatpush.msra.mxu0 %v119
    %505 = vmatmul.f32.gmra.mxu0 %v487
    %v506 = vpop.f32.mrf.mxu0
    %v507 = vadd.f32 %v261, %v506
    %508 = vdwg.mxu0
    %v509 = vtanh.pop %v507
    %511 = vset.pattern.permute.xlu0 0
    %512 = vperm.xlu0 %511, %v191
    %v513 = vpop.permute.xlu0 %512
    %v515 = vmul.f32 %v509, %v513
    %516 = vset.pattern.permute.xlu0 1
    %517 = vperm.xlu0 %516, %v191
    %v518 = vpop.permute.xlu0 %517
    %v520 = vmul.f32 %v509, %v518
    %522 = vrot.lane.b32.xlu0 %v520, 96
    %v523 = vpop.permute.xlu0 %522
    %v525 = vadd.f32 %v515, %v523
    %526 = vset.pattern.permute.xlu0 2
    %527 = vperm.xlu0 %526, %v191
    %v528 = vpop.permute.xlu0 %527
    %v530 = vmul.f32 %v509, %v528
    %532 = vrot.lane.b32.xlu0 %v530, 64
    %v533 = vpop.permute.xlu0 %532
    %v535 = vadd.f32 %v525, %v533
    %536 = vset.pattern.permute.xlu0 3
    %537 = vperm.xlu0 %536, %v191
    %v538 = vpop.permute.xlu0 %537
    %v540 = vmul.f32 %v509, %v538
    %542 = vrot.lane.b32.xlu0 %v540, 32
    %v543 = vpop.permute.xlu0 %542
    %v545 = vadd.f32 %v535, %v543
    %v546 = vsub.f32 %v322, %v433
    %v547 = vadd.f32 %v546, %v545
    %v548 = vmul.f32 %v192, %v547
    %v549 = vadd.f32 %v160, %v548
    %v551 = vsel %vm208, %v549, 0
    %553 = vmatpush.msra.mxu0 0.0
    %554 = vmatpush.msra.mxu0 0.0
    %555 = vmatpush.msra.mxu0 0.0
    %556 = vmatpush.msra.mxu0 0.0
    %557 = vmatpush.msra.mxu0 0.0
    %558 = vmatpush.msra.mxu0 0.0
    %559 = vmatpush.msra.mxu0 0.0
    %560 = vmatpush.msra.mxu0 0.0
    %561 = vmatpush.msra.mxu0 0.0
    %562 = vmatpush.msra.mxu0 0.0
    %563 = vmatpush.msra.mxu0 0.0
    %564 = vmatpush.msra.mxu0 0.0
    %565 = vmatpush.msra.mxu0 %v112
    %566 = vmatpush.msra.mxu0 %v111
    %567 = vmatpush.msra.mxu0 %v110
    %568 = vmatpush.msra.mxu0 %v109
    %569 = vmatmul.f32.gmra.mxu0 %v551
    %v570 = vpop.f32.mrf.mxu0
    %v571 = vadd.f32 %v206, %v570
    %572 = vdwg.mxu0
    %v573 = vmax.f32 %v571, 0.0
    %v575 = vsel %vm208, %v573, 0
    %577 = vmatpush.msra.mxu0 0.0
    %578 = vmatpush.msra.mxu0 0.0
    %579 = vmatpush.msra.mxu0 0.0
    %580 = vmatpush.msra.mxu0 0.0
    %581 = vmatpush.msra.mxu0 0.0
    %582 = vmatpush.msra.mxu0 0.0
    %583 = vmatpush.msra.mxu0 0.0
    %584 = vmatpush.msra.mxu0 0.0
    %585 = vmatpush.msra.mxu0 0.0
    %586 = vmatpush.msra.mxu0 0.0
    %587 = vmatpush.msra.mxu0 0.0
    %588 = vmatpush.msra.mxu0 0.0
    %589 = vmatpush.msra.mxu0 %v117
    %590 = vmatpush.msra.mxu0 %v116
    %591 = vmatpush.msra.mxu0 %v115
    %592 = vmatpush.msra.mxu0 %v114
    %593 = vmatmul.f32.gmra.mxu0 %v575
    %v594 = vpop.f32.mrf.mxu0
    %v595 = vadd.f32 %v234, %v594
    %596 = vdwg.mxu0
    %v597 = vmax.f32 %v595, 0.0
    %v599 = vsel %vm208, %v597, 0
    %601 = vmatpush.msra.mxu0 0.0
    %602 = vmatpush.msra.mxu0 0.0
    %603 = vmatpush.msra.mxu0 0.0
    %604 = vmatpush.msra.mxu0 0.0
    %605 = vmatpush.msra.mxu0 0.0
    %606 = vmatpush.msra.mxu0 0.0
    %607 = vmatpush.msra.mxu0 0.0
    %608 = vmatpush.msra.mxu0 0.0
    %609 = vmatpush.msra.mxu0 0.0
    %610 = vmatpush.msra.mxu0 0.0
    %611 = vmatpush.msra.mxu0 0.0
    %612 = vmatpush.msra.mxu0 0.0
    %613 = vmatpush.msra.mxu0 %v122
    %614 = vmatpush.msra.mxu0 %v121
    %615 = vmatpush.msra.mxu0 %v120
    %616 = vmatpush.msra.mxu0 %v119
    %617 = vmatmul.f32.gmra.mxu0 %v599
    %v618 = vpop.f32.mrf.mxu0
    %v619 = vadd.f32 %v261, %v618
    %620 = vdwg.mxu0
    %v621 = vtanh.pop %v619
    %623 = vset.pattern.permute.xlu0 0
    %624 = vperm.xlu0 %623, %v204
    %v625 = vpop.permute.xlu0 %624
    %v627 = vmul.f32 %v621, %v625
    %628 = vset.pattern.permute.xlu0 1
    %629 = vperm.xlu0 %628, %v204
    %v630 = vpop.permute.xlu0 %629
    %v632 = vmul.f32 %v621, %v630
    %634 = vrot.lane.b32.xlu0 %v632, 96
    %v635 = vpop.permute.xlu0 %634
    %v637 = vadd.f32 %v627, %v635
    %638 = vset.pattern.permute.xlu0 2
    %639 = vperm.xlu0 %638, %v204
    %v640 = vpop.permute.xlu0 %639
    %v642 = vmul.f32 %v621, %v640
    %644 = vrot.lane.b32.xlu0 %v642, 64
    %v645 = vpop.permute.xlu0 %644
    %v647 = vadd.f32 %v637, %v645
    %648 = vset.pattern.permute.xlu0 3
    %649 = vperm.xlu0 %648, %v204
    %v650 = vpop.permute.xlu0 %649
    %v652 = vmul.f32 %v621, %v650
    %654 = vrot.lane.b32.xlu0 %v652, 32
    %v655 = vpop.permute.xlu0 %654
    %v657 = vadd.f32 %v647, %v655
    %v658 = vadd.f32 %v433, %v545
    %v659 = vmul.f32 %v658, 3.0
    %v660 = vadd.f32 %v322, %v659
    %v661 = vadd.f32 %v660, %v657
    %v662 = vmul.f32 %v661, %v192
    %v663 = vmul.f32 %v662, 0.125
    %v664 = vadd.f32 %v160, %v663
    %vm665 = vcmp.eq.s32.totalorder %v129, 1
    %v666 = vsel %vm665, 1, 0
    %667 = vset.pattern.permute.xlu0 0
    %668 = vperm.xlu0 %667, %v666
    %v669 = vpop.permute.xlu0 %668
    %vm670 = vcmp.eq.s32.totalorder %v669, 1
    %v671 = vsel %vm670, %v664, %v160
    %s672 = sld [smem:[#allocation2 + $0x1]]
    %s673 = scalar_lea.vmem [#allocation5], 8
    %v674 = vld [vmem:[%s673] sm:$0xff]
    %s675 = smul.f32 %s672, 0.33333334
    %s676 = smul.f32 %s672, 0.6666667
    %v677 = vstv %s675
    %v678 = vmul.f32 %v674, %v677
    %680 = vrot.lane.b32.xlu0 %v678, 124
    %v681 = vpop.permute.xlu0 %680
    %v683 = vadd.f32 %v674, %v681
    %v684 = vmul.f32 %v683, %v677
    %686 = vrot.lane.b32.xlu0 %v684, 124
    %v687 = vpop.permute.xlu0 %686
    %v689 = vadd.f32 %v674, %v687
    %v690 = vstv %s676
    %v691 = vmul.f32 %v674, %v690
    %693 = vrot.lane.b32.xlu0 %v691, 124
    %v694 = vpop.permute.xlu0 %693
    %v696 = vadd.f32 %v674, %v694
    %v697 = vmul.f32 %v696, %v690
    %699 = vrot.lane.b32.xlu0 %v697, 124
    %v700 = vpop.permute.xlu0 %699
    %v702 = vadd.f32 %v674, %v700
    %v703 = vstv %s672
    %v704 = vmul.f32 %v674, %v703
    %706 = vrot.lane.b32.xlu0 %v704, 124
    %v707 = vpop.permute.xlu0 %706
    %v709 = vadd.f32 %v674, %v707
    %v710 = vmul.f32 %v709, %v703
    %712 = vrot.lane.b32.xlu0 %v710, 124
    %v713 = vpop.permute.xlu0 %712
    %v715 = vadd.f32 %v674, %v713
    %v717 = vsel %vm208, %v664, 0
    %719 = vmatpush.msra.mxu0 0.0
    %720 = vmatpush.msra.mxu0 0.0
    %721 = vmatpush.msra.mxu0 0.0
    %722 = vmatpush.msra.mxu0 0.0
    %723 = vmatpush.msra.mxu0 0.0
    %724 = vmatpush.msra.mxu0 0.0
    %725 = vmatpush.msra.mxu0 0.0
    %726 = vmatpush.msra.mxu0 0.0
    %727 = vmatpush.msra.mxu0 0.0
    %728 = vmatpush.msra.mxu0 0.0
    %729 = vmatpush.msra.mxu0 0.0
    %730 = vmatpush.msra.mxu0 0.0
    %731 = vmatpush.msra.mxu0 %v112
    %732 = vmatpush.msra.mxu0 %v111
    %733 = vmatpush.msra.mxu0 %v110
    %734 = vmatpush.msra.mxu0 %v109
    %735 = vmatmul.f32.gmra.mxu0 %v717
    %v736 = vpop.f32.mrf.mxu0
    %v737 = vadd.f32 %v206, %v736
    %738 = vdwg.mxu0
    %v739 = vmax.f32 %v737, 0.0
    %v741 = vsel %vm208, %v739, 0
    %743 = vmatpush.msra.mxu0 0.0
    %744 = vmatpush.msra.mxu0 0.0
    %745 = vmatpush.msra.mxu0 0.0
    %746 = vmatpush.msra.mxu0 0.0
    %747 = vmatpush.msra.mxu0 0.0
    %748 = vmatpush.msra.mxu0 0.0
    %749 = vmatpush.msra.mxu0 0.0
    %750 = vmatpush.msra.mxu0 0.0
    %751 = vmatpush.msra.mxu0 0.0
    %752 = vmatpush.msra.mxu0 0.0
    %753 = vmatpush.msra.mxu0 0.0
    %754 = vmatpush.msra.mxu0 0.0
    %755 = vmatpush.msra.mxu0 %v117
    %756 = vmatpush.msra.mxu0 %v116
    %757 = vmatpush.msra.mxu0 %v115
    %758 = vmatpush.msra.mxu0 %v114
    %759 = vmatmul.f32.gmra.mxu0 %v741
    %v760 = vpop.f32.mrf.mxu0
    %v761 = vadd.f32 %v234, %v760
    %762 = vdwg.mxu0
    %v763 = vmax.f32 %v761, 0.0
    %v765 = vsel %vm208, %v763, 0
    %767 = vmatpush.msra.mxu0 0.0
    %768 = vmatpush.msra.mxu0 0.0
    %769 = vmatpush.msra.mxu0 0.0
    %770 = vmatpush.msra.mxu0 0.0
    %771 = vmatpush.msra.mxu0 0.0
    %772 = vmatpush.msra.mxu0 0.0
    %773 = vmatpush.msra.mxu0 0.0
    %774 = vmatpush.msra.mxu0 0.0
    %775 = vmatpush.msra.mxu0 0.0
    %776 = vmatpush.msra.mxu0 0.0
    %777 = vmatpush.msra.mxu0 0.0
    %778 = vmatpush.msra.mxu0 0.0
    %779 = vmatpush.msra.mxu0 %v122
    %780 = vmatpush.msra.mxu0 %v121
    %781 = vmatpush.msra.mxu0 %v120
    %782 = vmatpush.msra.mxu0 %v119
    %783 = vmatmul.f32.gmra.mxu0 %v765
    %v784 = vpop.f32.mrf.mxu0
    %v785 = vadd.f32 %v261, %v784
    %786 = vdwg.mxu0
    %v787 = vtanh.pop %v785
    %v788 = vmul.f32 %v787, %v625
    %v789 = vmul.f32 %v787, %v630
    %791 = vrot.lane.b32.xlu0 %v789, 96
    %v792 = vpop.permute.xlu0 %791
    %v794 = vadd.f32 %v788, %v792
    %v795 = vmul.f32 %v787, %v640
    %797 = vrot.lane.b32.xlu0 %v795, 64
    %v798 = vpop.permute.xlu0 %797
    %v800 = vadd.f32 %v794, %v798
    %v801 = vmul.f32 %v787, %v650
    %803 = vrot.lane.b32.xlu0 %v801, 32
    %v804 = vpop.permute.xlu0 %803
    %v806 = vadd.f32 %v800, %v804
    %v807 = vmul.f32 %v703, %v806
    %v808 = vmul.f32 %v807, 0.33333334
    %v809 = vadd.f32 %v664, %v808
    %v811 = vsel %vm208, %v809, 0
    %813 = vmatpush.msra.mxu0 0.0
    %814 = vmatpush.msra.mxu0 0.0
    %815 = vmatpush.msra.mxu0 0.0
    %816 = vmatpush.msra.mxu0 0.0
    %817 = vmatpush.msra.mxu0 0.0
    %818 = vmatpush.msra.mxu0 0.0
    %819 = vmatpush.msra.mxu0 0.0
    %820 = vmatpush.msra.mxu0 0.0
    %821 = vmatpush.msra.mxu0 0.0
    %822 = vmatpush.msra.mxu0 0.0
    %823 = vmatpush.msra.mxu0 0.0
    %824 = vmatpush.msra.mxu0 0.0
    %825 = vmatpush.msra.mxu0 %v112
    %826 = vmatpush.msra.mxu0 %v111
    %827 = vmatpush.msra.mxu0 %v110
    %828 = vmatpush.msra.mxu0 %v109
    %829 = vmatmul.f32.gmra.mxu0 %v811
    %v830 = vpop.f32.mrf.mxu0
    %v831 = vadd.f32 %v206, %v830
    %832 = vdwg.mxu0
    %v833 = vmax.f32 %v831, 0.0
    %v835 = vsel %vm208, %v833, 0
    %837 = vmatpush.msra.mxu0 0.0
    %838 = vmatpush.msra.mxu0 0.0
    %839 = vmatpush.msra.mxu0 0.0
    %840 = vmatpush.msra.mxu0 0.0
    %841 = vmatpush.msra.mxu0 0.0
    %842 = vmatpush.msra.mxu0 0.0
    %843 = vmatpush.msra.mxu0 0.0
    %844 = vmatpush.msra.mxu0 0.0
    %845 = vmatpush.msra.mxu0 0.0
    %846 = vmatpush.msra.mxu0 0.0
    %847 = vmatpush.msra.mxu0 0.0
    %848 = vmatpush.msra.mxu0 0.0
    %849 = vmatpush.msra.mxu0 %v117
    %850 = vmatpush.msra.mxu0 %v116
    %851 = vmatpush.msra.mxu0 %v115
    %852 = vmatpush.msra.mxu0 %v114
    %853 = vmatmul.f32.gmra.mxu0 %v835
    %v854 = vpop.f32.mrf.mxu0
    %v855 = vadd.f32 %v234, %v854
    %856 = vdwg.mxu0
    %v857 = vmax.f32 %v855, 0.0
    %v859 = vsel %vm208, %v857, 0
    %861 = vmatpush.msra.mxu0 0.0
    %862 = vmatpush.msra.mxu0 0.0
    %863 = vmatpush.msra.mxu0 0.0
    %864 = vmatpush.msra.mxu0 0.0
    %865 = vmatpush.msra.mxu0 0.0
    %866 = vmatpush.msra.mxu0 0.0
    %867 = vmatpush.msra.mxu0 0.0
    %868 = vmatpush.msra.mxu0 0.0
    %869 = vmatpush.msra.mxu0 0.0
    %870 = vmatpush.msra.mxu0 0.0
    %871 = vmatpush.msra.mxu0 0.0
    %872 = vmatpush.msra.mxu0 0.0
    %873 = vmatpush.msra.mxu0 %v122
    %874 = vmatpush.msra.mxu0 %v121
    %875 = vmatpush.msra.mxu0 %v120
    %876 = vmatpush.msra.mxu0 %v119
    %877 = vmatmul.f32.gmra.mxu0 %v859
    %v878 = vpop.f32.mrf.mxu0
    %v879 = vadd.f32 %v261, %v878
    %880 = vdwg.mxu0
    %v881 = vtanh.pop %v879
    %883 = vset.pattern.permute.xlu0 0
    %884 = vperm.xlu0 %883, %v689
    %v885 = vpop.permute.xlu0 %884
    %v887 = vmul.f32 %v881, %v885
    %888 = vset.pattern.permute.xlu0 1
    %889 = vperm.xlu0 %888, %v689
    %v890 = vpop.permute.xlu0 %889
    %v892 = vmul.f32 %v881, %v890
    %894 = vrot.lane.b32.xlu0 %v892, 96
    %v895 = vpop.permute.xlu0 %894
    %v897 = vadd.f32 %v887, %v895
    %898 = vset.pattern.permute.xlu0 2
    %899 = vperm.xlu0 %898, %v689
    %v900 = vpop.permute.xlu0 %899
    %v902 = vmul.f32 %v881, %v900
    %904 = vrot.lane.b32.xlu0 %v902, 64
    %v905 = vpop.permute.xlu0 %904
    %v907 = vadd.f32 %v897, %v905
    %908 = vset.pattern.permute.xlu0 3
    %909 = vperm.xlu0 %908, %v689
    %v910 = vpop.permute.xlu0 %909
    %v912 = vmul.f32 %v881, %v910
    %914 = vrot.lane.b32.xlu0 %v912, 32
    %v915 = vpop.permute.xlu0 %914
    %v917 = vadd.f32 %v907, %v915
    %v918 = vmul.f32 %v806, 0.33333334
    %v919 = vsub.f32 %v917, %v918
    %v920 = vmul.f32 %v703, %v919
    %v921 = vadd.f32 %v664, %v920
    %v923 = vsel %vm208, %v921, 0
    %925 = vmatpush.msra.mxu0 0.0
    %926 = vmatpush.msra.mxu0 0.0
    %927 = vmatpush.msra.mxu0 0.0
    %928 = vmatpush.msra.mxu0 0.0
    %929 = vmatpush.msra.mxu0 0.0
    %930 = vmatpush.msra.mxu0 0.0
    %931 = vmatpush.msra.mxu0 0.0
    %932 = vmatpush.msra.mxu0 0.0
    %933 = vmatpush.msra.mxu0 0.0
    %934 = vmatpush.msra.mxu0 0.0
    %935 = vmatpush.msra.mxu0 0.0
    %936 = vmatpush.msra.mxu0 0.0
    %937 = vmatpush.msra.mxu0 %v112
    %938 = vmatpush.msra.mxu0 %v111
    %939 = vmatpush.msra.mxu0 %v110
    %940 = vmatpush.msra.mxu0 %v109
    %941 = vmatmul.f32.gmra.mxu0 %v923
    %v942 = vpop.f32.mrf.mxu0
    %v943 = vadd.f32 %v206, %v942
    %944 = vdwg.mxu0
    %v945 = vmax.f32 %v943, 0.0
    %v947 = vsel %vm208, %v945, 0
    %949 = vmatpush.msra.mxu0 0.0
    %950 = vmatpush.msra.mxu0 0.0
    %951 = vmatpush.msra.mxu0 0.0
    %952 = vmatpush.msra.mxu0 0.0
    %953 = vmatpush.msra.mxu0 0.0
    %954 = vmatpush.msra.mxu0 0.0
    %955 = vmatpush.msra.mxu0 0.0
    %956 = vmatpush.msra.mxu0 0.0
    %957 = vmatpush.msra.mxu0 0.0
    %958 = vmatpush.msra.mxu0 0.0
    %959 = vmatpush.msra.mxu0 0.0
    %960 = vmatpush.msra.mxu0 0.0
    %961 = vmatpush.msra.mxu0 %v117
    %962 = vmatpush.msra.mxu0 %v116
    %963 = vmatpush.msra.mxu0 %v115
    %964 = vmatpush.msra.mxu0 %v114
    %965 = vmatmul.f32.gmra.mxu0 %v947
    %v966 = vpop.f32.mrf.mxu0
    %v967 = vadd.f32 %v234, %v966
    %968 = vdwg.mxu0
    %v969 = vmax.f32 %v967, 0.0
    %v971 = vsel %vm208, %v969, 0
    %973 = vmatpush.msra.mxu0 0.0
    %974 = vmatpush.msra.mxu0 0.0
    %975 = vmatpush.msra.mxu0 0.0
    %976 = vmatpush.msra.mxu0 0.0
    %977 = vmatpush.msra.mxu0 0.0
    %978 = vmatpush.msra.mxu0 0.0
    %979 = vmatpush.msra.mxu0 0.0
    %980 = vmatpush.msra.mxu0 0.0
    %981 = vmatpush.msra.mxu0 0.0
    %982 = vmatpush.msra.mxu0 0.0
    %983 = vmatpush.msra.mxu0 0.0
    %984 = vmatpush.msra.mxu0 0.0
    %985 = vmatpush.msra.mxu0 %v122
    %986 = vmatpush.msra.mxu0 %v121
    %987 = vmatpush.msra.mxu0 %v120
    %988 = vmatpush.msra.mxu0 %v119
    %989 = vmatmul.f32.gmra.mxu0 %v971
    %v990 = vpop.f32.mrf.mxu0
    %v991 = vadd.f32 %v261, %v990
    %992 = vdwg.mxu0
    %v993 = vtanh.pop %v991
    %995 = vset.pattern.permute.xlu0 0
    %996 = vperm.xlu0 %995, %v702
    %v997 = vpop.permute.xlu0 %996
    %v999 = vmul.f32 %v993, %v997
    %1000 = vset.pattern.permute.xlu0 1
    %1001 = vperm.xlu0 %1000, %v702
    %v1002 = vpop.permute.xlu0 %1001
    %v1004 = vmul.f32 %v993, %v1002
    %1006 = vrot.lane.b32.xlu0 %v1004, 96
    %v1007 = vpop.permute.xlu0 %1006
    %v1009 = vadd.f32 %v999, %v1007
    %1010 = vset.pattern.permute.xlu0 2
    %1011 = vperm.xlu0 %1010, %v702
    %v1012 = vpop.permute.xlu0 %1011
    %v1014 = vmul.f32 %v993, %v1012
    %1016 = vrot.lane.b32.xlu0 %v1014, 64
    %v1017 = vpop.permute.xlu0 %1016
    %v1019 = vadd.f32 %v1009, %v1017
    %1020 = vset.pattern.permute.xlu0 3
    %1021 = vperm.xlu0 %1020, %v702
    %v1022 = vpop.permute.xlu0 %1021
    %v1024 = vmul.f32 %v993, %v1022
    %1026 = vrot.lane.b32.xlu0 %v1024, 32
    %v1027 = vpop.permute.xlu0 %1026
    %v1029 = vadd.f32 %v1019, %v1027
    %v1030 = vsub.f32 %v806, %v917
    %v1031 = vadd.f32 %v1030, %v1029
    %v1032 = vmul.f32 %v703, %v1031
    %v1033 = vadd.f32 %v664, %v1032
    %v1035 = vsel %vm208, %v1033, 0
    %1037 = vmatpush.msra.mxu0 0.0
    %1038 = vmatpush.msra.mxu0 0.0
    %1039 = vmatpush.msra.mxu0 0.0
    %1040 = vmatpush.msra.mxu0 0.0
    %1041 = vmatpush.msra.mxu0 0.0
    %1042 = vmatpush.msra.mxu0 0.0
    %1043 = vmatpush.msra.mxu0 0.0
    %1044 = vmatpush.msra.mxu0 0.0
    %1045 = vmatpush.msra.mxu0 0.0
    %1046 = vmatpush.msra.mxu0 0.0
    %1047 = vmatpush.msra.mxu0 0.0
    %1048 = vmatpush.msra.mxu0 0.0
    %1049 = vmatpush.msra.mxu0 %v112
    %1050 = vmatpush.msra.mxu0 %v111
    %1051 = vmatpush.msra.mxu0 %v110
    %1052 = vmatpush.msra.mxu0 %v109
    %1053 = vmatmul.f32.gmra.mxu0 %v1035
    %v1054 = vpop.f32.mrf.mxu0
    %v1055 = vadd.f32 %v206, %v1054
    %1056 = vdwg.mxu0
    %v1057 = vmax.f32 %v1055, 0.0
    %v1059 = vsel %vm208, %v1057, 0
    %1061 = vmatpush.msra.mxu0 0.0
    %1062 = vmatpush.msra.mxu0 0.0
    %1063 = vmatpush.msra.mxu0 0.0
    %1064 = vmatpush.msra.mxu0 0.0
    %1065 = vmatpush.msra.mxu0 0.0
    %1066 = vmatpush.msra.mxu0 0.0
    %1067 = vmatpush.msra.mxu0 0.0
    %1068 = vmatpush.msra.mxu0 0.0
    %1069 = vmatpush.msra.mxu0 0.0
    %1070 = vmatpush.msra.mxu0 0.0
    %1071 = vmatpush.msra.mxu0 0.0
    %1072 = vmatpush.msra.mxu0 0.0
    %1073 = vmatpush.msra.mxu0 %v117
    %1074 = vmatpush.msra.mxu0 %v116
    %1075 = vmatpush.msra.mxu0 %v115
    %1076 = vmatpush.msra.mxu0 %v114
    %1077 = vmatmul.f32.gmra.mxu0 %v1059
    %v1078 = vpop.f32.mrf.mxu0
    %v1079 = vadd.f32 %v234, %v1078
    %1080 = vdwg.mxu0
    %v1081 = vmax.f32 %v1079, 0.0
    %v1083 = vsel %vm208, %v1081, 0
    %1085 = vmatpush.msra.mxu0 0.0
    %1086 = vmatpush.msra.mxu0 0.0
    %1087 = vmatpush.msra.mxu0 0.0
    %1088 = vmatpush.msra.mxu0 0.0
    %1089 = vmatpush.msra.mxu0 0.0
    %1090 = vmatpush.msra.mxu0 0.0
    %1091 = vmatpush.msra.mxu0 0.0
    %1092 = vmatpush.msra.mxu0 0.0
    %1093 = vmatpush.msra.mxu0 0.0
    %1094 = vmatpush.msra.mxu0 0.0
    %1095 = vmatpush.msra.mxu0 0.0
    %1096 = vmatpush.msra.mxu0 0.0
    %1097 = vmatpush.msra.mxu0 %v122
    %1098 = vmatpush.msra.mxu0 %v121
    %1099 = vmatpush.msra.mxu0 %v120
    %1100 = vmatpush.msra.mxu0 %v119
    %1101 = vmatmul.f32.gmra.mxu0 %v1083
    %v1102 = vpop.f32.mrf.mxu0
    %v1103 = vadd.f32 %v261, %v1102
    %1104 = vdwg.mxu0
    %v1105 = vtanh.pop %v1103
    %1107 = vset.pattern.permute.xlu0 0
    %1108 = vperm.xlu0 %1107, %v715
    %v1109 = vpop.permute.xlu0 %1108
    %v1111 = vmul.f32 %v1105, %v1109
    %1112 = vset.pattern.permute.xlu0 1
    %1113 = vperm.xlu0 %1112, %v715
    %v1114 = vpop.permute.xlu0 %1113
    %v1116 = vmul.f32 %v1105, %v1114
    %1118 = vrot.lane.b32.xlu0 %v1116, 96
    %v1119 = vpop.permute.xlu0 %1118
    %v1121 = vadd.f32 %v1111, %v1119
    %1122 = vset.pattern.permute.xlu0 2
    %1123 = vperm.xlu0 %1122, %v715
    %v1124 = vpop.permute.xlu0 %1123
    %v1126 = vmul.f32 %v1105, %v1124
    %1128 = vrot.lane.b32.xlu0 %v1126, 64
    %v1129 = vpop.permute.xlu0 %1128
    %v1131 = vadd.f32 %v1121, %v1129
    %1132 = vset.pattern.permute.xlu0 3
    %1133 = vperm.xlu0 %1132, %v715
    %v1134 = vpop.permute.xlu0 %1133
    %v1136 = vmul.f32 %v1105, %v1134
    %1138 = vrot.lane.b32.xlu0 %v1136, 32
    %v1139 = vpop.permute.xlu0 %1138
    %v1141 = vadd.f32 %v1131, %v1139
    %v1142 = vadd.f32 %v917, %v1029
    %v1143 = vmul.f32 %v1142, 3.0
    %v1144 = vadd.f32 %v806, %v1143
    %v1145 = vadd.f32 %v1144, %v1141
    %v1146 = vmul.f32 %v1145, %v703
    %v1147 = vmul.f32 %v1146, 0.125
    %v1148 = vadd.f32 %v664, %v1147
    %vm1149 = vcmp.eq.s32.totalorder %v129, 2
    %v1150 = vsel %vm1149, 1, 0
    %1151 = vset.pattern.permute.xlu0 0
    %1152 = vperm.xlu0 %1151, %v1150
    %v1153 = vpop.permute.xlu0 %1152
    %vm1154 = vcmp.eq.s32.totalorder %v1153, 1
    %v1155 = vsel %vm1154, %v1148, %v671
    %s1156 = sld [smem:[#allocation2 + $0x2]]
    %s1157 = scalar_lea.vmem [#allocation5], 16
    %v1158 = vld [vmem:[%s1157] sm:$0xff]
    %s1159 = smul.f32 %s1156, 0.33333334
    %s1160 = smul.f32 %s1156, 0.6666667
    %v1161 = vstv %s1159
    %v1162 = vmul.f32 %v1158, %v1161
    %1164 = vrot.lane.b32.xlu0 %v1162, 124
    %v1165 = vpop.permute.xlu0 %1164
    %v1167 = vadd.f32 %v1158, %v1165
    %v1168 = vmul.f32 %v1167, %v1161
    %1170 = vrot.lane.b32.xlu0 %v1168, 124
    %v1171 = vpop.permute.xlu0 %1170
    %v1173 = vadd.f32 %v1158, %v1171
    %v1174 = vstv %s1160
    %v1175 = vmul.f32 %v1158, %v1174
    %1177 = vrot.lane.b32.xlu0 %v1175, 124
    %v1178 = vpop.permute.xlu0 %1177
    %v1180 = vadd.f32 %v1158, %v1178
    %v1181 = vmul.f32 %v1180, %v1174
    %1183 = vrot.lane.b32.xlu0 %v1181, 124
    %v1184 = vpop.permute.xlu0 %1183
    %v1186 = vadd.f32 %v1158, %v1184
    %v1187 = vstv %s1156
    %v1188 = vmul.f32 %v1158, %v1187
    %1190 = vrot.lane.b32.xlu0 %v1188, 124
    %v1191 = vpop.permute.xlu0 %1190
    %v1193 = vadd.f32 %v1158, %v1191
    %v1194 = vmul.f32 %v1193, %v1187
    %1196 = vrot.lane.b32.xlu0 %v1194, 124
    %v1197 = vpop.permute.xlu0 %1196
    %v1199 = vadd.f32 %v1158, %v1197
    %v1201 = vsel %vm208, %v1148, 0
    %1203 = vmatpush.msra.mxu0 0.0
    %1204 = vmatpush.msra.mxu0 0.0
    %1205 = vmatpush.msra.mxu0 0.0
    %1206 = vmatpush.msra.mxu0 0.0
    %1207 = vmatpush.msra.mxu0 0.0
    %1208 = vmatpush.msra.mxu0 0.0
    %1209 = vmatpush.msra.mxu0 0.0
    %1210 = vmatpush.msra.mxu0 0.0
    %1211 = vmatpush.msra.mxu0 0.0
    %1212 = vmatpush.msra.mxu0 0.0
    %1213 = vmatpush.msra.mxu0 0.0
    %1214 = vmatpush.msra.mxu0 0.0
    %1215 = vmatpush.msra.mxu0 %v112
    %1216 = vmatpush.msra.mxu0 %v111
    %1217 = vmatpush.msra.mxu0 %v110
    %1218 = vmatpush.msra.mxu0 %v109
    %1219 = vmatmul.f32.gmra.mxu0 %v1201
    %v1220 = vpop.f32.mrf.mxu0
    %v1221 = vadd.f32 %v206, %v1220
    %1222 = vdwg.mxu0
    %v1223 = vmax.f32 %v1221, 0.0
    %v1225 = vsel %vm208, %v1223, 0
    %1227 = vmatpush.msra.mxu0 0.0
    %1228 = vmatpush.msra.mxu0 0.0
    %1229 = vmatpush.msra.mxu0 0.0
    %1230 = vmatpush.msra.mxu0 0.0
    %1231 = vmatpush.msra.mxu0 0.0
    %1232 = vmatpush.msra.mxu0 0.0
    %1233 = vmatpush.msra.mxu0 0.0
    %1234 = vmatpush.msra.mxu0 0.0
    %1235 = vmatpush.msra.mxu0 0.0
    %1236 = vmatpush.msra.mxu0 0.0
    %1237 = vmatpush.msra.mxu0 0.0
    %1238 = vmatpush.msra.mxu0 0.0
    %1239 = vmatpush.msra.mxu0 %v117
    %1240 = vmatpush.msra.mxu0 %v116
    %1241 = vmatpush.msra.mxu0 %v115
    %1242 = vmatpush.msra.mxu0 %v114
    %1243 = vmatmul.f32.gmra.mxu0 %v1225
    %v1244 = vpop.f32.mrf.mxu0
    %v1245 = vadd.f32 %v234, %v1244
    %1246 = vdwg.mxu0
    %v1247 = vmax.f32 %v1245, 0.0
    %v1249 = vsel %vm208, %v1247, 0
    %1251 = vmatpush.msra.mxu0 0.0
    %1252 = vmatpush.msra.mxu0 0.0
    %1253 = vmatpush.msra.mxu0 0.0
    %1254 = vmatpush.msra.mxu0 0.0
    %1255 = vmatpush.msra.mxu0 0.0
    %1256 = vmatpush.msra.mxu0 0.0
    %1257 = vmatpush.msra.mxu0 0.0
    %1258 = vmatpush.msra.mxu0 0.0
    %1259 = vmatpush.msra.mxu0 0.0
    %1260 = vmatpush.msra.mxu0 0.0
    %1261 = vmatpush.msra.mxu0 0.0
    %1262 = vmatpush.msra.mxu0 0.0
    %1263 = vmatpush.msra.mxu0 %v122
    %1264 = vmatpush.msra.mxu0 %v121
    %1265 = vmatpush.msra.mxu0 %v120
    %1266 = vmatpush.msra.mxu0 %v119
    %1267 = vmatmul.f32.gmra.mxu0 %v1249
    %v1268 = vpop.f32.mrf.mxu0
    %v1269 = vadd.f32 %v261, %v1268
    %1270 = vdwg.mxu0
    %v1271 = vtanh.pop %v1269
    %v1272 = vmul.f32 %v1271, %v1109
    %v1273 = vmul.f32 %v1271, %v1114
    %1275 = vrot.lane.b32.xlu0 %v1273, 96
    %v1276 = vpop.permute.xlu0 %1275
    %v1278 = vadd.f32 %v1272, %v1276
    %v1279 = vmul.f32 %v1271, %v1124
    %1281 = vrot.lane.b32.xlu0 %v1279, 64
    %v1282 = vpop.permute.xlu0 %1281
    %v1284 = vadd.f32 %v1278, %v1282
    %v1285 = vmul.f32 %v1271, %v1134
    %1287 = vrot.lane.b32.xlu0 %v1285, 32
    %v1288 = vpop.permute.xlu0 %1287
    %v1290 = vadd.f32 %v1284, %v1288
    %v1291 = vmul.f32 %v1187, %v1290
    %v1292 = vmul.f32 %v1291, 0.33333334
    %v1293 = vadd.f32 %v1148, %v1292
    %v1295 = vsel %vm208, %v1293, 0
    %1297 = vmatpush.msra.mxu0 0.0
    %1298 = vmatpush.msra.mxu0 0.0
    %1299 = vmatpush.msra.mxu0 0.0
    %1300 = vmatpush.msra.mxu0 0.0
    %1301 = vmatpush.msra.mxu0 0.0
    %1302 = vmatpush.msra.mxu0 0.0
    %1303 = vmatpush.msra.mxu0 0.0
    %1304 = vmatpush.msra.mxu0 0.0
    %1305 = vmatpush.msra.mxu0 0.0
    %1306 = vmatpush.msra.mxu0 0.0
    %1307 = vmatpush.msra.mxu0 0.0
    %1308 = vmatpush.msra.mxu0 0.0
    %1309 = vmatpush.msra.mxu0 %v112
    %1310 = vmatpush.msra.mxu0 %v111
    %1311 = vmatpush.msra.mxu0 %v110
    %1312 = vmatpush.msra.mxu0 %v109
    %1313 = vmatmul.f32.gmra.mxu0 %v1295
    %v1314 = vpop.f32.mrf.mxu0
    %v1315 = vadd.f32 %v206, %v1314
    %1316 = vdwg.mxu0
    %v1317 = vmax.f32 %v1315, 0.0
    %v1319 = vsel %vm208, %v1317, 0
    %1321 = vmatpush.msra.mxu0 0.0
    %1322 = vmatpush.msra.mxu0 0.0
    %1323 = vmatpush.msra.mxu0 0.0
    %1324 = vmatpush.msra.mxu0 0.0
    %1325 = vmatpush.msra.mxu0 0.0
    %1326 = vmatpush.msra.mxu0 0.0
    %1327 = vmatpush.msra.mxu0 0.0
    %1328 = vmatpush.msra.mxu0 0.0
    %1329 = vmatpush.msra.mxu0 0.0
    %1330 = vmatpush.msra.mxu0 0.0
    %1331 = vmatpush.msra.mxu0 0.0
    %1332 = vmatpush.msra.mxu0 0.0
    %1333 = vmatpush.msra.mxu0 %v117
    %1334 = vmatpush.msra.mxu0 %v116
    %1335 = vmatpush.msra.mxu0 %v115
    %1336 = vmatpush.msra.mxu0 %v114
    %1337 = vmatmul.f32.gmra.mxu0 %v1319
    %v1338 = vpop.f32.mrf.mxu0
    %v1339 = vadd.f32 %v234, %v1338
    %1340 = vdwg.mxu0
    %v1341 = vmax.f32 %v1339, 0.0
    %v1343 = vsel %vm208, %v1341, 0
    %1345 = vmatpush.msra.mxu0 0.0
    %1346 = vmatpush.msra.mxu0 0.0
    %1347 = vmatpush.msra.mxu0 0.0
    %1348 = vmatpush.msra.mxu0 0.0
    %1349 = vmatpush.msra.mxu0 0.0
    %1350 = vmatpush.msra.mxu0 0.0
    %1351 = vmatpush.msra.mxu0 0.0
    %1352 = vmatpush.msra.mxu0 0.0
    %1353 = vmatpush.msra.mxu0 0.0
    %1354 = vmatpush.msra.mxu0 0.0
    %1355 = vmatpush.msra.mxu0 0.0
    %1356 = vmatpush.msra.mxu0 0.0
    %1357 = vmatpush.msra.mxu0 %v122
    %1358 = vmatpush.msra.mxu0 %v121
    %1359 = vmatpush.msra.mxu0 %v120
    %1360 = vmatpush.msra.mxu0 %v119
    %1361 = vmatmul.f32.gmra.mxu0 %v1343
    %v1362 = vpop.f32.mrf.mxu0
    %v1363 = vadd.f32 %v261, %v1362
    %1364 = vdwg.mxu0
    %v1365 = vtanh.pop %v1363
    %1367 = vset.pattern.permute.xlu0 0
    %1368 = vperm.xlu0 %1367, %v1173
    %v1369 = vpop.permute.xlu0 %1368
    %v1371 = vmul.f32 %v1365, %v1369
    %1372 = vset.pattern.permute.xlu0 1
    %1373 = vperm.xlu0 %1372, %v1173
    %v1374 = vpop.permute.xlu0 %1373
    %v1376 = vmul.f32 %v1365, %v1374
    %1378 = vrot.lane.b32.xlu0 %v1376, 96
    %v1379 = vpop.permute.xlu0 %1378
    %v1381 = vadd.f32 %v1371, %v1379
    %1382 = vset.pattern.permute.xlu0 2
    %1383 = vperm.xlu0 %1382, %v1173
    %v1384 = vpop.permute.xlu0 %1383
    %v1386 = vmul.f32 %v1365, %v1384
    %1388 = vrot.lane.b32.xlu0 %v1386, 64
    %v1389 = vpop.permute.xlu0 %1388
    %v1391 = vadd.f32 %v1381, %v1389
    %1392 = vset.pattern.permute.xlu0 3
    %1393 = vperm.xlu0 %1392, %v1173
    %v1394 = vpop.permute.xlu0 %1393
    %v1396 = vmul.f32 %v1365, %v1394
    %1398 = vrot.lane.b32.xlu0 %v1396, 32
    %v1399 = vpop.permute.xlu0 %1398
    %v1401 = vadd.f32 %v1391, %v1399
    %v1402 = vmul.f32 %v1290, 0.33333334
    %v1403 = vsub.f32 %v1401, %v1402
    %v1404 = vmul.f32 %v1187, %v1403
    %v1405 = vadd.f32 %v1148, %v1404
    %v1407 = vsel %vm208, %v1405, 0
    %1409 = vmatpush.msra.mxu0 0.0
    %1410 = vmatpush.msra.mxu0 0.0
    %1411 = vmatpush.msra.mxu0 0.0
    %1412 = vmatpush.msra.mxu0 0.0
    %1413 = vmatpush.msra.mxu0 0.0
    %1414 = vmatpush.msra.mxu0 0.0
    %1415 = vmatpush.msra.mxu0 0.0
    %1416 = vmatpush.msra.mxu0 0.0
    %1417 = vmatpush.msra.mxu0 0.0
    %1418 = vmatpush.msra.mxu0 0.0
    %1419 = vmatpush.msra.mxu0 0.0
    %1420 = vmatpush.msra.mxu0 0.0
    %1421 = vmatpush.msra.mxu0 %v112
    %1422 = vmatpush.msra.mxu0 %v111
    %1423 = vmatpush.msra.mxu0 %v110
    %1424 = vmatpush.msra.mxu0 %v109
    %1425 = vmatmul.f32.gmra.mxu0 %v1407
    %v1426 = vpop.f32.mrf.mxu0
    %v1427 = vadd.f32 %v206, %v1426
    %1428 = vdwg.mxu0
    %v1429 = vmax.f32 %v1427, 0.0
    %v1431 = vsel %vm208, %v1429, 0
    %1433 = vmatpush.msra.mxu0 0.0
    %1434 = vmatpush.msra.mxu0 0.0
    %1435 = vmatpush.msra.mxu0 0.0
    %1436 = vmatpush.msra.mxu0 0.0
    %1437 = vmatpush.msra.mxu0 0.0
    %1438 = vmatpush.msra.mxu0 0.0
    %1439 = vmatpush.msra.mxu0 0.0
    %1440 = vmatpush.msra.mxu0 0.0
    %1441 = vmatpush.msra.mxu0 0.0
    %1442 = vmatpush.msra.mxu0 0.0
    %1443 = vmatpush.msra.mxu0 0.0
    %1444 = vmatpush.msra.mxu0 0.0
    %1445 = vmatpush.msra.mxu0 %v117
    %1446 = vmatpush.msra.mxu0 %v116
    %1447 = vmatpush.msra.mxu0 %v115
    %1448 = vmatpush.msra.mxu0 %v114
    %1449 = vmatmul.f32.gmra.mxu0 %v1431
    %v1450 = vpop.f32.mrf.mxu0
    %v1451 = vadd.f32 %v234, %v1450
    %1452 = vdwg.mxu0
    %v1453 = vmax.f32 %v1451, 0.0
    %v1455 = vsel %vm208, %v1453, 0
    %1457 = vmatpush.msra.mxu0 0.0
    %1458 = vmatpush.msra.mxu0 0.0
    %1459 = vmatpush.msra.mxu0 0.0
    %1460 = vmatpush.msra.mxu0 0.0
    %1461 = vmatpush.msra.mxu0 0.0
    %1462 = vmatpush.msra.mxu0 0.0
    %1463 = vmatpush.msra.mxu0 0.0
    %1464 = vmatpush.msra.mxu0 0.0
    %1465 = vmatpush.msra.mxu0 0.0
    %1466 = vmatpush.msra.mxu0 0.0
    %1467 = vmatpush.msra.mxu0 0.0
    %1468 = vmatpush.msra.mxu0 0.0
    %1469 = vmatpush.msra.mxu0 %v122
    %1470 = vmatpush.msra.mxu0 %v121
    %1471 = vmatpush.msra.mxu0 %v120
    %1472 = vmatpush.msra.mxu0 %v119
    %1473 = vmatmul.f32.gmra.mxu0 %v1455
    %v1474 = vpop.f32.mrf.mxu0
    %v1475 = vadd.f32 %v261, %v1474
    %1476 = vdwg.mxu0
    %v1477 = vtanh.pop %v1475
    %1479 = vset.pattern.permute.xlu0 0
    %1480 = vperm.xlu0 %1479, %v1186
    %v1481 = vpop.permute.xlu0 %1480
    %v1483 = vmul.f32 %v1477, %v1481
    %1484 = vset.pattern.permute.xlu0 1
    %1485 = vperm.xlu0 %1484, %v1186
    %v1486 = vpop.permute.xlu0 %1485
    %v1488 = vmul.f32 %v1477, %v1486
    %1490 = vrot.lane.b32.xlu0 %v1488, 96
    %v1491 = vpop.permute.xlu0 %1490
    %v1493 = vadd.f32 %v1483, %v1491
    %1494 = vset.pattern.permute.xlu0 2
    %1495 = vperm.xlu0 %1494, %v1186
    %v1496 = vpop.permute.xlu0 %1495
    %v1498 = vmul.f32 %v1477, %v1496
    %1500 = vrot.lane.b32.xlu0 %v1498, 64
    %v1501 = vpop.permute.xlu0 %1500
    %v1503 = vadd.f32 %v1493, %v1501
    %1504 = vset.pattern.permute.xlu0 3
    %1505 = vperm.xlu0 %1504, %v1186
    %v1506 = vpop.permute.xlu0 %1505
    %v1508 = vmul.f32 %v1477, %v1506
    %1510 = vrot.lane.b32.xlu0 %v1508, 32
    %v1511 = vpop.permute.xlu0 %1510
    %v1513 = vadd.f32 %v1503, %v1511
    %v1514 = vsub.f32 %v1290, %v1401
    %v1515 = vadd.f32 %v1514, %v1513
    %v1516 = vmul.f32 %v1187, %v1515
    %v1517 = vadd.f32 %v1148, %v1516
    %v1519 = vsel %vm208, %v1517, 0
    %1521 = vmatpush.msra.mxu0 0.0
    %1522 = vmatpush.msra.mxu0 0.0
    %1523 = vmatpush.msra.mxu0 0.0
    %1524 = vmatpush.msra.mxu0 0.0
    %1525 = vmatpush.msra.mxu0 0.0
    %1526 = vmatpush.msra.mxu0 0.0
    %1527 = vmatpush.msra.mxu0 0.0
    %1528 = vmatpush.msra.mxu0 0.0
    %1529 = vmatpush.msra.mxu0 0.0
    %1530 = vmatpush.msra.mxu0 0.0
    %1531 = vmatpush.msra.mxu0 0.0
    %1532 = vmatpush.msra.mxu0 0.0
    %1533 = vmatpush.msra.mxu0 %v112
    %1534 = vmatpush.msra.mxu0 %v111
    %1535 = vmatpush.msra.mxu0 %v110
    %1536 = vmatpush.msra.mxu0 %v109
    %1537 = vmatmul.f32.gmra.mxu0 %v1519
    %v1538 = vpop.f32.mrf.mxu0
    %v1539 = vadd.f32 %v206, %v1538
    %1540 = vdwg.mxu0
    %v1541 = vmax.f32 %v1539, 0.0
    %v1543 = vsel %vm208, %v1541, 0
    %1545 = vmatpush.msra.mxu0 0.0
    %1546 = vmatpush.msra.mxu0 0.0
    %1547 = vmatpush.msra.mxu0 0.0
    %1548 = vmatpush.msra.mxu0 0.0
    %1549 = vmatpush.msra.mxu0 0.0
    %1550 = vmatpush.msra.mxu0 0.0
    %1551 = vmatpush.msra.mxu0 0.0
    %1552 = vmatpush.msra.mxu0 0.0
    %1553 = vmatpush.msra.mxu0 0.0
    %1554 = vmatpush.msra.mxu0 0.0
    %1555 = vmatpush.msra.mxu0 0.0
    %1556 = vmatpush.msra.mxu0 0.0
    %1557 = vmatpush.msra.mxu0 %v117
    %1558 = vmatpush.msra.mxu0 %v116
    %1559 = vmatpush.msra.mxu0 %v115
    %1560 = vmatpush.msra.mxu0 %v114
    %1561 = vmatmul.f32.gmra.mxu0 %v1543
    %v1562 = vpop.f32.mrf.mxu0
    %v1563 = vadd.f32 %v234, %v1562
    %1564 = vdwg.mxu0
    %v1565 = vmax.f32 %v1563, 0.0
    %v1567 = vsel %vm208, %v1565, 0
    %1569 = vmatpush.msra.mxu0 0.0
    %1570 = vmatpush.msra.mxu0 0.0
    %1571 = vmatpush.msra.mxu0 0.0
    %1572 = vmatpush.msra.mxu0 0.0
    %1573 = vmatpush.msra.mxu0 0.0
    %1574 = vmatpush.msra.mxu0 0.0
    %1575 = vmatpush.msra.mxu0 0.0
    %1576 = vmatpush.msra.mxu0 0.0
    %1577 = vmatpush.msra.mxu0 0.0
    %1578 = vmatpush.msra.mxu0 0.0
    %1579 = vmatpush.msra.mxu0 0.0
    %1580 = vmatpush.msra.mxu0 0.0
    %1581 = vmatpush.msra.mxu0 %v122
    %1582 = vmatpush.msra.mxu0 %v121
    %1583 = vmatpush.msra.mxu0 %v120
    %1584 = vmatpush.msra.mxu0 %v119
    %1585 = vmatmul.f32.gmra.mxu0 %v1567
    %v1586 = vpop.f32.mrf.mxu0
    %v1587 = vadd.f32 %v261, %v1586
    %1588 = vdwg.mxu0
    %v1589 = vtanh.pop %v1587
    %1591 = vset.pattern.permute.xlu0 0
    %1592 = vperm.xlu0 %1591, %v1199
    %v1593 = vpop.permute.xlu0 %1592
    %v1595 = vmul.f32 %v1589, %v1593
    %1596 = vset.pattern.permute.xlu0 1
    %1597 = vperm.xlu0 %1596, %v1199
    %v1598 = vpop.permute.xlu0 %1597
    %v1600 = vmul.f32 %v1589, %v1598
    %1602 = vrot.lane.b32.xlu0 %v1600, 96
    %v1603 = vpop.permute.xlu0 %1602
    %v1605 = vadd.f32 %v1595, %v1603
    %1606 = vset.pattern.permute.xlu0 2
    %1607 = vperm.xlu0 %1606, %v1199
    %v1608 = vpop.permute.xlu0 %1607
    %v1610 = vmul.f32 %v1589, %v1608
    %1612 = vrot.lane.b32.xlu0 %v1610, 64
    %v1613 = vpop.permute.xlu0 %1612
    %v1615 = vadd.f32 %v1605, %v1613
    %1616 = vset.pattern.permute.xlu0 3
    %1617 = vperm.xlu0 %1616, %v1199
    %v1618 = vpop.permute.xlu0 %1617
    %v1620 = vmul.f32 %v1589, %v1618
    %1622 = vrot.lane.b32.xlu0 %v1620, 32
    %v1623 = vpop.permute.xlu0 %1622
    %v1625 = vadd.f32 %v1615, %v1623
    %v1626 = vadd.f32 %v1401, %v1513
    %v1627 = vmul.f32 %v1626, 3.0
    %v1628 = vadd.f32 %v1290, %v1627
    %v1629 = vadd.f32 %v1628, %v1625
    %v1630 = vmul.f32 %v1629, %v1187
    %v1631 = vmul.f32 %v1630, 0.125
    %v1632 = vadd.f32 %v1148, %v1631
    %vm1633 = vcmp.eq.s32.totalorder %v129, 3
    %v1634 = vsel %vm1633, 1, 0
    %1635 = vset.pattern.permute.xlu0 0
    %1636 = vperm.xlu0 %1635, %v1634
    %v1637 = vpop.permute.xlu0 %1636
    %vm1638 = vcmp.eq.s32.totalorder %v1637, 1
    %v1639 = vsel %vm1638, %v1632, %v1155
    %s1640 = sld [smem:[#allocation2 + $0x3]]
    %s1641 = scalar_lea.vmem [#allocation5], 24
    %v1642 = vld [vmem:[%s1641] sm:$0xff]
    %s1643 = smul.f32 %s1640, 0.33333334
    %s1644 = smul.f32 %s1640, 0.6666667
    %v1645 = vstv %s1643
    %v1646 = vmul.f32 %v1642, %v1645
    %1648 = vrot.lane.b32.xlu0 %v1646, 124
    %v1649 = vpop.permute.xlu0 %1648
    %v1651 = vadd.f32 %v1642, %v1649
    %v1652 = vmul.f32 %v1651, %v1645
    %1654 = vrot.lane.b32.xlu0 %v1652, 124
    %v1655 = vpop.permute.xlu0 %1654
    %v1657 = vadd.f32 %v1642, %v1655
    %v1658 = vstv %s1644
    %v1659 = vmul.f32 %v1642, %v1658
    %1661 = vrot.lane.b32.xlu0 %v1659, 124
    %v1662 = vpop.permute.xlu0 %1661
    %v1664 = vadd.f32 %v1642, %v1662
    %v1665 = vmul.f32 %v1664, %v1658
    %1667 = vrot.lane.b32.xlu0 %v1665, 124
    %v1668 = vpop.permute.xlu0 %1667
    %v1670 = vadd.f32 %v1642, %v1668
    %v1671 = vstv %s1640
    %v1672 = vmul.f32 %v1642, %v1671
    %1674 = vrot.lane.b32.xlu0 %v1672, 124
    %v1675 = vpop.permute.xlu0 %1674
    %v1677 = vadd.f32 %v1642, %v1675
    %v1678 = vmul.f32 %v1677, %v1671
    %1680 = vrot.lane.b32.xlu0 %v1678, 124
    %v1681 = vpop.permute.xlu0 %1680
    %v1683 = vadd.f32 %v1642, %v1681
    %v1685 = vsel %vm208, %v1632, 0
    %1687 = vmatpush.msra.mxu0 0.0
    %1688 = vmatpush.msra.mxu0 0.0
    %1689 = vmatpush.msra.mxu0 0.0
    %1690 = vmatpush.msra.mxu0 0.0
    %1691 = vmatpush.msra.mxu0 0.0
    %1692 = vmatpush.msra.mxu0 0.0
    %1693 = vmatpush.msra.mxu0 0.0
    %1694 = vmatpush.msra.mxu0 0.0
    %1695 = vmatpush.msra.mxu0 0.0
    %1696 = vmatpush.msra.mxu0 0.0
    %1697 = vmatpush.msra.mxu0 0.0
    %1698 = vmatpush.msra.mxu0 0.0
    %1699 = vmatpush.msra.mxu0 %v112
    %1700 = vmatpush.msra.mxu0 %v111
    %1701 = vmatpush.msra.mxu0 %v110
    %1702 = vmatpush.msra.mxu0 %v109
    %1703 = vmatmul.f32.gmra.mxu0 %v1685
    %v1704 = vpop.f32.mrf.mxu0
    %v1705 = vadd.f32 %v206, %v1704
    %1706 = vdwg.mxu0
    %v1707 = vmax.f32 %v1705, 0.0
    %v1709 = vsel %vm208, %v1707, 0
    %1711 = vmatpush.msra.mxu0 0.0
    %1712 = vmatpush.msra.mxu0 0.0
    %1713 = vmatpush.msra.mxu0 0.0
    %1714 = vmatpush.msra.mxu0 0.0
    %1715 = vmatpush.msra.mxu0 0.0
    %1716 = vmatpush.msra.mxu0 0.0
    %1717 = vmatpush.msra.mxu0 0.0
    %1718 = vmatpush.msra.mxu0 0.0
    %1719 = vmatpush.msra.mxu0 0.0
    %1720 = vmatpush.msra.mxu0 0.0
    %1721 = vmatpush.msra.mxu0 0.0
    %1722 = vmatpush.msra.mxu0 0.0
    %1723 = vmatpush.msra.mxu0 %v117
    %1724 = vmatpush.msra.mxu0 %v116
    %1725 = vmatpush.msra.mxu0 %v115
    %1726 = vmatpush.msra.mxu0 %v114
    %1727 = vmatmul.f32.gmra.mxu0 %v1709
    %v1728 = vpop.f32.mrf.mxu0
    %v1729 = vadd.f32 %v234, %v1728
    %1730 = vdwg.mxu0
    %v1731 = vmax.f32 %v1729, 0.0
    %v1733 = vsel %vm208, %v1731, 0
    %1735 = vmatpush.msra.mxu0 0.0
    %1736 = vmatpush.msra.mxu0 0.0
    %1737 = vmatpush.msra.mxu0 0.0
    %1738 = vmatpush.msra.mxu0 0.0
    %1739 = vmatpush.msra.mxu0 0.0
    %1740 = vmatpush.msra.mxu0 0.0
    %1741 = vmatpush.msra.mxu0 0.0
    %1742 = vmatpush.msra.mxu0 0.0
    %1743 = vmatpush.msra.mxu0 0.0
    %1744 = vmatpush.msra.mxu0 0.0
    %1745 = vmatpush.msra.mxu0 0.0
    %1746 = vmatpush.msra.mxu0 0.0
    %1747 = vmatpush.msra.mxu0 %v122
    %1748 = vmatpush.msra.mxu0 %v121
    %1749 = vmatpush.msra.mxu0 %v120
    %1750 = vmatpush.msra.mxu0 %v119
    %1751 = vmatmul.f32.gmra.mxu0 %v1733
    %v1752 = vpop.f32.mrf.mxu0
    %v1753 = vadd.f32 %v261, %v1752
    %1754 = vdwg.mxu0
    %v1755 = vtanh.pop %v1753
    %v1756 = vmul.f32 %v1755, %v1593
    %v1757 = vmul.f32 %v1755, %v1598
    %1759 = vrot.lane.b32.xlu0 %v1757, 96
    %v1760 = vpop.permute.xlu0 %1759
    %v1762 = vadd.f32 %v1756, %v1760
    %v1763 = vmul.f32 %v1755, %v1608
    %1765 = vrot.lane.b32.xlu0 %v1763, 64
    %v1766 = vpop.permute.xlu0 %1765
    %v1768 = vadd.f32 %v1762, %v1766
    %v1769 = vmul.f32 %v1755, %v1618
    %1771 = vrot.lane.b32.xlu0 %v1769, 32
    %v1772 = vpop.permute.xlu0 %1771
    %v1774 = vadd.f32 %v1768, %v1772
    %v1775 = vmul.f32 %v1671, %v1774
    %v1776 = vmul.f32 %v1775, 0.33333334
    %v1777 = vadd.f32 %v1632, %v1776
    %v1779 = vsel %vm208, %v1777, 0
    %1781 = vmatpush.msra.mxu0 0.0
    %1782 = vmatpush.msra.mxu0 0.0
    %1783 = vmatpush.msra.mxu0 0.0
    %1784 = vmatpush.msra.mxu0 0.0
    %1785 = vmatpush.msra.mxu0 0.0
    %1786 = vmatpush.msra.mxu0 0.0
    %1787 = vmatpush.msra.mxu0 0.0
    %1788 = vmatpush.msra.mxu0 0.0
    %1789 = vmatpush.msra.mxu0 0.0
    %1790 = vmatpush.msra.mxu0 0.0
    %1791 = vmatpush.msra.mxu0 0.0
    %1792 = vmatpush.msra.mxu0 0.0
    %1793 = vmatpush.msra.mxu0 %v112
    %1794 = vmatpush.msra.mxu0 %v111
    %1795 = vmatpush.msra.mxu0 %v110
    %1796 = vmatpush.msra.mxu0 %v109
    %1797 = vmatmul.f32.gmra.mxu0 %v1779
    %v1798 = vpop.f32.mrf.mxu0
    %v1799 = vadd.f32 %v206, %v1798
    %1800 = vdwg.mxu0
    %v1801 = vmax.f32 %v1799, 0.0
    %v1803 = vsel %vm208, %v1801, 0
    %1805 = vmatpush.msra.mxu0 0.0
    %1806 = vmatpush.msra.mxu0 0.0
    %1807 = vmatpush.msra.mxu0 0.0
    %1808 = vmatpush.msra.mxu0 0.0
    %1809 = vmatpush.msra.mxu0 0.0
    %1810 = vmatpush.msra.mxu0 0.0
    %1811 = vmatpush.msra.mxu0 0.0
    %1812 = vmatpush.msra.mxu0 0.0
    %1813 = vmatpush.msra.mxu0 0.0
    %1814 = vmatpush.msra.mxu0 0.0
    %1815 = vmatpush.msra.mxu0 0.0
    %1816 = vmatpush.msra.mxu0 0.0
    %1817 = vmatpush.msra.mxu0 %v117
    %1818 = vmatpush.msra.mxu0 %v116
    %1819 = vmatpush.msra.mxu0 %v115
    %1820 = vmatpush.msra.mxu0 %v114
    %1821 = vmatmul.f32.gmra.mxu0 %v1803
    %v1822 = vpop.f32.mrf.mxu0
    %v1823 = vadd.f32 %v234, %v1822
    %1824 = vdwg.mxu0
    %v1825 = vmax.f32 %v1823, 0.0
    %v1827 = vsel %vm208, %v1825, 0
    %1829 = vmatpush.msra.mxu0 0.0
    %1830 = vmatpush.msra.mxu0 0.0
    %1831 = vmatpush.msra.mxu0 0.0
    %1832 = vmatpush.msra.mxu0 0.0
    %1833 = vmatpush.msra.mxu0 0.0
    %1834 = vmatpush.msra.mxu0 0.0
    %1835 = vmatpush.msra.mxu0 0.0
    %1836 = vmatpush.msra.mxu0 0.0
    %1837 = vmatpush.msra.mxu0 0.0
    %1838 = vmatpush.msra.mxu0 0.0
    %1839 = vmatpush.msra.mxu0 0.0
    %1840 = vmatpush.msra.mxu0 0.0
    %1841 = vmatpush.msra.mxu0 %v122
    %1842 = vmatpush.msra.mxu0 %v121
    %1843 = vmatpush.msra.mxu0 %v120
    %1844 = vmatpush.msra.mxu0 %v119
    %1845 = vmatmul.f32.gmra.mxu0 %v1827
    %v1846 = vpop.f32.mrf.mxu0
    %v1847 = vadd.f32 %v261, %v1846
    %1848 = vdwg.mxu0
    %v1849 = vtanh.pop %v1847
    %1851 = vset.pattern.permute.xlu0 0
    %1852 = vperm.xlu0 %1851, %v1657
    %v1853 = vpop.permute.xlu0 %1852
    %v1855 = vmul.f32 %v1849, %v1853
    %1856 = vset.pattern.permute.xlu0 1
    %1857 = vperm.xlu0 %1856, %v1657
    %v1858 = vpop.permute.xlu0 %1857
    %v1860 = vmul.f32 %v1849, %v1858
    %1862 = vrot.lane.b32.xlu0 %v1860, 96
    %v1863 = vpop.permute.xlu0 %1862
    %v1865 = vadd.f32 %v1855, %v1863
    %1866 = vset.pattern.permute.xlu0 2
    %1867 = vperm.xlu0 %1866, %v1657
    %v1868 = vpop.permute.xlu0 %1867
    %v1870 = vmul.f32 %v1849, %v1868
    %1872 = vrot.lane.b32.xlu0 %v1870, 64
    %v1873 = vpop.permute.xlu0 %1872
    %v1875 = vadd.f32 %v1865, %v1873
    %1876 = vset.pattern.permute.xlu0 3
    %1877 = vperm.xlu0 %1876, %v1657
    %v1878 = vpop.permute.xlu0 %1877
    %v1880 = vmul.f32 %v1849, %v1878
    %1882 = vrot.lane.b32.xlu0 %v1880, 32
    %v1883 = vpop.permute.xlu0 %1882
    %v1885 = vadd.f32 %v1875, %v1883
    %v1886 = vmul.f32 %v1774, 0.33333334
    %v1887 = vsub.f32 %v1885, %v1886
    %v1888 = vmul.f32 %v1671, %v1887
    %v1889 = vadd.f32 %v1632, %v1888
    %v1891 = vsel %vm208, %v1889, 0
    %1893 = vmatpush.msra.mxu0 0.0
    %1894 = vmatpush.msra.mxu0 0.0
    %1895 = vmatpush.msra.mxu0 0.0
    %1896 = vmatpush.msra.mxu0 0.0
    %1897 = vmatpush.msra.mxu0 0.0
    %1898 = vmatpush.msra.mxu0 0.0
    %1899 = vmatpush.msra.mxu0 0.0
    %1900 = vmatpush.msra.mxu0 0.0
    %1901 = vmatpush.msra.mxu0 0.0
    %1902 = vmatpush.msra.mxu0 0.0
    %1903 = vmatpush.msra.mxu0 0.0
    %1904 = vmatpush.msra.mxu0 0.0
    %1905 = vmatpush.msra.mxu0 %v112
    %1906 = vmatpush.msra.mxu0 %v111
    %1907 = vmatpush.msra.mxu0 %v110
    %1908 = vmatpush.msra.mxu0 %v109
    %1909 = vmatmul.f32.gmra.mxu0 %v1891
    %v1910 = vpop.f32.mrf.mxu0
    %v1911 = vadd.f32 %v206, %v1910
    %1912 = vdwg.mxu0
    %v1913 = vmax.f32 %v1911, 0.0
    %v1915 = vsel %vm208, %v1913, 0
    %1917 = vmatpush.msra.mxu0 0.0
    %1918 = vmatpush.msra.mxu0 0.0
    %1919 = vmatpush.msra.mxu0 0.0
    %1920 = vmatpush.msra.mxu0 0.0
    %1921 = vmatpush.msra.mxu0 0.0
    %1922 = vmatpush.msra.mxu0 0.0
    %1923 = vmatpush.msra.mxu0 0.0
    %1924 = vmatpush.msra.mxu0 0.0
    %1925 = vmatpush.msra.mxu0 0.0
    %1926 = vmatpush.msra.mxu0 0.0
    %1927 = vmatpush.msra.mxu0 0.0
    %1928 = vmatpush.msra.mxu0 0.0
    %1929 = vmatpush.msra.mxu0 %v117
    %1930 = vmatpush.msra.mxu0 %v116
    %1931 = vmatpush.msra.mxu0 %v115
    %1932 = vmatpush.msra.mxu0 %v114
    %1933 = vmatmul.f32.gmra.mxu0 %v1915
    %v1934 = vpop.f32.mrf.mxu0
    %v1935 = vadd.f32 %v234, %v1934
    %1936 = vdwg.mxu0
    %v1937 = vmax.f32 %v1935, 0.0
    %v1939 = vsel %vm208, %v1937, 0
    %1941 = vmatpush.msra.mxu0 0.0
    %1942 = vmatpush.msra.mxu0 0.0
    %1943 = vmatpush.msra.mxu0 0.0
    %1944 = vmatpush.msra.mxu0 0.0
    %1945 = vmatpush.msra.mxu0 0.0
    %1946 = vmatpush.msra.mxu0 0.0
    %1947 = vmatpush.msra.mxu0 0.0
    %1948 = vmatpush.msra.mxu0 0.0
    %1949 = vmatpush.msra.mxu0 0.0
    %1950 = vmatpush.msra.mxu0 0.0
    %1951 = vmatpush.msra.mxu0 0.0
    %1952 = vmatpush.msra.mxu0 0.0
    %1953 = vmatpush.msra.mxu0 %v122
    %1954 = vmatpush.msra.mxu0 %v121
    %1955 = vmatpush.msra.mxu0 %v120
    %1956 = vmatpush.msra.mxu0 %v119
    %1957 = vmatmul.f32.gmra.mxu0 %v1939
    %v1958 = vpop.f32.mrf.mxu0
    %v1959 = vadd.f32 %v261, %v1958
    %1960 = vdwg.mxu0
    %v1961 = vtanh.pop %v1959
    %1963 = vset.pattern.permute.xlu0 0
    %1964 = vperm.xlu0 %1963, %v1670
    %v1965 = vpop.permute.xlu0 %1964
    %v1967 = vmul.f32 %v1961, %v1965
    %1968 = vset.pattern.permute.xlu0 1
    %1969 = vperm.xlu0 %1968, %v1670
    %v1970 = vpop.permute.xlu0 %1969
    %v1972 = vmul.f32 %v1961, %v1970
    %1974 = vrot.lane.b32.xlu0 %v1972, 96
    %v1975 = vpop.permute.xlu0 %1974
    %v1977 = vadd.f32 %v1967, %v1975
    %1978 = vset.pattern.permute.xlu0 2
    %1979 = vperm.xlu0 %1978, %v1670
    %v1980 = vpop.permute.xlu0 %1979
    %v1982 = vmul.f32 %v1961, %v1980
    %1984 = vrot.lane.b32.xlu0 %v1982, 64
    %v1985 = vpop.permute.xlu0 %1984
    %v1987 = vadd.f32 %v1977, %v1985
    %1988 = vset.pattern.permute.xlu0 3
    %1989 = vperm.xlu0 %1988, %v1670
    %v1990 = vpop.permute.xlu0 %1989
    %v1992 = vmul.f32 %v1961, %v1990
    %1994 = vrot.lane.b32.xlu0 %v1992, 32
    %v1995 = vpop.permute.xlu0 %1994
    %v1997 = vadd.f32 %v1987, %v1995
    %v1998 = vsub.f32 %v1774, %v1885
    %v1999 = vadd.f32 %v1998, %v1997
    %v2000 = vmul.f32 %v1671, %v1999
    %v2001 = vadd.f32 %v1632, %v2000
    %v2003 = vsel %vm208, %v2001, 0
    %2005 = vmatpush.msra.mxu0 0.0
    %2006 = vmatpush.msra.mxu0 0.0
    %2007 = vmatpush.msra.mxu0 0.0
    %2008 = vmatpush.msra.mxu0 0.0
    %2009 = vmatpush.msra.mxu0 0.0
    %2010 = vmatpush.msra.mxu0 0.0
    %2011 = vmatpush.msra.mxu0 0.0
    %2012 = vmatpush.msra.mxu0 0.0
    %2013 = vmatpush.msra.mxu0 0.0
    %2014 = vmatpush.msra.mxu0 0.0
    %2015 = vmatpush.msra.mxu0 0.0
    %2016 = vmatpush.msra.mxu0 0.0
    %2017 = vmatpush.msra.mxu0 %v112
    %2018 = vmatpush.msra.mxu0 %v111
    %2019 = vmatpush.msra.mxu0 %v110
    %2020 = vmatpush.msra.mxu0 %v109
    %2021 = vmatmul.f32.gmra.mxu0 %v2003
    %v2022 = vpop.f32.mrf.mxu0
    %v2023 = vadd.f32 %v206, %v2022
    %2024 = vdwg.mxu0
    %v2025 = vmax.f32 %v2023, 0.0
    %v2027 = vsel %vm208, %v2025, 0
    %2029 = vmatpush.msra.mxu0 0.0
    %2030 = vmatpush.msra.mxu0 0.0
    %2031 = vmatpush.msra.mxu0 0.0
    %2032 = vmatpush.msra.mxu0 0.0
    %2033 = vmatpush.msra.mxu0 0.0
    %2034 = vmatpush.msra.mxu0 0.0
    %2035 = vmatpush.msra.mxu0 0.0
    %2036 = vmatpush.msra.mxu0 0.0
    %2037 = vmatpush.msra.mxu0 0.0
    %2038 = vmatpush.msra.mxu0 0.0
    %2039 = vmatpush.msra.mxu0 0.0
    %2040 = vmatpush.msra.mxu0 0.0
    %2041 = vmatpush.msra.mxu0 %v117
    %2042 = vmatpush.msra.mxu0 %v116
    %2043 = vmatpush.msra.mxu0 %v115
    %2044 = vmatpush.msra.mxu0 %v114
    %2045 = vmatmul.f32.gmra.mxu0 %v2027
    %v2046 = vpop.f32.mrf.mxu0
    %v2047 = vadd.f32 %v234, %v2046
    %2048 = vdwg.mxu0
    %v2049 = vmax.f32 %v2047, 0.0
    %v2051 = vsel %vm208, %v2049, 0
    %2053 = vmatpush.msra.mxu0 0.0
    %2054 = vmatpush.msra.mxu0 0.0
    %2055 = vmatpush.msra.mxu0 0.0
    %2056 = vmatpush.msra.mxu0 0.0
    %2057 = vmatpush.msra.mxu0 0.0
    %2058 = vmatpush.msra.mxu0 0.0
    %2059 = vmatpush.msra.mxu0 0.0
    %2060 = vmatpush.msra.mxu0 0.0
    %2061 = vmatpush.msra.mxu0 0.0
    %2062 = vmatpush.msra.mxu0 0.0
    %2063 = vmatpush.msra.mxu0 0.0
    %2064 = vmatpush.msra.mxu0 0.0
    %2065 = vmatpush.msra.mxu0 %v122
    %2066 = vmatpush.msra.mxu0 %v121
    %2067 = vmatpush.msra.mxu0 %v120
    %2068 = vmatpush.msra.mxu0 %v119
    %2069 = vmatmul.f32.gmra.mxu0 %v2051
    %v2070 = vpop.f32.mrf.mxu0
    %v2071 = vadd.f32 %v261, %v2070
    %2072 = vdwg.mxu0
    %v2073 = vtanh.pop %v2071
    %2075 = vset.pattern.permute.xlu0 0
    %2076 = vperm.xlu0 %2075, %v1683
    %v2077 = vpop.permute.xlu0 %2076
    %v2079 = vmul.f32 %v2073, %v2077
    %2080 = vset.pattern.permute.xlu0 1
    %2081 = vperm.xlu0 %2080, %v1683
    %v2082 = vpop.permute.xlu0 %2081
    %v2084 = vmul.f32 %v2073, %v2082
    %2086 = vrot.lane.b32.xlu0 %v2084, 96
    %v2087 = vpop.permute.xlu0 %2086
    %v2089 = vadd.f32 %v2079, %v2087
    %2090 = vset.pattern.permute.xlu0 2
    %2091 = vperm.xlu0 %2090, %v1683
    %v2092 = vpop.permute.xlu0 %2091
    %v2094 = vmul.f32 %v2073, %v2092
    %2096 = vrot.lane.b32.xlu0 %v2094, 64
    %v2097 = vpop.permute.xlu0 %2096
    %v2099 = vadd.f32 %v2089, %v2097
    %2100 = vset.pattern.permute.xlu0 3
    %2101 = vperm.xlu0 %2100, %v1683
    %v2102 = vpop.permute.xlu0 %2101
    %v2104 = vmul.f32 %v2073, %v2102
    %2106 = vrot.lane.b32.xlu0 %v2104, 32
    %v2107 = vpop.permute.xlu0 %2106
    %v2109 = vadd.f32 %v2099, %v2107
    %v2110 = vadd.f32 %v1885, %v1997
    %v2111 = vmul.f32 %v2110, 3.0
    %v2112 = vadd.f32 %v1774, %v2111
    %v2113 = vadd.f32 %v2112, %v2109
    %v2114 = vmul.f32 %v2113, %v1671
    %v2115 = vmul.f32 %v2114, 0.125
    %v2116 = vadd.f32 %v1632, %v2115
    %vm2117 = vcmp.eq.s32.totalorder %v129, 4
    %v2118 = vsel %vm2117, 1, 0
    %2119 = vset.pattern.permute.xlu0 0
    %2120 = vperm.xlu0 %2119, %v2118
    %v2121 = vpop.permute.xlu0 %2120
    %vm2122 = vcmp.eq.s32.totalorder %v2121, 1
    %v2123 = vsel %vm2122, %v2116, %v1639
    %s2124 = sld [smem:[#allocation2 + $0x4]]
    %s2125 = scalar_lea.vmem [#allocation5], 32
    %v2126 = vld [vmem:[%s2125] sm:$0xff]
    %s2127 = smul.f32 %s2124, 0.33333334
    %s2128 = smul.f32 %s2124, 0.6666667
    %v2129 = vstv %s2127
    %v2130 = vmul.f32 %v2126, %v2129
    %2132 = vrot.lane.b32.xlu0 %v2130, 124
    %v2133 = vpop.permute.xlu0 %2132
    %v2135 = vadd.f32 %v2126, %v2133
    %v2136 = vmul.f32 %v2135, %v2129
    %2138 = vrot.lane.b32.xlu0 %v2136, 124
    %v2139 = vpop.permute.xlu0 %2138
    %v2141 = vadd.f32 %v2126, %v2139
    %v2142 = vstv %s2128
    %v2143 = vmul.f32 %v2126, %v2142
    %2145 = vrot.lane.b32.xlu0 %v2143, 124
    %v2146 = vpop.permute.xlu0 %2145
    %v2148 = vadd.f32 %v2126, %v2146
    %v2149 = vmul.f32 %v2148, %v2142
    %2151 = vrot.lane.b32.xlu0 %v2149, 124
    %v2152 = vpop.permute.xlu0 %2151
    %v2154 = vadd.f32 %v2126, %v2152
    %v2155 = vstv %s2124
    %v2156 = vmul.f32 %v2126, %v2155
    %2158 = vrot.lane.b32.xlu0 %v2156, 124
    %v2159 = vpop.permute.xlu0 %2158
    %v2161 = vadd.f32 %v2126, %v2159
    %v2162 = vmul.f32 %v2161, %v2155
    %2164 = vrot.lane.b32.xlu0 %v2162, 124
    %v2165 = vpop.permute.xlu0 %2164
    %v2167 = vadd.f32 %v2126, %v2165
    %v2169 = vsel %vm208, %v2116, 0
    %2171 = vmatpush.msra.mxu0 0.0
    %2172 = vmatpush.msra.mxu0 0.0
    %2173 = vmatpush.msra.mxu0 0.0
    %2174 = vmatpush.msra.mxu0 0.0
    %2175 = vmatpush.msra.mxu0 0.0
    %2176 = vmatpush.msra.mxu0 0.0
    %2177 = vmatpush.msra.mxu0 0.0
    %2178 = vmatpush.msra.mxu0 0.0
    %2179 = vmatpush.msra.mxu0 0.0
    %2180 = vmatpush.msra.mxu0 0.0
    %2181 = vmatpush.msra.mxu0 0.0
    %2182 = vmatpush.msra.mxu0 0.0
    %2183 = vmatpush.msra.mxu0 %v112
    %2184 = vmatpush.msra.mxu0 %v111
    %2185 = vmatpush.msra.mxu0 %v110
    %2186 = vmatpush.msra.mxu0 %v109
    %2187 = vmatmul.f32.gmra.mxu0 %v2169
    %v2188 = vpop.f32.mrf.mxu0
    %v2189 = vadd.f32 %v206, %v2188
    %2190 = vdwg.mxu0
    %v2191 = vmax.f32 %v2189, 0.0
    %v2193 = vsel %vm208, %v2191, 0
    %2195 = vmatpush.msra.mxu0 0.0
    %2196 = vmatpush.msra.mxu0 0.0
    %2197 = vmatpush.msra.mxu0 0.0
    %2198 = vmatpush.msra.mxu0 0.0
    %2199 = vmatpush.msra.mxu0 0.0
    %2200 = vmatpush.msra.mxu0 0.0
    %2201 = vmatpush.msra.mxu0 0.0
    %2202 = vmatpush.msra.mxu0 0.0
    %2203 = vmatpush.msra.mxu0 0.0
    %2204 = vmatpush.msra.mxu0 0.0
    %2205 = vmatpush.msra.mxu0 0.0
    %2206 = vmatpush.msra.mxu0 0.0
    %2207 = vmatpush.msra.mxu0 %v117
    %2208 = vmatpush.msra.mxu0 %v116
    %2209 = vmatpush.msra.mxu0 %v115
    %2210 = vmatpush.msra.mxu0 %v114
    %2211 = vmatmul.f32.gmra.mxu0 %v2193
    %v2212 = vpop.f32.mrf.mxu0
    %v2213 = vadd.f32 %v234, %v2212
    %2214 = vdwg.mxu0
    %v2215 = vmax.f32 %v2213, 0.0
    %v2217 = vsel %vm208, %v2215, 0
    %2219 = vmatpush.msra.mxu0 0.0
    %2220 = vmatpush.msra.mxu0 0.0
    %2221 = vmatpush.msra.mxu0 0.0
    %2222 = vmatpush.msra.mxu0 0.0
    %2223 = vmatpush.msra.mxu0 0.0
    %2224 = vmatpush.msra.mxu0 0.0
    %2225 = vmatpush.msra.mxu0 0.0
    %2226 = vmatpush.msra.mxu0 0.0
    %2227 = vmatpush.msra.mxu0 0.0
    %2228 = vmatpush.msra.mxu0 0.0
    %2229 = vmatpush.msra.mxu0 0.0
    %2230 = vmatpush.msra.mxu0 0.0
    %2231 = vmatpush.msra.mxu0 %v122
    %2232 = vmatpush.msra.mxu0 %v121
    %2233 = vmatpush.msra.mxu0 %v120
    %2234 = vmatpush.msra.mxu0 %v119
    %2235 = vmatmul.f32.gmra.mxu0 %v2217
    %v2236 = vpop.f32.mrf.mxu0
    %v2237 = vadd.f32 %v261, %v2236
    %2238 = vdwg.mxu0
    %v2239 = vtanh.pop %v2237
    %v2240 = vmul.f32 %v2239, %v2077
    %v2241 = vmul.f32 %v2239, %v2082
    %2243 = vrot.lane.b32.xlu0 %v2241, 96
    %v2244 = vpop.permute.xlu0 %2243
    %v2246 = vadd.f32 %v2240, %v2244
    %v2247 = vmul.f32 %v2239, %v2092
    %2249 = vrot.lane.b32.xlu0 %v2247, 64
    %v2250 = vpop.permute.xlu0 %2249
    %v2252 = vadd.f32 %v2246, %v2250
    %v2253 = vmul.f32 %v2239, %v2102
    %2255 = vrot.lane.b32.xlu0 %v2253, 32
    %v2256 = vpop.permute.xlu0 %2255
    %v2258 = vadd.f32 %v2252, %v2256
    %v2259 = vmul.f32 %v2155, %v2258
    %v2260 = vmul.f32 %v2259, 0.33333334
    %v2261 = vadd.f32 %v2116, %v2260
    %v2263 = vsel %vm208, %v2261, 0
    %2265 = vmatpush.msra.mxu0 0.0
    %2266 = vmatpush.msra.mxu0 0.0
    %2267 = vmatpush.msra.mxu0 0.0
    %2268 = vmatpush.msra.mxu0 0.0
    %2269 = vmatpush.msra.mxu0 0.0
    %2270 = vmatpush.msra.mxu0 0.0
    %2271 = vmatpush.msra.mxu0 0.0
    %2272 = vmatpush.msra.mxu0 0.0
    %2273 = vmatpush.msra.mxu0 0.0
    %2274 = vmatpush.msra.mxu0 0.0
    %2275 = vmatpush.msra.mxu0 0.0
    %2276 = vmatpush.msra.mxu0 0.0
    %2277 = vmatpush.msra.mxu0 %v112
    %2278 = vmatpush.msra.mxu0 %v111
    %2279 = vmatpush.msra.mxu0 %v110
    %2280 = vmatpush.msra.mxu0 %v109
    %2281 = vmatmul.f32.gmra.mxu0 %v2263
    %v2282 = vpop.f32.mrf.mxu0
    %v2283 = vadd.f32 %v206, %v2282
    %2284 = vdwg.mxu0
    %v2285 = vmax.f32 %v2283, 0.0
    %v2287 = vsel %vm208, %v2285, 0
    %2289 = vmatpush.msra.mxu0 0.0
    %2290 = vmatpush.msra.mxu0 0.0
    %2291 = vmatpush.msra.mxu0 0.0
    %2292 = vmatpush.msra.mxu0 0.0
    %2293 = vmatpush.msra.mxu0 0.0
    %2294 = vmatpush.msra.mxu0 0.0
    %2295 = vmatpush.msra.mxu0 0.0
    %2296 = vmatpush.msra.mxu0 0.0
    %2297 = vmatpush.msra.mxu0 0.0
    %2298 = vmatpush.msra.mxu0 0.0
    %2299 = vmatpush.msra.mxu0 0.0
    %2300 = vmatpush.msra.mxu0 0.0
    %2301 = vmatpush.msra.mxu0 %v117
    %2302 = vmatpush.msra.mxu0 %v116
    %2303 = vmatpush.msra.mxu0 %v115
    %2304 = vmatpush.msra.mxu0 %v114
    %2305 = vmatmul.f32.gmra.mxu0 %v2287
    %v2306 = vpop.f32.mrf.mxu0
    %v2307 = vadd.f32 %v234, %v2306
    %2308 = vdwg.mxu0
    %v2309 = vmax.f32 %v2307, 0.0
    %v2311 = vsel %vm208, %v2309, 0
    %2313 = vmatpush.msra.mxu0 0.0
    %2314 = vmatpush.msra.mxu0 0.0
    %2315 = vmatpush.msra.mxu0 0.0
    %2316 = vmatpush.msra.mxu0 0.0
    %2317 = vmatpush.msra.mxu0 0.0
    %2318 = vmatpush.msra.mxu0 0.0
    %2319 = vmatpush.msra.mxu0 0.0
    %2320 = vmatpush.msra.mxu0 0.0
    %2321 = vmatpush.msra.mxu0 0.0
    %2322 = vmatpush.msra.mxu0 0.0
    %2323 = vmatpush.msra.mxu0 0.0
    %2324 = vmatpush.msra.mxu0 0.0
    %2325 = vmatpush.msra.mxu0 %v122
    %2326 = vmatpush.msra.mxu0 %v121
    %2327 = vmatpush.msra.mxu0 %v120
    %2328 = vmatpush.msra.mxu0 %v119
    %2329 = vmatmul.f32.gmra.mxu0 %v2311
    %v2330 = vpop.f32.mrf.mxu0
    %v2331 = vadd.f32 %v261, %v2330
    %2332 = vdwg.mxu0
    %v2333 = vtanh.pop %v2331
    %2335 = vset.pattern.permute.xlu0 0
    %2336 = vperm.xlu0 %2335, %v2141
    %v2337 = vpop.permute.xlu0 %2336
    %v2339 = vmul.f32 %v2333, %v2337
    %2340 = vset.pattern.permute.xlu0 1
    %2341 = vperm.xlu0 %2340, %v2141
    %v2342 = vpop.permute.xlu0 %2341
    %v2344 = vmul.f32 %v2333, %v2342
    %2346 = vrot.lane.b32.xlu0 %v2344, 96
    %v2347 = vpop.permute.xlu0 %2346
    %v2349 = vadd.f32 %v2339, %v2347
    %2350 = vset.pattern.permute.xlu0 2
    %2351 = vperm.xlu0 %2350, %v2141
    %v2352 = vpop.permute.xlu0 %2351
    %v2354 = vmul.f32 %v2333, %v2352
    %2356 = vrot.lane.b32.xlu0 %v2354, 64
    %v2357 = vpop.permute.xlu0 %2356
    %v2359 = vadd.f32 %v2349, %v2357
    %2360 = vset.pattern.permute.xlu0 3
    %2361 = vperm.xlu0 %2360, %v2141
    %v2362 = vpop.permute.xlu0 %2361
    %v2364 = vmul.f32 %v2333, %v2362
    %2366 = vrot.lane.b32.xlu0 %v2364, 32
    %v2367 = vpop.permute.xlu0 %2366
    %v2369 = vadd.f32 %v2359, %v2367
    %v2370 = vmul.f32 %v2258, 0.33333334
    %v2371 = vsub.f32 %v2369, %v2370
    %v2372 = vmul.f32 %v2155, %v2371
    %v2373 = vadd.f32 %v2116, %v2372
    %v2375 = vsel %vm208, %v2373, 0
    %2377 = vmatpush.msra.mxu0 0.0
    %2378 = vmatpush.msra.mxu0 0.0
    %2379 = vmatpush.msra.mxu0 0.0
    %2380 = vmatpush.msra.mxu0 0.0
    %2381 = vmatpush.msra.mxu0 0.0
    %2382 = vmatpush.msra.mxu0 0.0
    %2383 = vmatpush.msra.mxu0 0.0
    %2384 = vmatpush.msra.mxu0 0.0
    %2385 = vmatpush.msra.mxu0 0.0
    %2386 = vmatpush.msra.mxu0 0.0
    %2387 = vmatpush.msra.mxu0 0.0
    %2388 = vmatpush.msra.mxu0 0.0
    %2389 = vmatpush.msra.mxu0 %v112
    %2390 = vmatpush.msra.mxu0 %v111
    %2391 = vmatpush.msra.mxu0 %v110
    %2392 = vmatpush.msra.mxu0 %v109
    %2393 = vmatmul.f32.gmra.mxu0 %v2375
    %v2394 = vpop.f32.mrf.mxu0
    %v2395 = vadd.f32 %v206, %v2394
    %2396 = vdwg.mxu0
    %v2397 = vmax.f32 %v2395, 0.0
    %v2399 = vsel %vm208, %v2397, 0
    %2401 = vmatpush.msra.mxu0 0.0
    %2402 = vmatpush.msra.mxu0 0.0
    %2403 = vmatpush.msra.mxu0 0.0
    %2404 = vmatpush.msra.mxu0 0.0
    %2405 = vmatpush.msra.mxu0 0.0
    %2406 = vmatpush.msra.mxu0 0.0
    %2407 = vmatpush.msra.mxu0 0.0
    %2408 = vmatpush.msra.mxu0 0.0
    %2409 = vmatpush.msra.mxu0 0.0
    %2410 = vmatpush.msra.mxu0 0.0
    %2411 = vmatpush.msra.mxu0 0.0
    %2412 = vmatpush.msra.mxu0 0.0
    %2413 = vmatpush.msra.mxu0 %v117
    %2414 = vmatpush.msra.mxu0 %v116
    %2415 = vmatpush.msra.mxu0 %v115
    %2416 = vmatpush.msra.mxu0 %v114
    %2417 = vmatmul.f32.gmra.mxu0 %v2399
    %v2418 = vpop.f32.mrf.mxu0
    %v2419 = vadd.f32 %v234, %v2418
    %2420 = vdwg.mxu0
    %v2421 = vmax.f32 %v2419, 0.0
    %v2423 = vsel %vm208, %v2421, 0
    %2425 = vmatpush.msra.mxu0 0.0
    %2426 = vmatpush.msra.mxu0 0.0
    %2427 = vmatpush.msra.mxu0 0.0
    %2428 = vmatpush.msra.mxu0 0.0
    %2429 = vmatpush.msra.mxu0 0.0
    %2430 = vmatpush.msra.mxu0 0.0
    %2431 = vmatpush.msra.mxu0 0.0
    %2432 = vmatpush.msra.mxu0 0.0
    %2433 = vmatpush.msra.mxu0 0.0
    %2434 = vmatpush.msra.mxu0 0.0
    %2435 = vmatpush.msra.mxu0 0.0
    %2436 = vmatpush.msra.mxu0 0.0
    %2437 = vmatpush.msra.mxu0 %v122
    %2438 = vmatpush.msra.mxu0 %v121
    %2439 = vmatpush.msra.mxu0 %v120
    %2440 = vmatpush.msra.mxu0 %v119
    %2441 = vmatmul.f32.gmra.mxu0 %v2423
    %v2442 = vpop.f32.mrf.mxu0
    %v2443 = vadd.f32 %v261, %v2442
    %2444 = vdwg.mxu0
    %v2445 = vtanh.pop %v2443
    %2447 = vset.pattern.permute.xlu0 0
    %2448 = vperm.xlu0 %2447, %v2154
    %v2449 = vpop.permute.xlu0 %2448
    %v2451 = vmul.f32 %v2445, %v2449
    %2452 = vset.pattern.permute.xlu0 1
    %2453 = vperm.xlu0 %2452, %v2154
    %v2454 = vpop.permute.xlu0 %2453
    %v2456 = vmul.f32 %v2445, %v2454
    %2458 = vrot.lane.b32.xlu0 %v2456, 96
    %v2459 = vpop.permute.xlu0 %2458
    %v2461 = vadd.f32 %v2451, %v2459
    %2462 = vset.pattern.permute.xlu0 2
    %2463 = vperm.xlu0 %2462, %v2154
    %v2464 = vpop.permute.xlu0 %2463
    %v2466 = vmul.f32 %v2445, %v2464
    %2468 = vrot.lane.b32.xlu0 %v2466, 64
    %v2469 = vpop.permute.xlu0 %2468
    %v2471 = vadd.f32 %v2461, %v2469
    %2472 = vset.pattern.permute.xlu0 3
    %2473 = vperm.xlu0 %2472, %v2154
    %v2474 = vpop.permute.xlu0 %2473
    %v2476 = vmul.f32 %v2445, %v2474
    %2478 = vrot.lane.b32.xlu0 %v2476, 32
    %v2479 = vpop.permute.xlu0 %2478
    %v2481 = vadd.f32 %v2471, %v2479
    %v2482 = vsub.f32 %v2258, %v2369
    %v2483 = vadd.f32 %v2482, %v2481
    %v2484 = vmul.f32 %v2155, %v2483
    %v2485 = vadd.f32 %v2116, %v2484
    %v2487 = vsel %vm208, %v2485, 0
    %2489 = vmatpush.msra.mxu0 0.0
    %2490 = vmatpush.msra.mxu0 0.0
    %2491 = vmatpush.msra.mxu0 0.0
    %2492 = vmatpush.msra.mxu0 0.0
    %2493 = vmatpush.msra.mxu0 0.0
    %2494 = vmatpush.msra.mxu0 0.0
    %2495 = vmatpush.msra.mxu0 0.0
    %2496 = vmatpush.msra.mxu0 0.0
    %2497 = vmatpush.msra.mxu0 0.0
    %2498 = vmatpush.msra.mxu0 0.0
    %2499 = vmatpush.msra.mxu0 0.0
    %2500 = vmatpush.msra.mxu0 0.0
    %2501 = vmatpush.msra.mxu0 %v112
    %2502 = vmatpush.msra.mxu0 %v111
    %2503 = vmatpush.msra.mxu0 %v110
    %2504 = vmatpush.msra.mxu0 %v109
    %2505 = vmatmul.f32.gmra.mxu0 %v2487
    %v2506 = vpop.f32.mrf.mxu0
    %v2507 = vadd.f32 %v206, %v2506
    %2508 = vdwg.mxu0
    %v2509 = vmax.f32 %v2507, 0.0
    %v2511 = vsel %vm208, %v2509, 0
    %2513 = vmatpush.msra.mxu0 0.0
    %2514 = vmatpush.msra.mxu0 0.0
    %2515 = vmatpush.msra.mxu0 0.0
    %2516 = vmatpush.msra.mxu0 0.0
    %2517 = vmatpush.msra.mxu0 0.0
    %2518 = vmatpush.msra.mxu0 0.0
    %2519 = vmatpush.msra.mxu0 0.0
    %2520 = vmatpush.msra.mxu0 0.0
    %2521 = vmatpush.msra.mxu0 0.0
    %2522 = vmatpush.msra.mxu0 0.0
    %2523 = vmatpush.msra.mxu0 0.0
    %2524 = vmatpush.msra.mxu0 0.0
    %2525 = vmatpush.msra.mxu0 %v117
    %2526 = vmatpush.msra.mxu0 %v116
    %2527 = vmatpush.msra.mxu0 %v115
    %2528 = vmatpush.msra.mxu0 %v114
    %2529 = vmatmul.f32.gmra.mxu0 %v2511
    %v2530 = vpop.f32.mrf.mxu0
    %v2531 = vadd.f32 %v234, %v2530
    %2532 = vdwg.mxu0
    %v2533 = vmax.f32 %v2531, 0.0
    %v2535 = vsel %vm208, %v2533, 0
    %2537 = vmatpush.msra.mxu0 0.0
    %2538 = vmatpush.msra.mxu0 0.0
    %2539 = vmatpush.msra.mxu0 0.0
    %2540 = vmatpush.msra.mxu0 0.0
    %2541 = vmatpush.msra.mxu0 0.0
    %2542 = vmatpush.msra.mxu0 0.0
    %2543 = vmatpush.msra.mxu0 0.0
    %2544 = vmatpush.msra.mxu0 0.0
    %2545 = vmatpush.msra.mxu0 0.0
    %2546 = vmatpush.msra.mxu0 0.0
    %2547 = vmatpush.msra.mxu0 0.0
    %2548 = vmatpush.msra.mxu0 0.0
    %2549 = vmatpush.msra.mxu0 %v122
    %2550 = vmatpush.msra.mxu0 %v121
    %2551 = vmatpush.msra.mxu0 %v120
    %2552 = vmatpush.msra.mxu0 %v119
    %2553 = vmatmul.f32.gmra.mxu0 %v2535
    %v2554 = vpop.f32.mrf.mxu0
    %v2555 = vadd.f32 %v261, %v2554
    %2556 = vdwg.mxu0
    %v2557 = vtanh.pop %v2555
    %2559 = vset.pattern.permute.xlu0 0
    %2560 = vperm.xlu0 %2559, %v2167
    %v2561 = vpop.permute.xlu0 %2560
    %v2563 = vmul.f32 %v2557, %v2561
    %2564 = vset.pattern.permute.xlu0 1
    %2565 = vperm.xlu0 %2564, %v2167
    %v2566 = vpop.permute.xlu0 %2565
    %v2568 = vmul.f32 %v2557, %v2566
    %2570 = vrot.lane.b32.xlu0 %v2568, 96
    %v2571 = vpop.permute.xlu0 %2570
    %v2573 = vadd.f32 %v2563, %v2571
    %2574 = vset.pattern.permute.xlu0 2
    %2575 = vperm.xlu0 %2574, %v2167
    %v2576 = vpop.permute.xlu0 %2575
    %v2578 = vmul.f32 %v2557, %v2576
    %2580 = vrot.lane.b32.xlu0 %v2578, 64
    %v2581 = vpop.permute.xlu0 %2580
    %v2583 = vadd.f32 %v2573, %v2581
    %2584 = vset.pattern.permute.xlu0 3
    %2585 = vperm.xlu0 %2584, %v2167
    %v2586 = vpop.permute.xlu0 %2585
    %v2588 = vmul.f32 %v2557, %v2586
    %2590 = vrot.lane.b32.xlu0 %v2588, 32
    %v2591 = vpop.permute.xlu0 %2590
    %v2593 = vadd.f32 %v2583, %v2591
    %v2594 = vadd.f32 %v2369, %v2481
    %v2595 = vmul.f32 %v2594, 3.0
    %v2596 = vadd.f32 %v2258, %v2595
    %v2597 = vadd.f32 %v2596, %v2593
    %v2598 = vmul.f32 %v2597, %v2155
    %v2599 = vmul.f32 %v2598, 0.125
    %v2600 = vadd.f32 %v2116, %v2599
    %vm2601 = vcmp.eq.s32.totalorder %v129, 5
    %v2602 = vsel %vm2601, 1, 0
    %2603 = vset.pattern.permute.xlu0 0
    %2604 = vperm.xlu0 %2603, %v2602
    %v2605 = vpop.permute.xlu0 %2604
    %vm2606 = vcmp.eq.s32.totalorder %v2605, 1
    %v2607 = vsel %vm2606, %v2600, %v2123
    %s2608 = sld [smem:[#allocation2 + $0x5]]
    %s2609 = scalar_lea.vmem [#allocation5], 40
    %v2610 = vld [vmem:[%s2609] sm:$0xff]
    %s2611 = smul.f32 %s2608, 0.33333334
    %s2612 = smul.f32 %s2608, 0.6666667
    %v2613 = vstv %s2611
    %v2614 = vmul.f32 %v2610, %v2613
    %2616 = vrot.lane.b32.xlu0 %v2614, 124
    %v2617 = vpop.permute.xlu0 %2616
    %v2619 = vadd.f32 %v2610, %v2617
    %v2620 = vmul.f32 %v2619, %v2613
    %2622 = vrot.lane.b32.xlu0 %v2620, 124
    %v2623 = vpop.permute.xlu0 %2622
    %v2625 = vadd.f32 %v2610, %v2623
    %v2626 = vstv %s2612
    %v2627 = vmul.f32 %v2610, %v2626
    %2629 = vrot.lane.b32.xlu0 %v2627, 124
    %v2630 = vpop.permute.xlu0 %2629
    %v2632 = vadd.f32 %v2610, %v2630
    %v2633 = vmul.f32 %v2632, %v2626
    %2635 = vrot.lane.b32.xlu0 %v2633, 124
    %v2636 = vpop.permute.xlu0 %2635
    %v2638 = vadd.f32 %v2610, %v2636
    %v2639 = vstv %s2608
    %v2640 = vmul.f32 %v2610, %v2639
    %2642 = vrot.lane.b32.xlu0 %v2640, 124
    %v2643 = vpop.permute.xlu0 %2642
    %v2645 = vadd.f32 %v2610, %v2643
    %v2646 = vmul.f32 %v2645, %v2639
    %2648 = vrot.lane.b32.xlu0 %v2646, 124
    %v2649 = vpop.permute.xlu0 %2648
    %v2651 = vadd.f32 %v2610, %v2649
    %v2653 = vsel %vm208, %v2600, 0
    %2655 = vmatpush.msra.mxu0 0.0
    %2656 = vmatpush.msra.mxu0 0.0
    %2657 = vmatpush.msra.mxu0 0.0
    %2658 = vmatpush.msra.mxu0 0.0
    %2659 = vmatpush.msra.mxu0 0.0
    %2660 = vmatpush.msra.mxu0 0.0
    %2661 = vmatpush.msra.mxu0 0.0
    %2662 = vmatpush.msra.mxu0 0.0
    %2663 = vmatpush.msra.mxu0 0.0
    %2664 = vmatpush.msra.mxu0 0.0
    %2665 = vmatpush.msra.mxu0 0.0
    %2666 = vmatpush.msra.mxu0 0.0
    %2667 = vmatpush.msra.mxu0 %v112
    %2668 = vmatpush.msra.mxu0 %v111
    %2669 = vmatpush.msra.mxu0 %v110
    %2670 = vmatpush.msra.mxu0 %v109
    %2671 = vmatmul.f32.gmra.mxu0 %v2653
    %v2672 = vpop.f32.mrf.mxu0
    %v2673 = vadd.f32 %v206, %v2672
    %2674 = vdwg.mxu0
    %v2675 = vmax.f32 %v2673, 0.0
    %v2677 = vsel %vm208, %v2675, 0
    %2679 = vmatpush.msra.mxu0 0.0
    %2680 = vmatpush.msra.mxu0 0.0
    %2681 = vmatpush.msra.mxu0 0.0
    %2682 = vmatpush.msra.mxu0 0.0
    %2683 = vmatpush.msra.mxu0 0.0
    %2684 = vmatpush.msra.mxu0 0.0
    %2685 = vmatpush.msra.mxu0 0.0
    %2686 = vmatpush.msra.mxu0 0.0
    %2687 = vmatpush.msra.mxu0 0.0
    %2688 = vmatpush.msra.mxu0 0.0
    %2689 = vmatpush.msra.mxu0 0.0
    %2690 = vmatpush.msra.mxu0 0.0
    %2691 = vmatpush.msra.mxu0 %v117
    %2692 = vmatpush.msra.mxu0 %v116
    %2693 = vmatpush.msra.mxu0 %v115
    %2694 = vmatpush.msra.mxu0 %v114
    %2695 = vmatmul.f32.gmra.mxu0 %v2677
    %v2696 = vpop.f32.mrf.mxu0
    %v2697 = vadd.f32 %v234, %v2696
    %2698 = vdwg.mxu0
    %v2699 = vmax.f32 %v2697, 0.0
    %v2701 = vsel %vm208, %v2699, 0
    %2703 = vmatpush.msra.mxu0 0.0
    %2704 = vmatpush.msra.mxu0 0.0
    %2705 = vmatpush.msra.mxu0 0.0
    %2706 = vmatpush.msra.mxu0 0.0
    %2707 = vmatpush.msra.mxu0 0.0
    %2708 = vmatpush.msra.mxu0 0.0
    %2709 = vmatpush.msra.mxu0 0.0
    %2710 = vmatpush.msra.mxu0 0.0
    %2711 = vmatpush.msra.mxu0 0.0
    %2712 = vmatpush.msra.mxu0 0.0
    %2713 = vmatpush.msra.mxu0 0.0
    %2714 = vmatpush.msra.mxu0 0.0
    %2715 = vmatpush.msra.mxu0 %v122
    %2716 = vmatpush.msra.mxu0 %v121
    %2717 = vmatpush.msra.mxu0 %v120
    %2718 = vmatpush.msra.mxu0 %v119
    %2719 = vmatmul.f32.gmra.mxu0 %v2701
    %v2720 = vpop.f32.mrf.mxu0
    %v2721 = vadd.f32 %v261, %v2720
    %2722 = vdwg.mxu0
    %v2723 = vtanh.pop %v2721
    %v2724 = vmul.f32 %v2723, %v2561
    %v2725 = vmul.f32 %v2723, %v2566
    %2727 = vrot.lane.b32.xlu0 %v2725, 96
    %v2728 = vpop.permute.xlu0 %2727
    %v2730 = vadd.f32 %v2724, %v2728
    %v2731 = vmul.f32 %v2723, %v2576
    %2733 = vrot.lane.b32.xlu0 %v2731, 64
    %v2734 = vpop.permute.xlu0 %2733
    %v2736 = vadd.f32 %v2730, %v2734
    %v2737 = vmul.f32 %v2723, %v2586
    %2739 = vrot.lane.b32.xlu0 %v2737, 32
    %v2740 = vpop.permute.xlu0 %2739
    %v2742 = vadd.f32 %v2736, %v2740
    %v2743 = vmul.f32 %v2639, %v2742
    %v2744 = vmul.f32 %v2743, 0.33333334
    %v2745 = vadd.f32 %v2600, %v2744
    %v2747 = vsel %vm208, %v2745, 0
    %2749 = vmatpush.msra.mxu0 0.0
    %2750 = vmatpush.msra.mxu0 0.0
    %2751 = vmatpush.msra.mxu0 0.0
    %2752 = vmatpush.msra.mxu0 0.0
    %2753 = vmatpush.msra.mxu0 0.0
    %2754 = vmatpush.msra.mxu0 0.0
    %2755 = vmatpush.msra.mxu0 0.0
    %2756 = vmatpush.msra.mxu0 0.0
    %2757 = vmatpush.msra.mxu0 0.0
    %2758 = vmatpush.msra.mxu0 0.0
    %2759 = vmatpush.msra.mxu0 0.0
    %2760 = vmatpush.msra.mxu0 0.0
    %2761 = vmatpush.msra.mxu0 %v112
    %2762 = vmatpush.msra.mxu0 %v111
    %2763 = vmatpush.msra.mxu0 %v110
    %2764 = vmatpush.msra.mxu0 %v109
    %2765 = vmatmul.f32.gmra.mxu0 %v2747
    %v2766 = vpop.f32.mrf.mxu0
    %v2767 = vadd.f32 %v206, %v2766
    %2768 = vdwg.mxu0
    %v2769 = vmax.f32 %v2767, 0.0
    %v2771 = vsel %vm208, %v2769, 0
    %2773 = vmatpush.msra.mxu0 0.0
    %2774 = vmatpush.msra.mxu0 0.0
    %2775 = vmatpush.msra.mxu0 0.0
    %2776 = vmatpush.msra.mxu0 0.0
    %2777 = vmatpush.msra.mxu0 0.0
    %2778 = vmatpush.msra.mxu0 0.0
    %2779 = vmatpush.msra.mxu0 0.0
    %2780 = vmatpush.msra.mxu0 0.0
    %2781 = vmatpush.msra.mxu0 0.0
    %2782 = vmatpush.msra.mxu0 0.0
    %2783 = vmatpush.msra.mxu0 0.0
    %2784 = vmatpush.msra.mxu0 0.0
    %2785 = vmatpush.msra.mxu0 %v117
    %2786 = vmatpush.msra.mxu0 %v116
    %2787 = vmatpush.msra.mxu0 %v115
    %2788 = vmatpush.msra.mxu0 %v114
    %2789 = vmatmul.f32.gmra.mxu0 %v2771
    %v2790 = vpop.f32.mrf.mxu0
    %v2791 = vadd.f32 %v234, %v2790
    %2792 = vdwg.mxu0
    %v2793 = vmax.f32 %v2791, 0.0
    %v2795 = vsel %vm208, %v2793, 0
    %2797 = vmatpush.msra.mxu0 0.0
    %2798 = vmatpush.msra.mxu0 0.0
    %2799 = vmatpush.msra.mxu0 0.0
    %2800 = vmatpush.msra.mxu0 0.0
    %2801 = vmatpush.msra.mxu0 0.0
    %2802 = vmatpush.msra.mxu0 0.0
    %2803 = vmatpush.msra.mxu0 0.0
    %2804 = vmatpush.msra.mxu0 0.0
    %2805 = vmatpush.msra.mxu0 0.0
    %2806 = vmatpush.msra.mxu0 0.0
    %2807 = vmatpush.msra.mxu0 0.0
    %2808 = vmatpush.msra.mxu0 0.0
    %2809 = vmatpush.msra.mxu0 %v122
    %2810 = vmatpush.msra.mxu0 %v121
    %2811 = vmatpush.msra.mxu0 %v120
    %2812 = vmatpush.msra.mxu0 %v119
    %2813 = vmatmul.f32.gmra.mxu0 %v2795
    %v2814 = vpop.f32.mrf.mxu0
    %v2815 = vadd.f32 %v261, %v2814
    %2816 = vdwg.mxu0
    %v2817 = vtanh.pop %v2815
    %2819 = vset.pattern.permute.xlu0 0
    %2820 = vperm.xlu0 %2819, %v2625
    %v2821 = vpop.permute.xlu0 %2820
    %v2823 = vmul.f32 %v2817, %v2821
    %2824 = vset.pattern.permute.xlu0 1
    %2825 = vperm.xlu0 %2824, %v2625
    %v2826 = vpop.permute.xlu0 %2825
    %v2828 = vmul.f32 %v2817, %v2826
    %2830 = vrot.lane.b32.xlu0 %v2828, 96
    %v2831 = vpop.permute.xlu0 %2830
    %v2833 = vadd.f32 %v2823, %v2831
    %2834 = vset.pattern.permute.xlu0 2
    %2835 = vperm.xlu0 %2834, %v2625
    %v2836 = vpop.permute.xlu0 %2835
    %v2838 = vmul.f32 %v2817, %v2836
    %2840 = vrot.lane.b32.xlu0 %v2838, 64
    %v2841 = vpop.permute.xlu0 %2840
    %v2843 = vadd.f32 %v2833, %v2841
    %2844 = vset.pattern.permute.xlu0 3
    %2845 = vperm.xlu0 %2844, %v2625
    %v2846 = vpop.permute.xlu0 %2845
    %v2848 = vmul.f32 %v2817, %v2846
    %2850 = vrot.lane.b32.xlu0 %v2848, 32
    %v2851 = vpop.permute.xlu0 %2850
    %v2853 = vadd.f32 %v2843, %v2851
    %v2854 = vmul.f32 %v2742, 0.33333334
    %v2855 = vsub.f32 %v2853, %v2854
    %v2856 = vmul.f32 %v2639, %v2855
    %v2857 = vadd.f32 %v2600, %v2856
    %v2859 = vsel %vm208, %v2857, 0
    %2861 = vmatpush.msra.mxu0 0.0
    %2862 = vmatpush.msra.mxu0 0.0
    %2863 = vmatpush.msra.mxu0 0.0
    %2864 = vmatpush.msra.mxu0 0.0
    %2865 = vmatpush.msra.mxu0 0.0
    %2866 = vmatpush.msra.mxu0 0.0
    %2867 = vmatpush.msra.mxu0 0.0
    %2868 = vmatpush.msra.mxu0 0.0
    %2869 = vmatpush.msra.mxu0 0.0
    %2870 = vmatpush.msra.mxu0 0.0
    %2871 = vmatpush.msra.mxu0 0.0
    %2872 = vmatpush.msra.mxu0 0.0
    %2873 = vmatpush.msra.mxu0 %v112
    %2874 = vmatpush.msra.mxu0 %v111
    %2875 = vmatpush.msra.mxu0 %v110
    %2876 = vmatpush.msra.mxu0 %v109
    %2877 = vmatmul.f32.gmra.mxu0 %v2859
    %v2878 = vpop.f32.mrf.mxu0
    %v2879 = vadd.f32 %v206, %v2878
    %2880 = vdwg.mxu0
    %v2881 = vmax.f32 %v2879, 0.0
    %v2883 = vsel %vm208, %v2881, 0
    %2885 = vmatpush.msra.mxu0 0.0
    %2886 = vmatpush.msra.mxu0 0.0
    %2887 = vmatpush.msra.mxu0 0.0
    %2888 = vmatpush.msra.mxu0 0.0
    %2889 = vmatpush.msra.mxu0 0.0
    %2890 = vmatpush.msra.mxu0 0.0
    %2891 = vmatpush.msra.mxu0 0.0
    %2892 = vmatpush.msra.mxu0 0.0
    %2893 = vmatpush.msra.mxu0 0.0
    %2894 = vmatpush.msra.mxu0 0.0
    %2895 = vmatpush.msra.mxu0 0.0
    %2896 = vmatpush.msra.mxu0 0.0
    %2897 = vmatpush.msra.mxu0 %v117
    %2898 = vmatpush.msra.mxu0 %v116
    %2899 = vmatpush.msra.mxu0 %v115
    %2900 = vmatpush.msra.mxu0 %v114
    %2901 = vmatmul.f32.gmra.mxu0 %v2883
    %v2902 = vpop.f32.mrf.mxu0
    %v2903 = vadd.f32 %v234, %v2902
    %2904 = vdwg.mxu0
    %v2905 = vmax.f32 %v2903, 0.0
    %v2907 = vsel %vm208, %v2905, 0
    %2909 = vmatpush.msra.mxu0 0.0
    %2910 = vmatpush.msra.mxu0 0.0
    %2911 = vmatpush.msra.mxu0 0.0
    %2912 = vmatpush.msra.mxu0 0.0
    %2913 = vmatpush.msra.mxu0 0.0
    %2914 = vmatpush.msra.mxu0 0.0
    %2915 = vmatpush.msra.mxu0 0.0
    %2916 = vmatpush.msra.mxu0 0.0
    %2917 = vmatpush.msra.mxu0 0.0
    %2918 = vmatpush.msra.mxu0 0.0
    %2919 = vmatpush.msra.mxu0 0.0
    %2920 = vmatpush.msra.mxu0 0.0
    %2921 = vmatpush.msra.mxu0 %v122
    %2922 = vmatpush.msra.mxu0 %v121
    %2923 = vmatpush.msra.mxu0 %v120
    %2924 = vmatpush.msra.mxu0 %v119
    %2925 = vmatmul.f32.gmra.mxu0 %v2907
    %v2926 = vpop.f32.mrf.mxu0
    %v2927 = vadd.f32 %v261, %v2926
    %2928 = vdwg.mxu0
    %v2929 = vtanh.pop %v2927
    %2931 = vset.pattern.permute.xlu0 0
    %2932 = vperm.xlu0 %2931, %v2638
    %v2933 = vpop.permute.xlu0 %2932
    %v2935 = vmul.f32 %v2929, %v2933
    %2936 = vset.pattern.permute.xlu0 1
    %2937 = vperm.xlu0 %2936, %v2638
    %v2938 = vpop.permute.xlu0 %2937
    %v2940 = vmul.f32 %v2929, %v2938
    %2942 = vrot.lane.b32.xlu0 %v2940, 96
    %v2943 = vpop.permute.xlu0 %2942
    %v2945 = vadd.f32 %v2935, %v2943
    %2946 = vset.pattern.permute.xlu0 2
    %2947 = vperm.xlu0 %2946, %v2638
    %v2948 = vpop.permute.xlu0 %2947
    %v2950 = vmul.f32 %v2929, %v2948
    %2952 = vrot.lane.b32.xlu0 %v2950, 64
    %v2953 = vpop.permute.xlu0 %2952
    %v2955 = vadd.f32 %v2945, %v2953
    %2956 = vset.pattern.permute.xlu0 3
    %2957 = vperm.xlu0 %2956, %v2638
    %v2958 = vpop.permute.xlu0 %2957
    %v2960 = vmul.f32 %v2929, %v2958
    %2962 = vrot.lane.b32.xlu0 %v2960, 32
    %v2963 = vpop.permute.xlu0 %2962
    %v2965 = vadd.f32 %v2955, %v2963
    %v2966 = vsub.f32 %v2742, %v2853
    %v2967 = vadd.f32 %v2966, %v2965
    %v2968 = vmul.f32 %v2639, %v2967
    %v2969 = vadd.f32 %v2600, %v2968
    %v2971 = vsel %vm208, %v2969, 0
    %2973 = vmatpush.msra.mxu0 0.0
    %2974 = vmatpush.msra.mxu0 0.0
    %2975 = vmatpush.msra.mxu0 0.0
    %2976 = vmatpush.msra.mxu0 0.0
    %2977 = vmatpush.msra.mxu0 0.0
    %2978 = vmatpush.msra.mxu0 0.0
    %2979 = vmatpush.msra.mxu0 0.0
    %2980 = vmatpush.msra.mxu0 0.0
    %2981 = vmatpush.msra.mxu0 0.0
    %2982 = vmatpush.msra.mxu0 0.0
    %2983 = vmatpush.msra.mxu0 0.0
    %2984 = vmatpush.msra.mxu0 0.0
    %2985 = vmatpush.msra.mxu0 %v112
    %2986 = vmatpush.msra.mxu0 %v111
    %2987 = vmatpush.msra.mxu0 %v110
    %2988 = vmatpush.msra.mxu0 %v109
    %2989 = vmatmul.f32.gmra.mxu0 %v2971
    %v2990 = vpop.f32.mrf.mxu0
    %v2991 = vadd.f32 %v206, %v2990
    %2992 = vdwg.mxu0
    %v2993 = vmax.f32 %v2991, 0.0
    %v2995 = vsel %vm208, %v2993, 0
    %2997 = vmatpush.msra.mxu0 0.0
    %2998 = vmatpush.msra.mxu0 0.0
    %2999 = vmatpush.msra.mxu0 0.0
    %3000 = vmatpush.msra.mxu0 0.0
    %3001 = vmatpush.msra.mxu0 0.0
    %3002 = vmatpush.msra.mxu0 0.0
    %3003 = vmatpush.msra.mxu0 0.0
    %3004 = vmatpush.msra.mxu0 0.0
    %3005 = vmatpush.msra.mxu0 0.0
    %3006 = vmatpush.msra.mxu0 0.0
    %3007 = vmatpush.msra.mxu0 0.0
    %3008 = vmatpush.msra.mxu0 0.0
    %3009 = vmatpush.msra.mxu0 %v117
    %3010 = vmatpush.msra.mxu0 %v116
    %3011 = vmatpush.msra.mxu0 %v115
    %3012 = vmatpush.msra.mxu0 %v114
    %3013 = vmatmul.f32.gmra.mxu0 %v2995
    %v3014 = vpop.f32.mrf.mxu0
    %v3015 = vadd.f32 %v234, %v3014
    %3016 = vdwg.mxu0
    %v3017 = vmax.f32 %v3015, 0.0
    %v3019 = vsel %vm208, %v3017, 0
    %3021 = vmatpush.msra.mxu0 0.0
    %3022 = vmatpush.msra.mxu0 0.0
    %3023 = vmatpush.msra.mxu0 0.0
    %3024 = vmatpush.msra.mxu0 0.0
    %3025 = vmatpush.msra.mxu0 0.0
    %3026 = vmatpush.msra.mxu0 0.0
    %3027 = vmatpush.msra.mxu0 0.0
    %3028 = vmatpush.msra.mxu0 0.0
    %3029 = vmatpush.msra.mxu0 0.0
    %3030 = vmatpush.msra.mxu0 0.0
    %3031 = vmatpush.msra.mxu0 0.0
    %3032 = vmatpush.msra.mxu0 0.0
    %3033 = vmatpush.msra.mxu0 %v122
    %3034 = vmatpush.msra.mxu0 %v121
    %3035 = vmatpush.msra.mxu0 %v120
    %3036 = vmatpush.msra.mxu0 %v119
    %3037 = vmatmul.f32.gmra.mxu0 %v3019
    %v3038 = vpop.f32.mrf.mxu0
    %v3039 = vadd.f32 %v261, %v3038
    %3040 = vdwg.mxu0
    %v3041 = vtanh.pop %v3039
    %3043 = vset.pattern.permute.xlu0 0
    %3044 = vperm.xlu0 %3043, %v2651
    %v3045 = vpop.permute.xlu0 %3044
    %v3047 = vmul.f32 %v3041, %v3045
    %3048 = vset.pattern.permute.xlu0 1
    %3049 = vperm.xlu0 %3048, %v2651
    %v3050 = vpop.permute.xlu0 %3049
    %v3052 = vmul.f32 %v3041, %v3050
    %3054 = vrot.lane.b32.xlu0 %v3052, 96
    %v3055 = vpop.permute.xlu0 %3054
    %v3057 = vadd.f32 %v3047, %v3055
    %3058 = vset.pattern.permute.xlu0 2
    %3059 = vperm.xlu0 %3058, %v2651
    %v3060 = vpop.permute.xlu0 %3059
    %v3062 = vmul.f32 %v3041, %v3060
    %3064 = vrot.lane.b32.xlu0 %v3062, 64
    %v3065 = vpop.permute.xlu0 %3064
    %v3067 = vadd.f32 %v3057, %v3065
    %3068 = vset.pattern.permute.xlu0 3
    %3069 = vperm.xlu0 %3068, %v2651
    %v3070 = vpop.permute.xlu0 %3069
    %v3072 = vmul.f32 %v3041, %v3070
    %3074 = vrot.lane.b32.xlu0 %v3072, 32
    %v3075 = vpop.permute.xlu0 %3074
    %v3077 = vadd.f32 %v3067, %v3075
    %v3078 = vadd.f32 %v2853, %v2965
    %v3079 = vmul.f32 %v3078, 3.0
    %v3080 = vadd.f32 %v2742, %v3079
    %v3081 = vadd.f32 %v3080, %v3077
    %v3082 = vmul.f32 %v3081, %v2639
    %v3083 = vmul.f32 %v3082, 0.125
    %v3084 = vadd.f32 %v2600, %v3083
    %vm3085 = vcmp.eq.s32.totalorder %v129, 6
    %v3086 = vsel %vm3085, 1, 0
    %3087 = vset.pattern.permute.xlu0 0
    %3088 = vperm.xlu0 %3087, %v3086
    %v3089 = vpop.permute.xlu0 %3088
    %vm3090 = vcmp.eq.s32.totalorder %v3089, 1
    %v3091 = vsel %vm3090, %v3084, %v2607
    %s3092 = sld [smem:[#allocation2 + $0x6]]
    %s3093 = scalar_lea.vmem [#allocation5], 48
    %v3094 = vld [vmem:[%s3093] sm:$0xff]
    %s3095 = smul.f32 %s3092, 0.33333334
    %s3096 = smul.f32 %s3092, 0.6666667
    %v3097 = vstv %s3095
    %v3098 = vmul.f32 %v3094, %v3097
    %3100 = vrot.lane.b32.xlu0 %v3098, 124
    %v3101 = vpop.permute.xlu0 %3100
    %v3103 = vadd.f32 %v3094, %v3101
    %v3104 = vmul.f32 %v3103, %v3097
    %3106 = vrot.lane.b32.xlu0 %v3104, 124
    %v3107 = vpop.permute.xlu0 %3106
    %v3109 = vadd.f32 %v3094, %v3107
    %v3110 = vstv %s3096
    %v3111 = vmul.f32 %v3094, %v3110
    %3113 = vrot.lane.b32.xlu0 %v3111, 124
    %v3114 = vpop.permute.xlu0 %3113
    %v3116 = vadd.f32 %v3094, %v3114
    %v3117 = vmul.f32 %v3116, %v3110
    %3119 = vrot.lane.b32.xlu0 %v3117, 124
    %v3120 = vpop.permute.xlu0 %3119
    %v3122 = vadd.f32 %v3094, %v3120
    %v3123 = vstv %s3092
    %v3124 = vmul.f32 %v3094, %v3123
    %3126 = vrot.lane.b32.xlu0 %v3124, 124
    %v3127 = vpop.permute.xlu0 %3126
    %v3129 = vadd.f32 %v3094, %v3127
    %v3130 = vmul.f32 %v3129, %v3123
    %3132 = vrot.lane.b32.xlu0 %v3130, 124
    %v3133 = vpop.permute.xlu0 %3132
    %v3135 = vadd.f32 %v3094, %v3133
    %v3137 = vsel %vm208, %v3084, 0
    %3139 = vmatpush.msra.mxu0 0.0
    %3140 = vmatpush.msra.mxu0 0.0
    %3141 = vmatpush.msra.mxu0 0.0
    %3142 = vmatpush.msra.mxu0 0.0
    %3143 = vmatpush.msra.mxu0 0.0
    %3144 = vmatpush.msra.mxu0 0.0
    %3145 = vmatpush.msra.mxu0 0.0
    %3146 = vmatpush.msra.mxu0 0.0
    %3147 = vmatpush.msra.mxu0 0.0
    %3148 = vmatpush.msra.mxu0 0.0
    %3149 = vmatpush.msra.mxu0 0.0
    %3150 = vmatpush.msra.mxu0 0.0
    %3151 = vmatpush.msra.mxu0 %v112
    %3152 = vmatpush.msra.mxu0 %v111
    %3153 = vmatpush.msra.mxu0 %v110
    %3154 = vmatpush.msra.mxu0 %v109
    %3155 = vmatmul.f32.gmra.mxu0 %v3137
    %v3156 = vpop.f32.mrf.mxu0
    %v3157 = vadd.f32 %v206, %v3156
    %3158 = vdwg.mxu0
    %v3159 = vmax.f32 %v3157, 0.0
    %v3161 = vsel %vm208, %v3159, 0
    %3163 = vmatpush.msra.mxu0 0.0
    %3164 = vmatpush.msra.mxu0 0.0
    %3165 = vmatpush.msra.mxu0 0.0
    %3166 = vmatpush.msra.mxu0 0.0
    %3167 = vmatpush.msra.mxu0 0.0
    %3168 = vmatpush.msra.mxu0 0.0
    %3169 = vmatpush.msra.mxu0 0.0
    %3170 = vmatpush.msra.mxu0 0.0
    %3171 = vmatpush.msra.mxu0 0.0
    %3172 = vmatpush.msra.mxu0 0.0
    %3173 = vmatpush.msra.mxu0 0.0
    %3174 = vmatpush.msra.mxu0 0.0
    %3175 = vmatpush.msra.mxu0 %v117
    %3176 = vmatpush.msra.mxu0 %v116
    %3177 = vmatpush.msra.mxu0 %v115
    %3178 = vmatpush.msra.mxu0 %v114
    %3179 = vmatmul.f32.gmra.mxu0 %v3161
    %v3180 = vpop.f32.mrf.mxu0
    %v3181 = vadd.f32 %v234, %v3180
    %3182 = vdwg.mxu0
    %v3183 = vmax.f32 %v3181, 0.0
    %v3185 = vsel %vm208, %v3183, 0
    %3187 = vmatpush.msra.mxu0 0.0
    %3188 = vmatpush.msra.mxu0 0.0
    %3189 = vmatpush.msra.mxu0 0.0
    %3190 = vmatpush.msra.mxu0 0.0
    %3191 = vmatpush.msra.mxu0 0.0
    %3192 = vmatpush.msra.mxu0 0.0
    %3193 = vmatpush.msra.mxu0 0.0
    %3194 = vmatpush.msra.mxu0 0.0
    %3195 = vmatpush.msra.mxu0 0.0
    %3196 = vmatpush.msra.mxu0 0.0
    %3197 = vmatpush.msra.mxu0 0.0
    %3198 = vmatpush.msra.mxu0 0.0
    %3199 = vmatpush.msra.mxu0 %v122
    %3200 = vmatpush.msra.mxu0 %v121
    %3201 = vmatpush.msra.mxu0 %v120
    %3202 = vmatpush.msra.mxu0 %v119
    %3203 = vmatmul.f32.gmra.mxu0 %v3185
    %v3204 = vpop.f32.mrf.mxu0
    %v3205 = vadd.f32 %v261, %v3204
    %3206 = vdwg.mxu0
    %v3207 = vtanh.pop %v3205
    %v3208 = vmul.f32 %v3207, %v3045
    %v3209 = vmul.f32 %v3207, %v3050
    %3211 = vrot.lane.b32.xlu0 %v3209, 96
    %v3212 = vpop.permute.xlu0 %3211
    %v3214 = vadd.f32 %v3208, %v3212
    %v3215 = vmul.f32 %v3207, %v3060
    %3217 = vrot.lane.b32.xlu0 %v3215, 64
    %v3218 = vpop.permute.xlu0 %3217
    %v3220 = vadd.f32 %v3214, %v3218
    %v3221 = vmul.f32 %v3207, %v3070
    %3223 = vrot.lane.b32.xlu0 %v3221, 32
    %v3224 = vpop.permute.xlu0 %3223
    %v3226 = vadd.f32 %v3220, %v3224
    %v3227 = vmul.f32 %v3123, %v3226
    %v3228 = vmul.f32 %v3227, 0.33333334
    %v3229 = vadd.f32 %v3084, %v3228
    %v3231 = vsel %vm208, %v3229, 0
    %3233 = vmatpush.msra.mxu0 0.0
    %3234 = vmatpush.msra.mxu0 0.0
    %3235 = vmatpush.msra.mxu0 0.0
    %3236 = vmatpush.msra.mxu0 0.0
    %3237 = vmatpush.msra.mxu0 0.0
    %3238 = vmatpush.msra.mxu0 0.0
    %3239 = vmatpush.msra.mxu0 0.0
    %3240 = vmatpush.msra.mxu0 0.0
    %3241 = vmatpush.msra.mxu0 0.0
    %3242 = vmatpush.msra.mxu0 0.0
    %3243 = vmatpush.msra.mxu0 0.0
    %3244 = vmatpush.msra.mxu0 0.0
    %3245 = vmatpush.msra.mxu0 %v112
    %3246 = vmatpush.msra.mxu0 %v111
    %3247 = vmatpush.msra.mxu0 %v110
    %3248 = vmatpush.msra.mxu0 %v109
    %3249 = vmatmul.f32.gmra.mxu0 %v3231
    %v3250 = vpop.f32.mrf.mxu0
    %v3251 = vadd.f32 %v206, %v3250
    %3252 = vdwg.mxu0
    %v3253 = vmax.f32 %v3251, 0.0
    %v3255 = vsel %vm208, %v3253, 0
    %3257 = vmatpush.msra.mxu0 0.0
    %3258 = vmatpush.msra.mxu0 0.0
    %3259 = vmatpush.msra.mxu0 0.0
    %3260 = vmatpush.msra.mxu0 0.0
    %3261 = vmatpush.msra.mxu0 0.0
    %3262 = vmatpush.msra.mxu0 0.0
    %3263 = vmatpush.msra.mxu0 0.0
    %3264 = vmatpush.msra.mxu0 0.0
    %3265 = vmatpush.msra.mxu0 0.0
    %3266 = vmatpush.msra.mxu0 0.0
    %3267 = vmatpush.msra.mxu0 0.0
    %3268 = vmatpush.msra.mxu0 0.0
    %3269 = vmatpush.msra.mxu0 %v117
    %3270 = vmatpush.msra.mxu0 %v116
    %3271 = vmatpush.msra.mxu0 %v115
    %3272 = vmatpush.msra.mxu0 %v114
    %3273 = vmatmul.f32.gmra.mxu0 %v3255
    %v3274 = vpop.f32.mrf.mxu0
    %v3275 = vadd.f32 %v234, %v3274
    %3276 = vdwg.mxu0
    %v3277 = vmax.f32 %v3275, 0.0
    %v3279 = vsel %vm208, %v3277, 0
    %3281 = vmatpush.msra.mxu0 0.0
    %3282 = vmatpush.msra.mxu0 0.0
    %3283 = vmatpush.msra.mxu0 0.0
    %3284 = vmatpush.msra.mxu0 0.0
    %3285 = vmatpush.msra.mxu0 0.0
    %3286 = vmatpush.msra.mxu0 0.0
    %3287 = vmatpush.msra.mxu0 0.0
    %3288 = vmatpush.msra.mxu0 0.0
    %3289 = vmatpush.msra.mxu0 0.0
    %3290 = vmatpush.msra.mxu0 0.0
    %3291 = vmatpush.msra.mxu0 0.0
    %3292 = vmatpush.msra.mxu0 0.0
    %3293 = vmatpush.msra.mxu0 %v122
    %3294 = vmatpush.msra.mxu0 %v121
    %3295 = vmatpush.msra.mxu0 %v120
    %3296 = vmatpush.msra.mxu0 %v119
    %3297 = vmatmul.f32.gmra.mxu0 %v3279
    %v3298 = vpop.f32.mrf.mxu0
    %v3299 = vadd.f32 %v261, %v3298
    %3300 = vdwg.mxu0
    %v3301 = vtanh.pop %v3299
    %3303 = vset.pattern.permute.xlu0 0
    %3304 = vperm.xlu0 %3303, %v3109
    %v3305 = vpop.permute.xlu0 %3304
    %v3307 = vmul.f32 %v3301, %v3305
    %3308 = vset.pattern.permute.xlu0 1
    %3309 = vperm.xlu0 %3308, %v3109
    %v3310 = vpop.permute.xlu0 %3309
    %v3312 = vmul.f32 %v3301, %v3310
    %3314 = vrot.lane.b32.xlu0 %v3312, 96
    %v3315 = vpop.permute.xlu0 %3314
    %v3317 = vadd.f32 %v3307, %v3315
    %3318 = vset.pattern.permute.xlu0 2
    %3319 = vperm.xlu0 %3318, %v3109
    %v3320 = vpop.permute.xlu0 %3319
    %v3322 = vmul.f32 %v3301, %v3320
    %3324 = vrot.lane.b32.xlu0 %v3322, 64
    %v3325 = vpop.permute.xlu0 %3324
    %v3327 = vadd.f32 %v3317, %v3325
    %3328 = vset.pattern.permute.xlu0 3
    %3329 = vperm.xlu0 %3328, %v3109
    %v3330 = vpop.permute.xlu0 %3329
    %v3332 = vmul.f32 %v3301, %v3330
    %3334 = vrot.lane.b32.xlu0 %v3332, 32
    %v3335 = vpop.permute.xlu0 %3334
    %v3337 = vadd.f32 %v3327, %v3335
    %v3338 = vmul.f32 %v3226, 0.33333334
    %v3339 = vsub.f32 %v3337, %v3338
    %v3340 = vmul.f32 %v3123, %v3339
    %v3341 = vadd.f32 %v3084, %v3340
    %v3343 = vsel %vm208, %v3341, 0
    %3345 = vmatpush.msra.mxu0 0.0
    %3346 = vmatpush.msra.mxu0 0.0
    %3347 = vmatpush.msra.mxu0 0.0
    %3348 = vmatpush.msra.mxu0 0.0
    %3349 = vmatpush.msra.mxu0 0.0
    %3350 = vmatpush.msra.mxu0 0.0
    %3351 = vmatpush.msra.mxu0 0.0
    %3352 = vmatpush.msra.mxu0 0.0
    %3353 = vmatpush.msra.mxu0 0.0
    %3354 = vmatpush.msra.mxu0 0.0
    %3355 = vmatpush.msra.mxu0 0.0
    %3356 = vmatpush.msra.mxu0 0.0
    %3357 = vmatpush.msra.mxu0 %v112
    %3358 = vmatpush.msra.mxu0 %v111
    %3359 = vmatpush.msra.mxu0 %v110
    %3360 = vmatpush.msra.mxu0 %v109
    %3361 = vmatmul.f32.gmra.mxu0 %v3343
    %v3362 = vpop.f32.mrf.mxu0
    %v3363 = vadd.f32 %v206, %v3362
    %3364 = vdwg.mxu0
    %v3365 = vmax.f32 %v3363, 0.0
    %v3367 = vsel %vm208, %v3365, 0
    %3369 = vmatpush.msra.mxu0 0.0
    %3370 = vmatpush.msra.mxu0 0.0
    %3371 = vmatpush.msra.mxu0 0.0
    %3372 = vmatpush.msra.mxu0 0.0
    %3373 = vmatpush.msra.mxu0 0.0
    %3374 = vmatpush.msra.mxu0 0.0
    %3375 = vmatpush.msra.mxu0 0.0
    %3376 = vmatpush.msra.mxu0 0.0
    %3377 = vmatpush.msra.mxu0 0.0
    %3378 = vmatpush.msra.mxu0 0.0
    %3379 = vmatpush.msra.mxu0 0.0
    %3380 = vmatpush.msra.mxu0 0.0
    %3381 = vmatpush.msra.mxu0 %v117
    %3382 = vmatpush.msra.mxu0 %v116
    %3383 = vmatpush.msra.mxu0 %v115
    %3384 = vmatpush.msra.mxu0 %v114
    %3385 = vmatmul.f32.gmra.mxu0 %v3367
    %v3386 = vpop.f32.mrf.mxu0
    %v3387 = vadd.f32 %v234, %v3386
    %3388 = vdwg.mxu0
    %v3389 = vmax.f32 %v3387, 0.0
    %v3391 = vsel %vm208, %v3389, 0
    %3393 = vmatpush.msra.mxu0 0.0
    %3394 = vmatpush.msra.mxu0 0.0
    %3395 = vmatpush.msra.mxu0 0.0
    %3396 = vmatpush.msra.mxu0 0.0
    %3397 = vmatpush.msra.mxu0 0.0
    %3398 = vmatpush.msra.mxu0 0.0
    %3399 = vmatpush.msra.mxu0 0.0
    %3400 = vmatpush.msra.mxu0 0.0
    %3401 = vmatpush.msra.mxu0 0.0
    %3402 = vmatpush.msra.mxu0 0.0
    %3403 = vmatpush.msra.mxu0 0.0
    %3404 = vmatpush.msra.mxu0 0.0
    %3405 = vmatpush.msra.mxu0 %v122
    %3406 = vmatpush.msra.mxu0 %v121
    %3407 = vmatpush.msra.mxu0 %v120
    %3408 = vmatpush.msra.mxu0 %v119
    %3409 = vmatmul.f32.gmra.mxu0 %v3391
    %v3410 = vpop.f32.mrf.mxu0
    %v3411 = vadd.f32 %v261, %v3410
    %3412 = vdwg.mxu0
    %v3413 = vtanh.pop %v3411
    %3415 = vset.pattern.permute.xlu0 0
    %3416 = vperm.xlu0 %3415, %v3122
    %v3417 = vpop.permute.xlu0 %3416
    %v3419 = vmul.f32 %v3413, %v3417
    %3420 = vset.pattern.permute.xlu0 1
    %3421 = vperm.xlu0 %3420, %v3122
    %v3422 = vpop.permute.xlu0 %3421
    %v3424 = vmul.f32 %v3413, %v3422
    %3426 = vrot.lane.b32.xlu0 %v3424, 96
    %v3427 = vpop.permute.xlu0 %3426
    %v3429 = vadd.f32 %v3419, %v3427
    %3430 = vset.pattern.permute.xlu0 2
    %3431 = vperm.xlu0 %3430, %v3122
    %v3432 = vpop.permute.xlu0 %3431
    %v3434 = vmul.f32 %v3413, %v3432
    %3436 = vrot.lane.b32.xlu0 %v3434, 64
    %v3437 = vpop.permute.xlu0 %3436
    %v3439 = vadd.f32 %v3429, %v3437
    %3440 = vset.pattern.permute.xlu0 3
    %3441 = vperm.xlu0 %3440, %v3122
    %v3442 = vpop.permute.xlu0 %3441
    %v3444 = vmul.f32 %v3413, %v3442
    %3446 = vrot.lane.b32.xlu0 %v3444, 32
    %v3447 = vpop.permute.xlu0 %3446
    %v3449 = vadd.f32 %v3439, %v3447
    %v3450 = vsub.f32 %v3226, %v3337
    %v3451 = vadd.f32 %v3450, %v3449
    %v3452 = vmul.f32 %v3123, %v3451
    %v3453 = vadd.f32 %v3084, %v3452
    %v3455 = vsel %vm208, %v3453, 0
    %3457 = vmatpush.msra.mxu0 0.0
    %3458 = vmatpush.msra.mxu0 0.0
    %3459 = vmatpush.msra.mxu0 0.0
    %3460 = vmatpush.msra.mxu0 0.0
    %3461 = vmatpush.msra.mxu0 0.0
    %3462 = vmatpush.msra.mxu0 0.0
    %3463 = vmatpush.msra.mxu0 0.0
    %3464 = vmatpush.msra.mxu0 0.0
    %3465 = vmatpush.msra.mxu0 0.0
    %3466 = vmatpush.msra.mxu0 0.0
    %3467 = vmatpush.msra.mxu0 0.0
    %3468 = vmatpush.msra.mxu0 0.0
    %3469 = vmatpush.msra.mxu0 %v112
    %3470 = vmatpush.msra.mxu0 %v111
    %3471 = vmatpush.msra.mxu0 %v110
    %3472 = vmatpush.msra.mxu0 %v109
    %3473 = vmatmul.f32.gmra.mxu0 %v3455
    %v3474 = vpop.f32.mrf.mxu0
    %v3475 = vadd.f32 %v206, %v3474
    %3476 = vdwg.mxu0
    %v3477 = vmax.f32 %v3475, 0.0
    %v3479 = vsel %vm208, %v3477, 0
    %3481 = vmatpush.msra.mxu0 0.0
    %3482 = vmatpush.msra.mxu0 0.0
    %3483 = vmatpush.msra.mxu0 0.0
    %3484 = vmatpush.msra.mxu0 0.0
    %3485 = vmatpush.msra.mxu0 0.0
    %3486 = vmatpush.msra.mxu0 0.0
    %3487 = vmatpush.msra.mxu0 0.0
    %3488 = vmatpush.msra.mxu0 0.0
    %3489 = vmatpush.msra.mxu0 0.0
    %3490 = vmatpush.msra.mxu0 0.0
    %3491 = vmatpush.msra.mxu0 0.0
    %3492 = vmatpush.msra.mxu0 0.0
    %3493 = vmatpush.msra.mxu0 %v117
    %3494 = vmatpush.msra.mxu0 %v116
    %3495 = vmatpush.msra.mxu0 %v115
    %3496 = vmatpush.msra.mxu0 %v114
    %3497 = vmatmul.f32.gmra.mxu0 %v3479
    %v3498 = vpop.f32.mrf.mxu0
    %v3499 = vadd.f32 %v234, %v3498
    %3500 = vdwg.mxu0
    %v3501 = vmax.f32 %v3499, 0.0
    %v3503 = vsel %vm208, %v3501, 0
    %3505 = vmatpush.msra.mxu0 0.0
    %3506 = vmatpush.msra.mxu0 0.0
    %3507 = vmatpush.msra.mxu0 0.0
    %3508 = vmatpush.msra.mxu0 0.0
    %3509 = vmatpush.msra.mxu0 0.0
    %3510 = vmatpush.msra.mxu0 0.0
    %3511 = vmatpush.msra.mxu0 0.0
    %3512 = vmatpush.msra.mxu0 0.0
    %3513 = vmatpush.msra.mxu0 0.0
    %3514 = vmatpush.msra.mxu0 0.0
    %3515 = vmatpush.msra.mxu0 0.0
    %3516 = vmatpush.msra.mxu0 0.0
    %3517 = vmatpush.msra.mxu0 %v122
    %3518 = vmatpush.msra.mxu0 %v121
    %3519 = vmatpush.msra.mxu0 %v120
    %3520 = vmatpush.msra.mxu0 %v119
    %3521 = vmatmul.f32.gmra.mxu0 %v3503
    %v3522 = vpop.f32.mrf.mxu0
    %v3523 = vadd.f32 %v261, %v3522
    %3524 = vdwg.mxu0
    %v3525 = vtanh.pop %v3523
    %3527 = vset.pattern.permute.xlu0 0
    %3528 = vperm.xlu0 %3527, %v3135
    %v3529 = vpop.permute.xlu0 %3528
    %v3531 = vmul.f32 %v3525, %v3529
    %3532 = vset.pattern.permute.xlu0 1
    %3533 = vperm.xlu0 %3532, %v3135
    %v3534 = vpop.permute.xlu0 %3533
    %v3536 = vmul.f32 %v3525, %v3534
    %3538 = vrot.lane.b32.xlu0 %v3536, 96
    %v3539 = vpop.permute.xlu0 %3538
    %v3541 = vadd.f32 %v3531, %v3539
    %3542 = vset.pattern.permute.xlu0 2
    %3543 = vperm.xlu0 %3542, %v3135
    %v3544 = vpop.permute.xlu0 %3543
    %v3546 = vmul.f32 %v3525, %v3544
    %3548 = vrot.lane.b32.xlu0 %v3546, 64
    %v3549 = vpop.permute.xlu0 %3548
    %v3551 = vadd.f32 %v3541, %v3549
    %3552 = vset.pattern.permute.xlu0 3
    %3553 = vperm.xlu0 %3552, %v3135
    %v3554 = vpop.permute.xlu0 %3553
    %v3556 = vmul.f32 %v3525, %v3554
    %3558 = vrot.lane.b32.xlu0 %v3556, 32
    %v3559 = vpop.permute.xlu0 %3558
    %v3561 = vadd.f32 %v3551, %v3559
    %v3562 = vadd.f32 %v3337, %v3449
    %v3563 = vmul.f32 %v3562, 3.0
    %v3564 = vadd.f32 %v3226, %v3563
    %v3565 = vadd.f32 %v3564, %v3561
    %v3566 = vmul.f32 %v3565, %v3123
    %v3567 = vmul.f32 %v3566, 0.125
    %v3568 = vadd.f32 %v3084, %v3567
    %vm3569 = vcmp.eq.s32.totalorder %v129, 7
    %v3570 = vsel %vm3569, 1, 0
    %3571 = vset.pattern.permute.xlu0 0
    %3572 = vperm.xlu0 %3571, %v3570
    %v3573 = vpop.permute.xlu0 %3572
    %vm3574 = vcmp.eq.s32.totalorder %v3573, 1
    %v3575 = vsel %vm3574, %v3568, %v3091
    %v3577 = vperm.slane %v128, 0
    %v3580 = vsel %vm208, %v3575, 0
    %3582 = vmatpush.msra.mxu0 0.0
    %3583 = vmatpush.msra.mxu0 0.0
    %3584 = vmatpush.msra.mxu0 0.0
    %3585 = vmatpush.msra.mxu0 0.0
    %3586 = vmatpush.msra.mxu0 0.0
    %3587 = vmatpush.msra.mxu0 0.0
    %3588 = vmatpush.msra.mxu0 0.0
    %3589 = vmatpush.msra.mxu0 0.0
    %3590 = vmatpush.msra.mxu0 0.0
    %3591 = vmatpush.msra.mxu0 0.0
    %3592 = vmatpush.msra.mxu0 0.0
    %3593 = vmatpush.msra.mxu0 0.0
    %3594 = vmatpush.msra.mxu0 %v127
    %3595 = vmatpush.msra.mxu0 %v126
    %3596 = vmatpush.msra.mxu0 %v125
    %3597 = vmatpush.msra.mxu0 %v124
    %3598 = vmatmul.f32.gmra.mxu0 %v3580
    %v3599 = vpop.f32.mrf.mxu0
    %v3600 = vadd.f32 %v3577, %v3599
    %3601 = vdwg.mxu0
    %vm3602 = vcmask 23552
    %3603 = vst.msk [vmem:[%s14] sm:$0xff] %vm3602, %v3600
    // Predicated region
    $region74: #{tpu_custom_call.1} parent=1 // pred_check
      _
    $region75: #{tpu_custom_call.1} parent=1 // pred_check_branch
      %3605 = sbr.rel (0) target = $region77
    $region76: #{tpu_custom_call.1} parent=1 // pred_region
      _
    $region77: #{tpu_custom_call.1} parent=1 // pred_fallthru
      _
    // Predicated region
    $region78: #{tpu_custom_call.1} parent=1 // pred_check
      _
    $region79: #{tpu_custom_call.1} parent=1 // pred_check_branch
      %3607 = sbr.rel (0) target = $region81
    $region80: #{tpu_custom_call.1} parent=1 // pred_region
      _
    $region81: #{tpu_custom_call.1} parent=1 // pred_fallthru
      _
    %3608 = vsyncpa [#allocation3], 1
    %3609 = vsyncpa [#allocation7], 1
    %3610 = vsyncpa [#allocation4], 1

</llo_original>
